<compile_context>
chip_gen: v7x
topology: tpu7x:2x2x1
jax: 0.10.0
libtpu: 0.0.40
codegen_flags: <defaults>
</compile_context>

<pallas_src>
import functools

import jax
import jax.numpy as jnp
from jax import lax
from jax.experimental import pallas as pl
from jax.experimental.pallas import tpu as pltpu


# -----------------------------------------------------------------------------
# Pallas kernel: BOTH directions of one bidirectional LSTM layer.
# -----------------------------------------------------------------------------
def _bilstm_layer_kernel(lens_ref, x_ref, wih_ref, whh_ref, b_ref,
                         out_ref, hn_ref, cn_ref, xg_ref, *, T, B, H):
  """Fused forward+backward LSTM over the whole (short) sequence.

  lens_ref: (B, 1)    int32  valid length per row (0 for padded batch rows)
  x_ref:    (T*B, Din) bf16  time-major input, batch padded to B (multiple of 8)
  wih_ref:  (Din, 8H)  bf16  [W_ih_fwd^T | W_ih_bwd^T]
  whh_ref:  (2H, 8H)   bf16  block_diag(W_hh_fwd^T, W_hh_bwd^T)
  b_ref:    (1, 8H)    f32   [b_ih_f + b_hh_f | b_ih_b + b_hh_b]
  out_ref:  (T, B, 2H) f32   per-timestep [h_fwd | h_bwd] (zeros at padding)
  hn_ref:   (B, 2H)    f32   final hidden states [fwd | bwd]
  cn_ref:   (B, 2H)    f32   final cell   states [fwd | bwd]
  xg_ref:   (T, B, 8H) f32   scratch: input projections for both directions
  """
  G = 4 * H

  # Bulk input projection for all timesteps & both directions: one MXU matmul.
  xg = jnp.dot(x_ref[...], wih_ref[...], preferred_element_type=jnp.float32)
  xg_ref[...] = (xg + b_ref[...]).reshape(T, B, 2 * G)

  whh = whh_ref[...]                       # (2H, 8H) bf16, block-diagonal
  lens = lens_ref[...]                     # (B, 1) int32, loaded once

  def cell(g, c):
    i = jax.nn.sigmoid(g[:, 0:H])
    f = jax.nn.sigmoid(g[:, H:2 * H])
    gg = jnp.tanh(g[:, 2 * H:3 * H])
    o = jax.nn.sigmoid(g[:, 3 * H:4 * H])
    c_new = f * c + i * gg
    h_new = o * jnp.tanh(c_new)
    return h_new, c_new

  def step(s, carry):
    h_f, c_f, h_b, c_b = carry
    r = T - 1 - s                          # backward direction's time index

    # One recurrent matmul for both directions (block-diagonal weights).
    h_cat = jnp.concatenate([h_f, h_b], axis=-1).astype(jnp.bfloat16)  # (B, 2H)
    rec = jnp.dot(h_cat, whh, preferred_element_type=jnp.float32)      # (B, 8H)

    g_f = xg_ref[s][:, :G] + rec[:, :G]    # forward gates at time s
    g_b = xg_ref[r][:, G:] + rec[:, G:]    # backward gates at time r
    hf_new, cf_new = cell(g_f, c_f)
    hb_new, cb_new = cell(g_b, c_b)

    m_f = lens > s                         # (B, 1) bool: fwd step valid
    m_b = lens > r                         # (B, 1) bool: bwd step valid
    out_ref[s, :, 0:H] = jnp.where(m_f, hf_new, 0.0)      # padded steps -> 0
    out_ref[r, :, H:2 * H] = jnp.where(m_b, hb_new, 0.0)
    # Freeze state on padded steps (select, so garbage/NaN never propagates).
    return (jnp.where(m_f, hf_new, h_f), jnp.where(m_f, cf_new, c_f),
            jnp.where(m_b, hb_new, h_b), jnp.where(m_b, cb_new, c_b))

  z = jnp.zeros((B, H), jnp.float32)
  # T is a static Python int -> fully unroll so EUP/MXU/VMEM work overlaps.
  h_f, c_f, h_b, c_b = lax.fori_loop(0, T, step, (z, z, z, z), unroll=True)
  hn_ref[...] = jnp.concatenate([h_f, h_b], axis=-1)
  cn_ref[...] = jnp.concatenate([c_f, c_b], axis=-1)


def _run_bilstm_layer(x_tm, lens_pad, layer_params):
  """One bidirectional layer (both directions) in a single pallas_call.

  x_tm:     (T, B_pad, Din) f32 time-major input (batch already padded)
  lens_pad: (B_pad,) int32 valid lengths (0 for padded rows)
  returns:  out (T, B_pad, 2H) f32, h_n (B_pad, 2H) f32, c_n (B_pad, 2H) f32
  """
  T, B_pad, Din = x_tm.shape
  (wih_f, whh_f, bih_f, bhh_f), (wih_b, whh_b, bih_b, bhh_b) = layer_params
  H = whh_f.shape[1]
  G = 4 * H

  # Concatenated input weights: (Din, 8H); block-diagonal hidden weights: (2H, 8H).
  wih_cat = jnp.concatenate([wih_f.T, wih_b.T], axis=1).astype(jnp.bfloat16)
  whh_blk = jnp.zeros((2 * H, 2 * G), jnp.float32)
  whh_blk = whh_blk.at[:H, :G].set(whh_f.T).at[H:, G:].set(whh_b.T)
  whh_blk = whh_blk.astype(jnp.bfloat16)
  b_cat = jnp.concatenate([bih_f + bhh_f, bih_b + bhh_b]).reshape(1, 2 * G)
  b_cat = b_cat.astype(jnp.float32)

  x2d = x_tm.reshape(T * B_pad, Din).astype(jnp.bfloat16)
  lens_col = lens_pad.reshape(B_pad, 1).astype(jnp.int32)

  out, hn, cn = pl.pallas_call(
      functools.partial(_bilstm_layer_kernel, T=T, B=B_pad, H=H),
      out_shape=(
          jax.ShapeDtypeStruct((T, B_pad, 2 * H), jnp.float32),
          jax.ShapeDtypeStruct((B_pad, 2 * H), jnp.float32),
          jax.ShapeDtypeStruct((B_pad, 2 * H), jnp.float32),
      ),
      in_specs=[pl.BlockSpec(memory_space=pltpu.MemorySpace.VMEM)] * 5,
      out_specs=(
          pl.BlockSpec(memory_space=pltpu.MemorySpace.VMEM),
          pl.BlockSpec(memory_space=pltpu.MemorySpace.VMEM),
          pl.BlockSpec(memory_space=pltpu.MemorySpace.VMEM),
      ),
      scratch_shapes=[pltpu.VMEM((T, B_pad, 2 * G), jnp.float32)],
      compiler_params=pltpu.CompilerParams(
          # Raise the scoped-VMEM limit modestly (v5e default is 16 MiB);
          # whole-sequence-in-VMEM for these shapes needs far less than this.
          vmem_limit_bytes=32 * 1024 * 1024),
  )(lens_col, x2d, wih_cat, whh_blk, b_cat)
  return out, hn, cn


# -----------------------------------------------------------------------------
# Parameter construction (deterministic, matching nn.LSTM shapes & init range).
# -----------------------------------------------------------------------------
def init_blstm_params(key, input_dim, hidden_dim, num_layers):
  k = 1.0 / jnp.sqrt(hidden_dim)
  params = []
  for layer in range(num_layers):
    din = input_dim if layer == 0 else 2 * hidden_dim
    layer_params = []
    for _ in range(2):  # forward, reverse
      key, k1, k2, k3, k4 = jax.random.split(key, 5)
      w_ih = jax.random.uniform(k1, (4 * hidden_dim, din), jnp.float32, -k, k)
      w_hh = jax.random.uniform(k2, (4 * hidden_dim, hidden_dim), jnp.float32, -k, k)
      b_ih = jax.random.uniform(k3, (4 * hidden_dim,), jnp.float32, -k, k)
      b_hh = jax.random.uniform(k4, (4 * hidden_dim,), jnp.float32, -k, k)
      layer_params.append((w_ih, w_hh, b_ih, b_hh))
    params.append(layer_params)
  return params


# -----------------------------------------------------------------------------
# BLSTM forward (equivalent to BLSTM.forward with pack/pad handling, eval mode).
# -----------------------------------------------------------------------------
def blstm_forward(params, seq, mask):
  """seq: (B, T, input_dim), mask: (B, T) with 1 == pad.

  Returns (output (B, T, 2H), (h_n, c_n)) like the PyTorch module.
  """
  B, T, _ = seq.shape
  H = params[0][0][1].shape[1]
  lengths = jnp.sum((mask == 0).astype(jnp.int32), axis=1)           # (B,)

  # Pad batch to >= 8 sublanes once; all per-step ops are then tile-aligned.
  B_pad = max(8, ((B + 7) // 8) * 8)
  x_tm = jnp.transpose(seq, (1, 0, 2)).astype(jnp.float32)           # (T, B, D)
  x_tm = jnp.pad(x_tm, ((0, 0), (0, B_pad - B), (0, 0)))
  lens_pad = jnp.pad(lengths, (0, B_pad - B))                        # 0 => fully masked

  h_list, c_list = [], []
  x = x_tm
  for layer_params in params:
    x, hn, cn = _run_bilstm_layer(x, lens_pad, layer_params)         # (T, B_pad, 2H)
    h_list += [hn[:B, :H], hn[:B, H:]]
    c_list += [cn[:B, :H], cn[:B, H:]]

  output = jnp.transpose(x[:, :B, :], (1, 0, 2))                     # (B, T, 2H)
  h_n = jnp.stack(h_list, axis=0)                                    # (2L, B, H)
  c_n = jnp.stack(c_list, axis=0)
  return output, (h_n, c_n)


# -----------------------------------------------------------------------------
# Pure-JAX reference (lax.scan + reverse-within-length) to validate the kernel.
# `mm_dtype` mirrors the kernel's matmul precision (bf16 w/ f32 accumulation).
# -----------------------------------------------------------------------------
def _ref_lstm_dir(x_tm, w_ih, w_hh, b_ih, b_hh, valid_tm, mm_dtype):
  T, B, _ = x_tm.shape
  H = w_hh.shape[1]
  b = (b_ih + b_hh).astype(jnp.float32)
  wih_t = w_ih.T.astype(mm_dtype)
  whh_t = w_hh.T.astype(mm_dtype)

  def step(carry, inp):
    h, c = carry
    x_t, m_t = inp
    g = (jnp.dot(x_t.astype(mm_dtype), wih_t, preferred_element_type=jnp.float32)
         + jnp.dot(h.astype(mm_dtype), whh_t, preferred_element_type=jnp.float32)
         + b)
    i = jax.nn.sigmoid(g[:, :H])
    f = jax.nn.sigmoid(g[:, H:2 * H])
    gg = jnp.tanh(g[:, 2 * H:3 * H])
    o = jax.nn.sigmoid(g[:, 3 * H:])
    c_new = f * c + i * gg
    h_new = o * jnp.tanh(c_new)
    m = m_t[:, None] > 0
    return (jnp.where(m, h_new, h), jnp.where(m, c_new, c)), jnp.where(m, h_new, 0.0)

  zero = jnp.zeros((B, H), jnp.float32)
  (h, c), outs = lax.scan(step, (zero, zero), (x_tm, valid_tm))
  return outs, h, c


def _reverse_within_length(x_tm, lengths):
  T = x_tm.shape[0]
  t_idx = jnp.arange(T)[:, None]
  ln = lengths[None, :]
  idx = jnp.where(t_idx < ln, ln - 1 - t_idx, t_idx)
  return jnp.take_along_axis(x_tm, idx[:, :, None], axis=0)


def blstm_forward_ref(params, seq, mask, mm_dtype=jnp.bfloat16):
  B, T, _ = seq.shape
  lengths = jnp.sum((mask == 0).astype(jnp.int32), axis=1)
  valid_tm = (jnp.arange(T)[:, None] < lengths[None, :]).astype(jnp.float32)
  x_tm = jnp.transpose(seq, (1, 0, 2)).astype(jnp.float32)
  h_list, c_list = [], []
  for layer_params in params:
    (wih_f, whh_f, bih_f, bhh_f), (wih_b, whh_b, bih_b, bhh_b) = layer_params
    out_f, hn_f, cn_f = _ref_lstm_dir(x_tm, wih_f, whh_f, bih_f, bhh_f,
                                      valid_tm, mm_dtype)
    x_rev = _reverse_within_length(x_tm, lengths)
    out_b_rev, hn_b, cn_b = _ref_lstm_dir(x_rev, wih_b, whh_b, bih_b, bhh_b,
                                          valid_tm, mm_dtype)
    out_b = _reverse_within_length(out_b_rev, lengths)
    x_tm = jnp.concatenate([out_f, out_b], axis=-1)
    h_list += [hn_f, hn_b]
    c_list += [cn_f, cn_b]
  return (jnp.transpose(x_tm, (1, 0, 2)),
          (jnp.stack(h_list, 0), jnp.stack(c_list, 0)))


if __name__ == "__main__":
  B, T, INPUT_DIM, HIDDEN_DIM, NUM_LAYERS = 2, 8, 16, 32, 2

  key = jax.random.PRNGKey(0)
  kp, kx = jax.random.split(key)
  params = init_blstm_params(kp, INPUT_DIM, HIDDEN_DIM, NUM_LAYERS)

  seq = jax.random.normal(kx, (B, T, INPUT_DIM), jnp.float32)
  # lengths sorted descending (as pack_padded_sequence requires): [8, 5]
  lengths = jnp.array([8, 5], jnp.int32)
  mask = (jnp.arange(T)[None, :] >= lengths[:, None]).astype(jnp.int32)  # 1 == pad

  fwd = jax.jit(blstm_forward)
  output, (h_n, c_n) = fwd(params, seq, mask)
  output = jax.block_until_ready(output)
  h_n = jax.block_until_ready(h_n)
  c_n = jax.block_until_ready(c_n)

  assert output.shape == (B, T, 2 * HIDDEN_DIM)
  assert h_n.shape == (2 * NUM_LAYERS, B, HIDDEN_DIM)
  assert c_n.shape == (2 * NUM_LAYERS, B, HIDDEN_DIM)

  # Reference with the same mixed precision (bf16 matmuls, f32 accumulation).
  out_ref, (h_ref, c_ref) = blstm_forward_ref(params, seq, mask, jnp.bfloat16)
  assert jnp.allclose(output, out_ref, atol=1e-3), "output mismatch (bf16 ref)"
  assert jnp.allclose(h_n, h_ref, atol=1e-3), "h_n mismatch (bf16 ref)"
  assert jnp.allclose(c_n, c_ref, atol=1e-3), "c_n mismatch (bf16 ref)"

  # Sanity check against the full-f32 reference (bf16 rounding only).
  out_f32, _ = blstm_forward_ref(params, seq, mask, jnp.float32)
  assert jnp.allclose(output, out_f32, atol=5e-2), "output far from f32 reference"

  print("KERNEL_OK")
</pallas_src>

<mosaic_0001>
module attributes {stable_mosaic.version = 11 : i64} {
  func.func @_bilstm_layer_kernel(%arg0: memref<8x1xi32, #tpu.memory_space<vmem>>, %arg1: memref<64x64xbf16, #tpu.memory_space<vmem>>, %arg2: memref<64x256xbf16, #tpu.memory_space<vmem>>, %arg3: memref<64x256xbf16, #tpu.memory_space<vmem>>, %arg4: memref<1x256xf32, #tpu.memory_space<vmem>>, %arg5: memref<8x8x64xf32, #tpu.memory_space<vmem>>, %arg6: memref<8x64xf32, #tpu.memory_space<vmem>>, %arg7: memref<8x64xf32, #tpu.memory_space<vmem>>, %arg8: memref<8x8x256xf32, #tpu.memory_space<vmem>>) attributes {dimension_semantics = [], scalar_prefetch = 0 : i64, scratch_operands = 1 : i64, tpu.core_type = #tpu.core_type<tc>} {
    %c0 = arith.constant 0 : index
    %c0_0 = arith.constant 0 : index
    %0 = vector.load %arg1[%c0, %c0_0] : memref<64x64xbf16, #tpu.memory_space<vmem>>, vector<64x64xbf16>
    %c0_1 = arith.constant 0 : index
    %c0_2 = arith.constant 0 : index
    %1 = vector.load %arg2[%c0_1, %c0_2] : memref<64x256xbf16, #tpu.memory_space<vmem>>, vector<64x256xbf16>
    %cst = arith.constant dense<0.000000e+00> : vector<64x256xf32>
    %2 = tpu.matmul %0, %1, %cst {dimension_numbers = #tpu.dot_dimension_numbers<[1], [0], [0], [1], [0, 0, 1, 1], [], []>} : vector<64x64xbf16>, vector<64x256xbf16>, vector<64x256xf32> -> vector<64x256xf32>
    %c0_3 = arith.constant 0 : index
    %c0_4 = arith.constant 0 : index
    %3 = vector.load %arg4[%c0_3, %c0_4] : memref<1x256xf32, #tpu.memory_space<vmem>>, vector<1x256xf32>
    %4 = vector.broadcast %3 : vector<1x256xf32> to vector<64x256xf32>
    %5 = arith.addf %2, %4 : vector<64x256xf32>
    %6 = vector.shape_cast %5 : vector<64x256xf32> to vector<8x8x256xf32>
    %c0_5 = arith.constant 0 : index
    %c0_6 = arith.constant 0 : index
    %c0_7 = arith.constant 0 : index
    %7 = vector.load %arg8[%c0_5, %c0_6, %c0_7] : memref<8x8x256xf32, #tpu.memory_space<vmem>>, vector<8x8x256xf32>
    tpu.vector_store %arg8[%c0_5, %c0_6, %c0_7], %6 {strides = array<i32>} : memref<8x8x256xf32, #tpu.memory_space<vmem>>, vector<8x8x256xf32>,
    %c0_8 = arith.constant 0 : index
    %c0_9 = arith.constant 0 : index
    %8 = vector.load %arg3[%c0_8, %c0_9] : memref<64x256xbf16, #tpu.memory_space<vmem>>, vector<64x256xbf16>
    %c0_10 = arith.constant 0 : index
    %c0_11 = arith.constant 0 : index
    %9 = vector.load %arg0[%c0_10, %c0_11] : memref<8x1xi32, #tpu.memory_space<vmem>>, vector<8x1xi32>
    %cst_12 = arith.constant 0.000000e+00 : f32
    %10 = vector.broadcast %cst_12 : f32 to vector<8x32xf32>
    %c0_i32 = arith.constant 0 : i32
    %c7_i32 = arith.constant 7 : i32
    %11 = arith.subi %c7_i32, %c0_i32 : i32
    %12 = tpu.concatenate %10, %10 in 1 : vector<8x32xf32>, vector<8x32xf32> -> vector<8x64xf32>
    %13 = arith.truncf %12 : vector<8x64xf32> to vector<8x64xbf16>
    %cst_13 = arith.constant dense<0.000000e+00> : vector<8x256xf32>
    %14 = tpu.matmul %13, %8, %cst_13 {dimension_numbers = #tpu.dot_dimension_numbers<[1], [0], [0], [1], [0, 0, 1, 1], [], []>} : vector<8x64xbf16>, vector<64x256xbf16>, vector<8x256xf32> -> vector<8x256xf32>
    %15 = arith.index_cast %c0_i32 : i32 to index
    %c0_14 = arith.constant 0 : index
    %c0_15 = arith.constant 0 : index
    %16 = vector.load %arg8[%15, %c0_14, %c0_15] : memref<8x8x256xf32, #tpu.memory_space<vmem>>, vector<1x8x256xf32>
    %17 = vector.shape_cast %16 : vector<1x8x256xf32> to vector<8x256xf32>
    %18 = vector.extract_strided_slice %17 {offsets = [0, 0], sizes = [8, 128], strides = [1, 1]} : vector<8x256xf32> to vector<8x128xf32>
    %19 = vector.extract_strided_slice %14 {offsets = [0, 0], sizes = [8, 128], strides = [1, 1]} : vector<8x256xf32> to vector<8x128xf32>
    %20 = arith.addf %18, %19 : vector<8x128xf32>
    %21 = arith.index_cast %11 : i32 to index
    %c0_16 = arith.constant 0 : index
    %c0_17 = arith.constant 0 : index
    %22 = vector.load %arg8[%21, %c0_16, %c0_17] : memref<8x8x256xf32, #tpu.memory_space<vmem>>, vector<1x8x256xf32>
    %23 = vector.shape_cast %22 : vector<1x8x256xf32> to vector<8x256xf32>
    %24 = vector.extract_strided_slice %23 {offsets = [0, 128], sizes = [8, 128], strides = [1, 1]} : vector<8x256xf32> to vector<8x128xf32>
    %25 = vector.extract_strided_slice %14 {offsets = [0, 128], sizes = [8, 128], strides = [1, 1]} : vector<8x256xf32> to vector<8x128xf32>
    %26 = arith.addf %24, %25 : vector<8x128xf32>
    %27 = vector.extract_strided_slice %20 {offsets = [0, 0], sizes = [8, 32], strides = [1, 1]} : vector<8x128xf32> to vector<8x32xf32>
    %28 = arith.negf %27 : vector<8x32xf32>
    %29 = math.exp %28 : vector<8x32xf32>
    %cst_18 = arith.constant 1.000000e+00 : f32
    %30 = vector.broadcast %cst_18 : f32 to vector<8x32xf32>
    %31 = arith.addf %30, %29 : vector<8x32xf32>
    %32 = arith.divf %30, %31 : vector<8x32xf32>
    %33 = vector.extract_strided_slice %20 {offsets = [0, 32], sizes = [8, 32], strides = [1, 1]} : vector<8x128xf32> to vector<8x32xf32>
    %34 = arith.negf %33 : vector<8x32xf32>
    %35 = math.exp %34 : vector<8x32xf32>
    %cst_19 = arith.constant 1.000000e+00 : f32
    %36 = vector.broadcast %cst_19 : f32 to vector<8x32xf32>
    %37 = arith.addf %36, %35 : vector<8x32xf32>
    %38 = arith.divf %36, %37 : vector<8x32xf32>
    %39 = vector.extract_strided_slice %20 {offsets = [0, 64], sizes = [8, 32], strides = [1, 1]} : vector<8x128xf32> to vector<8x32xf32>
    %40 = math.tanh %39 : vector<8x32xf32>
    %41 = vector.extract_strided_slice %20 {offsets = [0, 96], sizes = [8, 32], strides = [1, 1]} : vector<8x128xf32> to vector<8x32xf32>
    %42 = arith.negf %41 : vector<8x32xf32>
    %43 = math.exp %42 : vector<8x32xf32>
    %cst_20 = arith.constant 1.000000e+00 : f32
    %44 = vector.broadcast %cst_20 : f32 to vector<8x32xf32>
    %45 = arith.addf %44, %43 : vector<8x32xf32>
    %46 = arith.divf %44, %45 : vector<8x32xf32>
    %47 = arith.mulf %38, %10 : vector<8x32xf32>
    %48 = arith.mulf %32, %40 : vector<8x32xf32>
    %49 = arith.addf %47, %48 : vector<8x32xf32>
    %50 = math.tanh %49 : vector<8x32xf32>
    %51 = arith.mulf %46, %50 : vector<8x32xf32>
    %52 = vector.extract_strided_slice %26 {offsets = [0, 0], sizes = [8, 32], strides = [1, 1]} : vector<8x128xf32> to vector<8x32xf32>
    %53 = arith.negf %52 : vector<8x32xf32>
    %54 = math.exp %53 : vector<8x32xf32>
    %cst_21 = arith.constant 1.000000e+00 : f32
    %55 = vector.broadcast %cst_21 : f32 to vector<8x32xf32>
    %56 = arith.addf %55, %54 : vector<8x32xf32>
    %57 = arith.divf %55, %56 : vector<8x32xf32>
    %58 = vector.extract_strided_slice %26 {offsets = [0, 32], sizes = [8, 32], strides = [1, 1]} : vector<8x128xf32> to vector<8x32xf32>
    %59 = arith.negf %58 : vector<8x32xf32>
    %60 = math.exp %59 : vector<8x32xf32>
    %cst_22 = arith.constant 1.000000e+00 : f32
    %61 = vector.broadcast %cst_22 : f32 to vector<8x32xf32>
    %62 = arith.addf %61, %60 : vector<8x32xf32>
    %63 = arith.divf %61, %62 : vector<8x32xf32>
    %64 = vector.extract_strided_slice %26 {offsets = [0, 64], sizes = [8, 32], strides = [1, 1]} : vector<8x128xf32> to vector<8x32xf32>
    %65 = math.tanh %64 : vector<8x32xf32>
    %66 = vector.extract_strided_slice %26 {offsets = [0, 96], sizes = [8, 32], strides = [1, 1]} : vector<8x128xf32> to vector<8x32xf32>
    %67 = arith.negf %66 : vector<8x32xf32>
    %68 = math.exp %67 : vector<8x32xf32>
    %cst_23 = arith.constant 1.000000e+00 : f32
    %69 = vector.broadcast %cst_23 : f32 to vector<8x32xf32>
    %70 = arith.addf %69, %68 : vector<8x32xf32>
    %71 = arith.divf %69, %70 : vector<8x32xf32>
    %72 = arith.mulf %63, %10 : vector<8x32xf32>
    %73 = arith.mulf %57, %65 : vector<8x32xf32>
    %74 = arith.addf %72, %73 : vector<8x32xf32>
    %75 = math.tanh %74 : vector<8x32xf32>
    %76 = arith.mulf %71, %75 : vector<8x32xf32>
    %77 = vector.broadcast %c0_i32 : i32 to vector<8x1xi32>
    %78 = arith.cmpi sgt, %9, %77 : vector<8x1xi32>
    %79 = vector.broadcast %11 : i32 to vector<8x1xi32>
    %80 = arith.cmpi sgt, %9, %79 : vector<8x1xi32>
    %cst_24 = arith.constant 0.000000e+00 : f32
    %81 = vector.shape_cast %78 : vector<8x1xi1> to vector<8x1xi1>
    %82 = vector.broadcast %81 : vector<8x1xi1> to vector<8x32xi1>
    %83 = vector.broadcast %cst_24 : f32 to vector<8x32xf32>
    %84 = arith.select %82, %51, %83 : vector<8x32xi1>, vector<8x32xf32>
    %85 = arith.index_cast %c0_i32 : i32 to index
    %c0_25 = arith.constant 0 : index
    %c0_26 = arith.constant 0 : index
    %86 = vector.load %arg5[%85, %c0_25, %c0_26] : memref<8x8x64xf32, #tpu.memory_space<vmem>>, vector<1x8x32xf32>
    %87 = vector.shape_cast %86 : vector<1x8x32xf32> to vector<8x32xf32>
    %88 = vector.shape_cast %84 : vector<8x32xf32> to vector<1x8x32xf32>
    tpu.vector_store %arg5[%85, %c0_25, %c0_26], %88 {strides = array<i32>} : memref<8x8x64xf32, #tpu.memory_space<vmem>>, vector<1x8x32xf32>,
    %cst_27 = arith.constant 0.000000e+00 : f32
    %89 = vector.shape_cast %80 : vector<8x1xi1> to vector<8x1xi1>
    %90 = vector.broadcast %89 : vector<8x1xi1> to vector<8x32xi1>
    %91 = vector.broadcast %cst_27 : f32 to vector<8x32xf32>
    %92 = arith.select %90, %76, %91 : vector<8x32xi1>, vector<8x32xf32>
    %93 = arith.index_cast %11 : i32 to index
    %c0_28 = arith.constant 0 : index
    %c32 = arith.constant 32 : index
    %94 = vector.load %arg5[%93, %c0_28, %c32] : memref<8x8x64xf32, #tpu.memory_space<vmem>>, vector<1x8x32xf32>
    %95 = vector.shape_cast %94 : vector<1x8x32xf32> to vector<8x32xf32>
    %96 = vector.shape_cast %92 : vector<8x32xf32> to vector<1x8x32xf32>
    tpu.vector_store %arg5[%93, %c0_28, %c32], %96 {strides = array<i32>} : memref<8x8x64xf32, #tpu.memory_space<vmem>>, vector<1x8x32xf32>,
    %97 = vector.shape_cast %78 : vector<8x1xi1> to vector<8x1xi1>
    %98 = vector.broadcast %97 : vector<8x1xi1> to vector<8x32xi1>
    %99 = arith.select %98, %51, %10 : vector<8x32xi1>, vector<8x32xf32>
    %100 = vector.shape_cast %78 : vector<8x1xi1> to vector<8x1xi1>
    %101 = vector.broadcast %100 : vector<8x1xi1> to vector<8x32xi1>
    %102 = arith.select %101, %49, %10 : vector<8x32xi1>, vector<8x32xf32>
    %103 = vector.shape_cast %80 : vector<8x1xi1> to vector<8x1xi1>
    %104 = vector.broadcast %103 : vector<8x1xi1> to vector<8x32xi1>
    %105 = arith.select %104, %76, %10 : vector<8x32xi1>, vector<8x32xf32>
    %106 = vector.shape_cast %80 : vector<8x1xi1> to vector<8x1xi1>
    %107 = vector.broadcast %106 : vector<8x1xi1> to vector<8x32xi1>
    %108 = arith.select %107, %74, %10 : vector<8x32xi1>, vector<8x32xf32>
    %c1_i32 = arith.constant 1 : i32
    %c7_i32_29 = arith.constant 7 : i32
    %109 = arith.subi %c7_i32_29, %c1_i32 : i32
    %110 = tpu.concatenate %99, %105 in 1 : vector<8x32xf32>, vector<8x32xf32> -> vector<8x64xf32>
    %111 = arith.truncf %110 : vector<8x64xf32> to vector<8x64xbf16>
    %cst_30 = arith.constant dense<0.000000e+00> : vector<8x256xf32>
    %112 = tpu.matmul %111, %8, %cst_30 {dimension_numbers = #tpu.dot_dimension_numbers<[1], [0], [0], [1], [0, 0, 1, 1], [], []>} : vector<8x64xbf16>, vector<64x256xbf16>, vector<8x256xf32> -> vector<8x256xf32>
    %113 = arith.index_cast %c1_i32 : i32 to index
    %c0_31 = arith.constant 0 : index
    %c0_32 = arith.constant 0 : index
    %114 = vector.load %arg8[%113, %c0_31, %c0_32] : memref<8x8x256xf32, #tpu.memory_space<vmem>>, vector<1x8x256xf32>
    %115 = vector.shape_cast %114 : vector<1x8x256xf32> to vector<8x256xf32>
    %116 = vector.extract_strided_slice %115 {offsets = [0, 0], sizes = [8, 128], strides = [1, 1]} : vector<8x256xf32> to vector<8x128xf32>
    %117 = vector.extract_strided_slice %112 {offsets = [0, 0], sizes = [8, 128], strides = [1, 1]} : vector<8x256xf32> to vector<8x128xf32>
    %118 = arith.addf %116, %117 : vector<8x128xf32>
    %119 = arith.index_cast %109 : i32 to index
    %c0_33 = arith.constant 0 : index
    %c0_34 = arith.constant 0 : index
    %120 = vector.load %arg8[%119, %c0_33, %c0_34] : memref<8x8x256xf32, #tpu.memory_space<vmem>>, vector<1x8x256xf32>
    %121 = vector.shape_cast %120 : vector<1x8x256xf32> to vector<8x256xf32>
    %122 = vector.extract_strided_slice %121 {offsets = [0, 128], sizes = [8, 128], strides = [1, 1]} : vector<8x256xf32> to vector<8x128xf32>
    %123 = vector.extract_strided_slice %112 {offsets = [0, 128], sizes = [8, 128], strides = [1, 1]} : vector<8x256xf32> to vector<8x128xf32>
    %124 = arith.addf %122, %123 : vector<8x128xf32>
    %125 = vector.extract_strided_slice %118 {offsets = [0, 0], sizes = [8, 32], strides = [1, 1]} : vector<8x128xf32> to vector<8x32xf32>
    %126 = arith.negf %125 : vector<8x32xf32>
    %127 = math.exp %126 : vector<8x32xf32>
    %cst_35 = arith.constant 1.000000e+00 : f32
    %128 = vector.broadcast %cst_35 : f32 to vector<8x32xf32>
    %129 = arith.addf %128, %127 : vector<8x32xf32>
    %130 = arith.divf %128, %129 : vector<8x32xf32>
    %131 = vector.extract_strided_slice %118 {offsets = [0, 32], sizes = [8, 32], strides = [1, 1]} : vector<8x128xf32> to vector<8x32xf32>
    %132 = arith.negf %131 : vector<8x32xf32>
    %133 = math.exp %132 : vector<8x32xf32>
    %cst_36 = arith.constant 1.000000e+00 : f32
    %134 = vector.broadcast %cst_36 : f32 to vector<8x32xf32>
    %135 = arith.addf %134, %133 : vector<8x32xf32>
    %136 = arith.divf %134, %135 : vector<8x32xf32>
    %137 = vector.extract_strided_slice %118 {offsets = [0, 64], sizes = [8, 32], strides = [1, 1]} : vector<8x128xf32> to vector<8x32xf32>
    %138 = math.tanh %137 : vector<8x32xf32>
    %139 = vector.extract_strided_slice %118 {offsets = [0, 96], sizes = [8, 32], strides = [1, 1]} : vector<8x128xf32> to vector<8x32xf32>
    %140 = arith.negf %139 : vector<8x32xf32>
    %141 = math.exp %140 : vector<8x32xf32>
    %cst_37 = arith.constant 1.000000e+00 : f32
    %142 = vector.broadcast %cst_37 : f32 to vector<8x32xf32>
    %143 = arith.addf %142, %141 : vector<8x32xf32>
    %144 = arith.divf %142, %143 : vector<8x32xf32>
    %145 = arith.mulf %136, %102 : vector<8x32xf32>
    %146 = arith.mulf %130, %138 : vector<8x32xf32>
    %147 = arith.addf %145, %146 : vector<8x32xf32>
    %148 = math.tanh %147 : vector<8x32xf32>
    %149 = arith.mulf %144, %148 : vector<8x32xf32>
    %150 = vector.extract_strided_slice %124 {offsets = [0, 0], sizes = [8, 32], strides = [1, 1]} : vector<8x128xf32> to vector<8x32xf32>
    %151 = arith.negf %150 : vector<8x32xf32>
    %152 = math.exp %151 : vector<8x32xf32>
    %cst_38 = arith.constant 1.000000e+00 : f32
    %153 = vector.broadcast %cst_38 : f32 to vector<8x32xf32>
    %154 = arith.addf %153, %152 : vector<8x32xf32>
    %155 = arith.divf %153, %154 : vector<8x32xf32>
    %156 = vector.extract_strided_slice %124 {offsets = [0, 32], sizes = [8, 32], strides = [1, 1]} : vector<8x128xf32> to vector<8x32xf32>
    %157 = arith.negf %156 : vector<8x32xf32>
    %158 = math.exp %157 : vector<8x32xf32>
    %cst_39 = arith.constant 1.000000e+00 : f32
    %159 = vector.broadcast %cst_39 : f32 to vector<8x32xf32>
    %160 = arith.addf %159, %158 : vector<8x32xf32>
    %161 = arith.divf %159, %160 : vector<8x32xf32>
    %162 = vector.extract_strided_slice %124 {offsets = [0, 64], sizes = [8, 32], strides = [1, 1]} : vector<8x128xf32> to vector<8x32xf32>
    %163 = math.tanh %162 : vector<8x32xf32>
    %164 = vector.extract_strided_slice %124 {offsets = [0, 96], sizes = [8, 32], strides = [1, 1]} : vector<8x128xf32> to vector<8x32xf32>
    %165 = arith.negf %164 : vector<8x32xf32>
    %166 = math.exp %165 : vector<8x32xf32>
    %cst_40 = arith.constant 1.000000e+00 : f32
    %167 = vector.broadcast %cst_40 : f32 to vector<8x32xf32>
    %168 = arith.addf %167, %166 : vector<8x32xf32>
    %169 = arith.divf %167, %168 : vector<8x32xf32>
    %170 = arith.mulf %161, %108 : vector<8x32xf32>
    %171 = arith.mulf %155, %163 : vector<8x32xf32>
    %172 = arith.addf %170, %171 : vector<8x32xf32>
    %173 = math.tanh %172 : vector<8x32xf32>
    %174 = arith.mulf %169, %173 : vector<8x32xf32>
    %175 = vector.broadcast %c1_i32 : i32 to vector<8x1xi32>
    %176 = arith.cmpi sgt, %9, %175 : vector<8x1xi32>
    %177 = vector.broadcast %109 : i32 to vector<8x1xi32>
    %178 = arith.cmpi sgt, %9, %177 : vector<8x1xi32>
    %cst_41 = arith.constant 0.000000e+00 : f32
    %179 = vector.shape_cast %176 : vector<8x1xi1> to vector<8x1xi1>
    %180 = vector.broadcast %179 : vector<8x1xi1> to vector<8x32xi1>
    %181 = vector.broadcast %cst_41 : f32 to vector<8x32xf32>
    %182 = arith.select %180, %149, %181 : vector<8x32xi1>, vector<8x32xf32>
    %183 = arith.index_cast %c1_i32 : i32 to index
    %c0_42 = arith.constant 0 : index
    %c0_43 = arith.constant 0 : index
    %184 = vector.load %arg5[%183, %c0_42, %c0_43] : memref<8x8x64xf32, #tpu.memory_space<vmem>>, vector<1x8x32xf32>
    %185 = vector.shape_cast %184 : vector<1x8x32xf32> to vector<8x32xf32>
    %186 = vector.shape_cast %182 : vector<8x32xf32> to vector<1x8x32xf32>
    tpu.vector_store %arg5[%183, %c0_42, %c0_43], %186 {strides = array<i32>} : memref<8x8x64xf32, #tpu.memory_space<vmem>>, vector<1x8x32xf32>,
    %cst_44 = arith.constant 0.000000e+00 : f32
    %187 = vector.shape_cast %178 : vector<8x1xi1> to vector<8x1xi1>
    %188 = vector.broadcast %187 : vector<8x1xi1> to vector<8x32xi1>
    %189 = vector.broadcast %cst_44 : f32 to vector<8x32xf32>
    %190 = arith.select %188, %174, %189 : vector<8x32xi1>, vector<8x32xf32>
    %191 = arith.index_cast %109 : i32 to index
    %c0_45 = arith.constant 0 : index
    %c32_46 = arith.constant 32 : index
    %192 = vector.load %arg5[%191, %c0_45, %c32_46] : memref<8x8x64xf32, #tpu.memory_space<vmem>>, vector<1x8x32xf32>
    %193 = vector.shape_cast %192 : vector<1x8x32xf32> to vector<8x32xf32>
    %194 = vector.shape_cast %190 : vector<8x32xf32> to vector<1x8x32xf32>
    tpu.vector_store %arg5[%191, %c0_45, %c32_46], %194 {strides = array<i32>} : memref<8x8x64xf32, #tpu.memory_space<vmem>>, vector<1x8x32xf32>,
    %195 = vector.shape_cast %176 : vector<8x1xi1> to vector<8x1xi1>
    %196 = vector.broadcast %195 : vector<8x1xi1> to vector<8x32xi1>
    %197 = arith.select %196, %149, %99 : vector<8x32xi1>, vector<8x32xf32>
    %198 = vector.shape_cast %176 : vector<8x1xi1> to vector<8x1xi1>
    %199 = vector.broadcast %198 : vector<8x1xi1> to vector<8x32xi1>
    %200 = arith.select %199, %147, %102 : vector<8x32xi1>, vector<8x32xf32>
    %201 = vector.shape_cast %178 : vector<8x1xi1> to vector<8x1xi1>
    %202 = vector.broadcast %201 : vector<8x1xi1> to vector<8x32xi1>
    %203 = arith.select %202, %174, %105 : vector<8x32xi1>, vector<8x32xf32>
    %204 = vector.shape_cast %178 : vector<8x1xi1> to vector<8x1xi1>
    %205 = vector.broadcast %204 : vector<8x1xi1> to vector<8x32xi1>
    %206 = arith.select %205, %172, %108 : vector<8x32xi1>, vector<8x32xf32>
    %c2_i32 = arith.constant 2 : i32
    %c7_i32_47 = arith.constant 7 : i32
    %207 = arith.subi %c7_i32_47, %c2_i32 : i32
    %208 = tpu.concatenate %197, %203 in 1 : vector<8x32xf32>, vector<8x32xf32> -> vector<8x64xf32>
    %209 = arith.truncf %208 : vector<8x64xf32> to vector<8x64xbf16>
    %cst_48 = arith.constant dense<0.000000e+00> : vector<8x256xf32>
    %210 = tpu.matmul %209, %8, %cst_48 {dimension_numbers = #tpu.dot_dimension_numbers<[1], [0], [0], [1], [0, 0, 1, 1], [], []>} : vector<8x64xbf16>, vector<64x256xbf16>, vector<8x256xf32> -> vector<8x256xf32>
    %211 = arith.index_cast %c2_i32 : i32 to index
    %c0_49 = arith.constant 0 : index
    %c0_50 = arith.constant 0 : index
    %212 = vector.load %arg8[%211, %c0_49, %c0_50] : memref<8x8x256xf32, #tpu.memory_space<vmem>>, vector<1x8x256xf32>
    %213 = vector.shape_cast %212 : vector<1x8x256xf32> to vector<8x256xf32>
    %214 = vector.extract_strided_slice %213 {offsets = [0, 0], sizes = [8, 128], strides = [1, 1]} : vector<8x256xf32> to vector<8x128xf32>
    %215 = vector.extract_strided_slice %210 {offsets = [0, 0], sizes = [8, 128], strides = [1, 1]} : vector<8x256xf32> to vector<8x128xf32>
    %216 = arith.addf %214, %215 : vector<8x128xf32>
    %217 = arith.index_cast %207 : i32 to index
    %c0_51 = arith.constant 0 : index
    %c0_52 = arith.constant 0 : index
    %218 = vector.load %arg8[%217, %c0_51, %c0_52] : memref<8x8x256xf32, #tpu.memory_space<vmem>>, vector<1x8x256xf32>
    %219 = vector.shape_cast %218 : vector<1x8x256xf32> to vector<8x256xf32>
    %220 = vector.extract_strided_slice %219 {offsets = [0, 128], sizes = [8, 128], strides = [1, 1]} : vector<8x256xf32> to vector<8x128xf32>
    %221 = vector.extract_strided_slice %210 {offsets = [0, 128], sizes = [8, 128], strides = [1, 1]} : vector<8x256xf32> to vector<8x128xf32>
    %222 = arith.addf %220, %221 : vector<8x128xf32>
    %223 = vector.extract_strided_slice %216 {offsets = [0, 0], sizes = [8, 32], strides = [1, 1]} : vector<8x128xf32> to vector<8x32xf32>
    %224 = arith.negf %223 : vector<8x32xf32>
    %225 = math.exp %224 : vector<8x32xf32>
    %cst_53 = arith.constant 1.000000e+00 : f32
    %226 = vector.broadcast %cst_53 : f32 to vector<8x32xf32>
    %227 = arith.addf %226, %225 : vector<8x32xf32>
    %228 = arith.divf %226, %227 : vector<8x32xf32>
    %229 = vector.extract_strided_slice %216 {offsets = [0, 32], sizes = [8, 32], strides = [1, 1]} : vector<8x128xf32> to vector<8x32xf32>
    %230 = arith.negf %229 : vector<8x32xf32>
    %231 = math.exp %230 : vector<8x32xf32>
    %cst_54 = arith.constant 1.000000e+00 : f32
    %232 = vector.broadcast %cst_54 : f32 to vector<8x32xf32>
    %233 = arith.addf %232, %231 : vector<8x32xf32>
    %234 = arith.divf %232, %233 : vector<8x32xf32>
    %235 = vector.extract_strided_slice %216 {offsets = [0, 64], sizes = [8, 32], strides = [1, 1]} : vector<8x128xf32> to vector<8x32xf32>
    %236 = math.tanh %235 : vector<8x32xf32>
    %237 = vector.extract_strided_slice %216 {offsets = [0, 96], sizes = [8, 32], strides = [1, 1]} : vector<8x128xf32> to vector<8x32xf32>
    %238 = arith.negf %237 : vector<8x32xf32>
    %239 = math.exp %238 : vector<8x32xf32>
    %cst_55 = arith.constant 1.000000e+00 : f32
    %240 = vector.broadcast %cst_55 : f32 to vector<8x32xf32>
    %241 = arith.addf %240, %239 : vector<8x32xf32>
    %242 = arith.divf %240, %241 : vector<8x32xf32>
    %243 = arith.mulf %234, %200 : vector<8x32xf32>
    %244 = arith.mulf %228, %236 : vector<8x32xf32>
    %245 = arith.addf %243, %244 : vector<8x32xf32>
    %246 = math.tanh %245 : vector<8x32xf32>
    %247 = arith.mulf %242, %246 : vector<8x32xf32>
    %248 = vector.extract_strided_slice %222 {offsets = [0, 0], sizes = [8, 32], strides = [1, 1]} : vector<8x128xf32> to vector<8x32xf32>
    %249 = arith.negf %248 : vector<8x32xf32>
    %250 = math.exp %249 : vector<8x32xf32>
    %cst_56 = arith.constant 1.000000e+00 : f32
    %251 = vector.broadcast %cst_56 : f32 to vector<8x32xf32>
    %252 = arith.addf %251, %250 : vector<8x32xf32>
    %253 = arith.divf %251, %252 : vector<8x32xf32>
    %254 = vector.extract_strided_slice %222 {offsets = [0, 32], sizes = [8, 32], strides = [1, 1]} : vector<8x128xf32> to vector<8x32xf32>
    %255 = arith.negf %254 : vector<8x32xf32>
    %256 = math.exp %255 : vector<8x32xf32>
    %cst_57 = arith.constant 1.000000e+00 : f32
    %257 = vector.broadcast %cst_57 : f32 to vector<8x32xf32>
    %258 = arith.addf %257, %256 : vector<8x32xf32>
    %259 = arith.divf %257, %258 : vector<8x32xf32>
    %260 = vector.extract_strided_slice %222 {offsets = [0, 64], sizes = [8, 32], strides = [1, 1]} : vector<8x128xf32> to vector<8x32xf32>
    %261 = math.tanh %260 : vector<8x32xf32>
    %262 = vector.extract_strided_slice %222 {offsets = [0, 96], sizes = [8, 32], strides = [1, 1]} : vector<8x128xf32> to vector<8x32xf32>
    %263 = arith.negf %262 : vector<8x32xf32>
    %264 = math.exp %263 : vector<8x32xf32>
    %cst_58 = arith.constant 1.000000e+00 : f32
    %265 = vector.broadcast %cst_58 : f32 to vector<8x32xf32>
    %266 = arith.addf %265, %264 : vector<8x32xf32>
    %267 = arith.divf %265, %266 : vector<8x32xf32>
    %268 = arith.mulf %259, %206 : vector<8x32xf32>
    %269 = arith.mulf %253, %261 : vector<8x32xf32>
    %270 = arith.addf %268, %269 : vector<8x32xf32>
    %271 = math.tanh %270 : vector<8x32xf32>
    %272 = arith.mulf %267, %271 : vector<8x32xf32>
    %273 = vector.broadcast %c2_i32 : i32 to vector<8x1xi32>
    %274 = arith.cmpi sgt, %9, %273 : vector<8x1xi32>
    %275 = vector.broadcast %207 : i32 to vector<8x1xi32>
    %276 = arith.cmpi sgt, %9, %275 : vector<8x1xi32>
    %cst_59 = arith.constant 0.000000e+00 : f32
    %277 = vector.shape_cast %274 : vector<8x1xi1> to vector<8x1xi1>
    %278 = vector.broadcast %277 : vector<8x1xi1> to vector<8x32xi1>
    %279 = vector.broadcast %cst_59 : f32 to vector<8x32xf32>
    %280 = arith.select %278, %247, %279 : vector<8x32xi1>, vector<8x32xf32>
    %281 = arith.index_cast %c2_i32 : i32 to index
    %c0_60 = arith.constant 0 : index
    %c0_61 = arith.constant 0 : index
    %282 = vector.load %arg5[%281, %c0_60, %c0_61] : memref<8x8x64xf32, #tpu.memory_space<vmem>>, vector<1x8x32xf32>
    %283 = vector.shape_cast %282 : vector<1x8x32xf32> to vector<8x32xf32>
    %284 = vector.shape_cast %280 : vector<8x32xf32> to vector<1x8x32xf32>
    tpu.vector_store %arg5[%281, %c0_60, %c0_61], %284 {strides = array<i32>} : memref<8x8x64xf32, #tpu.memory_space<vmem>>, vector<1x8x32xf32>,
    %cst_62 = arith.constant 0.000000e+00 : f32
    %285 = vector.shape_cast %276 : vector<8x1xi1> to vector<8x1xi1>
    %286 = vector.broadcast %285 : vector<8x1xi1> to vector<8x32xi1>
    %287 = vector.broadcast %cst_62 : f32 to vector<8x32xf32>
    %288 = arith.select %286, %272, %287 : vector<8x32xi1>, vector<8x32xf32>
    %289 = arith.index_cast %207 : i32 to index
    %c0_63 = arith.constant 0 : index
    %c32_64 = arith.constant 32 : index
    %290 = vector.load %arg5[%289, %c0_63, %c32_64] : memref<8x8x64xf32, #tpu.memory_space<vmem>>, vector<1x8x32xf32>
    %291 = vector.shape_cast %290 : vector<1x8x32xf32> to vector<8x32xf32>
    %292 = vector.shape_cast %288 : vector<8x32xf32> to vector<1x8x32xf32>
    tpu.vector_store %arg5[%289, %c0_63, %c32_64], %292 {strides = array<i32>} : memref<8x8x64xf32, #tpu.memory_space<vmem>>, vector<1x8x32xf32>,
    %293 = vector.shape_cast %274 : vector<8x1xi1> to vector<8x1xi1>
    %294 = vector.broadcast %293 : vector<8x1xi1> to vector<8x32xi1>
    %295 = arith.select %294, %247, %197 : vector<8x32xi1>, vector<8x32xf32>
    %296 = vector.shape_cast %274 : vector<8x1xi1> to vector<8x1xi1>
    %297 = vector.broadcast %296 : vector<8x1xi1> to vector<8x32xi1>
    %298 = arith.select %297, %245, %200 : vector<8x32xi1>, vector<8x32xf32>
    %299 = vector.shape_cast %276 : vector<8x1xi1> to vector<8x1xi1>
    %300 = vector.broadcast %299 : vector<8x1xi1> to vector<8x32xi1>
    %301 = arith.select %300, %272, %203 : vector<8x32xi1>, vector<8x32xf32>
    %302 = vector.shape_cast %276 : vector<8x1xi1> to vector<8x1xi1>
    %303 = vector.broadcast %302 : vector<8x1xi1> to vector<8x32xi1>
    %304 = arith.select %303, %270, %206 : vector<8x32xi1>, vector<8x32xf32>
    %c3_i32 = arith.constant 3 : i32
    %c7_i32_65 = arith.constant 7 : i32
    %305 = arith.subi %c7_i32_65, %c3_i32 : i32
    %306 = tpu.concatenate %295, %301 in 1 : vector<8x32xf32>, vector<8x32xf32> -> vector<8x64xf32>
    %307 = arith.truncf %306 : vector<8x64xf32> to vector<8x64xbf16>
    %cst_66 = arith.constant dense<0.000000e+00> : vector<8x256xf32>
    %308 = tpu.matmul %307, %8, %cst_66 {dimension_numbers = #tpu.dot_dimension_numbers<[1], [0], [0], [1], [0, 0, 1, 1], [], []>} : vector<8x64xbf16>, vector<64x256xbf16>, vector<8x256xf32> -> vector<8x256xf32>
    %309 = arith.index_cast %c3_i32 : i32 to index
    %c0_67 = arith.constant 0 : index
    %c0_68 = arith.constant 0 : index
    %310 = vector.load %arg8[%309, %c0_67, %c0_68] : memref<8x8x256xf32, #tpu.memory_space<vmem>>, vector<1x8x256xf32>
    %311 = vector.shape_cast %310 : vector<1x8x256xf32> to vector<8x256xf32>
    %312 = vector.extract_strided_slice %311 {offsets = [0, 0], sizes = [8, 128], strides = [1, 1]} : vector<8x256xf32> to vector<8x128xf32>
    %313 = vector.extract_strided_slice %308 {offsets = [0, 0], sizes = [8, 128], strides = [1, 1]} : vector<8x256xf32> to vector<8x128xf32>
    %314 = arith.addf %312, %313 : vector<8x128xf32>
    %315 = arith.index_cast %305 : i32 to index
    %c0_69 = arith.constant 0 : index
    %c0_70 = arith.constant 0 : index
    %316 = vector.load %arg8[%315, %c0_69, %c0_70] : memref<8x8x256xf32, #tpu.memory_space<vmem>>, vector<1x8x256xf32>
    %317 = vector.shape_cast %316 : vector<1x8x256xf32> to vector<8x256xf32>
    %318 = vector.extract_strided_slice %317 {offsets = [0, 128], sizes = [8, 128], strides = [1, 1]} : vector<8x256xf32> to vector<8x128xf32>
    %319 = vector.extract_strided_slice %308 {offsets = [0, 128], sizes = [8, 128], strides = [1, 1]} : vector<8x256xf32> to vector<8x128xf32>
    %320 = arith.addf %318, %319 : vector<8x128xf32>
    %321 = vector.extract_strided_slice %314 {offsets = [0, 0], sizes = [8, 32], strides = [1, 1]} : vector<8x128xf32> to vector<8x32xf32>
    %322 = arith.negf %321 : vector<8x32xf32>
    %323 = math.exp %322 : vector<8x32xf32>
    %cst_71 = arith.constant 1.000000e+00 : f32
    %324 = vector.broadcast %cst_71 : f32 to vector<8x32xf32>
    %325 = arith.addf %324, %323 : vector<8x32xf32>
    %326 = arith.divf %324, %325 : vector<8x32xf32>
    %327 = vector.extract_strided_slice %314 {offsets = [0, 32], sizes = [8, 32], strides = [1, 1]} : vector<8x128xf32> to vector<8x32xf32>
    %328 = arith.negf %327 : vector<8x32xf32>
    %329 = math.exp %328 : vector<8x32xf32>
    %cst_72 = arith.constant 1.000000e+00 : f32
    %330 = vector.broadcast %cst_72 : f32 to vector<8x32xf32>
    %331 = arith.addf %330, %329 : vector<8x32xf32>
    %332 = arith.divf %330, %331 : vector<8x32xf32>
    %333 = vector.extract_strided_slice %314 {offsets = [0, 64], sizes = [8, 32], strides = [1, 1]} : vector<8x128xf32> to vector<8x32xf32>
    %334 = math.tanh %333 : vector<8x32xf32>
    %335 = vector.extract_strided_slice %314 {offsets = [0, 96], sizes = [8, 32], strides = [1, 1]} : vector<8x128xf32> to vector<8x32xf32>
    %336 = arith.negf %335 : vector<8x32xf32>
    %337 = math.exp %336 : vector<8x32xf32>
    %cst_73 = arith.constant 1.000000e+00 : f32
    %338 = vector.broadcast %cst_73 : f32 to vector<8x32xf32>
    %339 = arith.addf %338, %337 : vector<8x32xf32>
    %340 = arith.divf %338, %339 : vector<8x32xf32>
    %341 = arith.mulf %332, %298 : vector<8x32xf32>
    %342 = arith.mulf %326, %334 : vector<8x32xf32>
    %343 = arith.addf %341, %342 : vector<8x32xf32>
    %344 = math.tanh %343 : vector<8x32xf32>
    %345 = arith.mulf %340, %344 : vector<8x32xf32>
    %346 = vector.extract_strided_slice %320 {offsets = [0, 0], sizes = [8, 32], strides = [1, 1]} : vector<8x128xf32> to vector<8x32xf32>
    %347 = arith.negf %346 : vector<8x32xf32>
    %348 = math.exp %347 : vector<8x32xf32>
    %cst_74 = arith.constant 1.000000e+00 : f32
    %349 = vector.broadcast %cst_74 : f32 to vector<8x32xf32>
    %350 = arith.addf %349, %348 : vector<8x32xf32>
    %351 = arith.divf %349, %350 : vector<8x32xf32>
    %352 = vector.extract_strided_slice %320 {offsets = [0, 32], sizes = [8, 32], strides = [1, 1]} : vector<8x128xf32> to vector<8x32xf32>
    %353 = arith.negf %352 : vector<8x32xf32>
    %354 = math.exp %353 : vector<8x32xf32>
    %cst_75 = arith.constant 1.000000e+00 : f32
    %355 = vector.broadcast %cst_75 : f32 to vector<8x32xf32>
    %356 = arith.addf %355, %354 : vector<8x32xf32>
    %357 = arith.divf %355, %356 : vector<8x32xf32>
    %358 = vector.extract_strided_slice %320 {offsets = [0, 64], sizes = [8, 32], strides = [1, 1]} : vector<8x128xf32> to vector<8x32xf32>
    %359 = math.tanh %358 : vector<8x32xf32>
    %360 = vector.extract_strided_slice %320 {offsets = [0, 96], sizes = [8, 32], strides = [1, 1]} : vector<8x128xf32> to vector<8x32xf32>
    %361 = arith.negf %360 : vector<8x32xf32>
    %362 = math.exp %361 : vector<8x32xf32>
    %cst_76 = arith.constant 1.000000e+00 : f32
    %363 = vector.broadcast %cst_76 : f32 to vector<8x32xf32>
    %364 = arith.addf %363, %362 : vector<8x32xf32>
    %365 = arith.divf %363, %364 : vector<8x32xf32>
    %366 = arith.mulf %357, %304 : vector<8x32xf32>
    %367 = arith.mulf %351, %359 : vector<8x32xf32>
    %368 = arith.addf %366, %367 : vector<8x32xf32>
    %369 = math.tanh %368 : vector<8x32xf32>
    %370 = arith.mulf %365, %369 : vector<8x32xf32>
    %371 = vector.broadcast %c3_i32 : i32 to vector<8x1xi32>
    %372 = arith.cmpi sgt, %9, %371 : vector<8x1xi32>
    %373 = vector.broadcast %305 : i32 to vector<8x1xi32>
    %374 = arith.cmpi sgt, %9, %373 : vector<8x1xi32>
    %cst_77 = arith.constant 0.000000e+00 : f32
    %375 = vector.shape_cast %372 : vector<8x1xi1> to vector<8x1xi1>
    %376 = vector.broadcast %375 : vector<8x1xi1> to vector<8x32xi1>
    %377 = vector.broadcast %cst_77 : f32 to vector<8x32xf32>
    %378 = arith.select %376, %345, %377 : vector<8x32xi1>, vector<8x32xf32>
    %379 = arith.index_cast %c3_i32 : i32 to index
    %c0_78 = arith.constant 0 : index
    %c0_79 = arith.constant 0 : index
    %380 = vector.load %arg5[%379, %c0_78, %c0_79] : memref<8x8x64xf32, #tpu.memory_space<vmem>>, vector<1x8x32xf32>
    %381 = vector.shape_cast %380 : vector<1x8x32xf32> to vector<8x32xf32>
    %382 = vector.shape_cast %378 : vector<8x32xf32> to vector<1x8x32xf32>
    tpu.vector_store %arg5[%379, %c0_78, %c0_79], %382 {strides = array<i32>} : memref<8x8x64xf32, #tpu.memory_space<vmem>>, vector<1x8x32xf32>,
    %cst_80 = arith.constant 0.000000e+00 : f32
    %383 = vector.shape_cast %374 : vector<8x1xi1> to vector<8x1xi1>
    %384 = vector.broadcast %383 : vector<8x1xi1> to vector<8x32xi1>
    %385 = vector.broadcast %cst_80 : f32 to vector<8x32xf32>
    %386 = arith.select %384, %370, %385 : vector<8x32xi1>, vector<8x32xf32>
    %387 = arith.index_cast %305 : i32 to index
    %c0_81 = arith.constant 0 : index
    %c32_82 = arith.constant 32 : index
    %388 = vector.load %arg5[%387, %c0_81, %c32_82] : memref<8x8x64xf32, #tpu.memory_space<vmem>>, vector<1x8x32xf32>
    %389 = vector.shape_cast %388 : vector<1x8x32xf32> to vector<8x32xf32>
    %390 = vector.shape_cast %386 : vector<8x32xf32> to vector<1x8x32xf32>
    tpu.vector_store %arg5[%387, %c0_81, %c32_82], %390 {strides = array<i32>} : memref<8x8x64xf32, #tpu.memory_space<vmem>>, vector<1x8x32xf32>,
    %391 = vector.shape_cast %372 : vector<8x1xi1> to vector<8x1xi1>
    %392 = vector.broadcast %391 : vector<8x1xi1> to vector<8x32xi1>
    %393 = arith.select %392, %345, %295 : vector<8x32xi1>, vector<8x32xf32>
    %394 = vector.shape_cast %372 : vector<8x1xi1> to vector<8x1xi1>
    %395 = vector.broadcast %394 : vector<8x1xi1> to vector<8x32xi1>
    %396 = arith.select %395, %343, %298 : vector<8x32xi1>, vector<8x32xf32>
    %397 = vector.shape_cast %374 : vector<8x1xi1> to vector<8x1xi1>
    %398 = vector.broadcast %397 : vector<8x1xi1> to vector<8x32xi1>
    %399 = arith.select %398, %370, %301 : vector<8x32xi1>, vector<8x32xf32>
    %400 = vector.shape_cast %374 : vector<8x1xi1> to vector<8x1xi1>
    %401 = vector.broadcast %400 : vector<8x1xi1> to vector<8x32xi1>
    %402 = arith.select %401, %368, %304 : vector<8x32xi1>, vector<8x32xf32>
    %c4_i32 = arith.constant 4 : i32
    %c7_i32_83 = arith.constant 7 : i32
    %403 = arith.subi %c7_i32_83, %c4_i32 : i32
    %404 = tpu.concatenate %393, %399 in 1 : vector<8x32xf32>, vector<8x32xf32> -> vector<8x64xf32>
    %405 = arith.truncf %404 : vector<8x64xf32> to vector<8x64xbf16>
    %cst_84 = arith.constant dense<0.000000e+00> : vector<8x256xf32>
    %406 = tpu.matmul %405, %8, %cst_84 {dimension_numbers = #tpu.dot_dimension_numbers<[1], [0], [0], [1], [0, 0, 1, 1], [], []>} : vector<8x64xbf16>, vector<64x256xbf16>, vector<8x256xf32> -> vector<8x256xf32>
    %407 = arith.index_cast %c4_i32 : i32 to index
    %c0_85 = arith.constant 0 : index
    %c0_86 = arith.constant 0 : index
    %408 = vector.load %arg8[%407, %c0_85, %c0_86] : memref<8x8x256xf32, #tpu.memory_space<vmem>>, vector<1x8x256xf32>
    %409 = vector.shape_cast %408 : vector<1x8x256xf32> to vector<8x256xf32>
    %410 = vector.extract_strided_slice %409 {offsets = [0, 0], sizes = [8, 128], strides = [1, 1]} : vector<8x256xf32> to vector<8x128xf32>
    %411 = vector.extract_strided_slice %406 {offsets = [0, 0], sizes = [8, 128], strides = [1, 1]} : vector<8x256xf32> to vector<8x128xf32>
    %412 = arith.addf %410, %411 : vector<8x128xf32>
    %413 = arith.index_cast %403 : i32 to index
    %c0_87 = arith.constant 0 : index
    %c0_88 = arith.constant 0 : index
    %414 = vector.load %arg8[%413, %c0_87, %c0_88] : memref<8x8x256xf32, #tpu.memory_space<vmem>>, vector<1x8x256xf32>
    %415 = vector.shape_cast %414 : vector<1x8x256xf32> to vector<8x256xf32>
    %416 = vector.extract_strided_slice %415 {offsets = [0, 128], sizes = [8, 128], strides = [1, 1]} : vector<8x256xf32> to vector<8x128xf32>
    %417 = vector.extract_strided_slice %406 {offsets = [0, 128], sizes = [8, 128], strides = [1, 1]} : vector<8x256xf32> to vector<8x128xf32>
    %418 = arith.addf %416, %417 : vector<8x128xf32>
    %419 = vector.extract_strided_slice %412 {offsets = [0, 0], sizes = [8, 32], strides = [1, 1]} : vector<8x128xf32> to vector<8x32xf32>
    %420 = arith.negf %419 : vector<8x32xf32>
    %421 = math.exp %420 : vector<8x32xf32>
    %cst_89 = arith.constant 1.000000e+00 : f32
    %422 = vector.broadcast %cst_89 : f32 to vector<8x32xf32>
    %423 = arith.addf %422, %421 : vector<8x32xf32>
    %424 = arith.divf %422, %423 : vector<8x32xf32>
    %425 = vector.extract_strided_slice %412 {offsets = [0, 32], sizes = [8, 32], strides = [1, 1]} : vector<8x128xf32> to vector<8x32xf32>
    %426 = arith.negf %425 : vector<8x32xf32>
    %427 = math.exp %426 : vector<8x32xf32>
    %cst_90 = arith.constant 1.000000e+00 : f32
    %428 = vector.broadcast %cst_90 : f32 to vector<8x32xf32>
    %429 = arith.addf %428, %427 : vector<8x32xf32>
    %430 = arith.divf %428, %429 : vector<8x32xf32>
    %431 = vector.extract_strided_slice %412 {offsets = [0, 64], sizes = [8, 32], strides = [1, 1]} : vector<8x128xf32> to vector<8x32xf32>
    %432 = math.tanh %431 : vector<8x32xf32>
    %433 = vector.extract_strided_slice %412 {offsets = [0, 96], sizes = [8, 32], strides = [1, 1]} : vector<8x128xf32> to vector<8x32xf32>
    %434 = arith.negf %433 : vector<8x32xf32>
    %435 = math.exp %434 : vector<8x32xf32>
    %cst_91 = arith.constant 1.000000e+00 : f32
    %436 = vector.broadcast %cst_91 : f32 to vector<8x32xf32>
    %437 = arith.addf %436, %435 : vector<8x32xf32>
    %438 = arith.divf %436, %437 : vector<8x32xf32>
    %439 = arith.mulf %430, %396 : vector<8x32xf32>
    %440 = arith.mulf %424, %432 : vector<8x32xf32>
    %441 = arith.addf %439, %440 : vector<8x32xf32>
    %442 = math.tanh %441 : vector<8x32xf32>
    %443 = arith.mulf %438, %442 : vector<8x32xf32>
    %444 = vector.extract_strided_slice %418 {offsets = [0, 0], sizes = [8, 32], strides = [1, 1]} : vector<8x128xf32> to vector<8x32xf32>
    %445 = arith.negf %444 : vector<8x32xf32>
    %446 = math.exp %445 : vector<8x32xf32>
    %cst_92 = arith.constant 1.000000e+00 : f32
    %447 = vector.broadcast %cst_92 : f32 to vector<8x32xf32>
    %448 = arith.addf %447, %446 : vector<8x32xf32>
    %449 = arith.divf %447, %448 : vector<8x32xf32>
    %450 = vector.extract_strided_slice %418 {offsets = [0, 32], sizes = [8, 32], strides = [1, 1]} : vector<8x128xf32> to vector<8x32xf32>
    %451 = arith.negf %450 : vector<8x32xf32>
    %452 = math.exp %451 : vector<8x32xf32>
    %cst_93 = arith.constant 1.000000e+00 : f32
    %453 = vector.broadcast %cst_93 : f32 to vector<8x32xf32>
    %454 = arith.addf %453, %452 : vector<8x32xf32>
    %455 = arith.divf %453, %454 : vector<8x32xf32>
    %456 = vector.extract_strided_slice %418 {offsets = [0, 64], sizes = [8, 32], strides = [1, 1]} : vector<8x128xf32> to vector<8x32xf32>
    %457 = math.tanh %456 : vector<8x32xf32>
    %458 = vector.extract_strided_slice %418 {offsets = [0, 96], sizes = [8, 32], strides = [1, 1]} : vector<8x128xf32> to vector<8x32xf32>
    %459 = arith.negf %458 : vector<8x32xf32>
    %460 = math.exp %459 : vector<8x32xf32>
    %cst_94 = arith.constant 1.000000e+00 : f32
    %461 = vector.broadcast %cst_94 : f32 to vector<8x32xf32>
    %462 = arith.addf %461, %460 : vector<8x32xf32>
    %463 = arith.divf %461, %462 : vector<8x32xf32>
    %464 = arith.mulf %455, %402 : vector<8x32xf32>
    %465 = arith.mulf %449, %457 : vector<8x32xf32>
    %466 = arith.addf %464, %465 : vector<8x32xf32>
    %467 = math.tanh %466 : vector<8x32xf32>
    %468 = arith.mulf %463, %467 : vector<8x32xf32>
    %469 = vector.broadcast %c4_i32 : i32 to vector<8x1xi32>
    %470 = arith.cmpi sgt, %9, %469 : vector<8x1xi32>
    %471 = vector.broadcast %403 : i32 to vector<8x1xi32>
    %472 = arith.cmpi sgt, %9, %471 : vector<8x1xi32>
    %cst_95 = arith.constant 0.000000e+00 : f32
    %473 = vector.shape_cast %470 : vector<8x1xi1> to vector<8x1xi1>
    %474 = vector.broadcast %473 : vector<8x1xi1> to vector<8x32xi1>
    %475 = vector.broadcast %cst_95 : f32 to vector<8x32xf32>
    %476 = arith.select %474, %443, %475 : vector<8x32xi1>, vector<8x32xf32>
    %477 = arith.index_cast %c4_i32 : i32 to index
    %c0_96 = arith.constant 0 : index
    %c0_97 = arith.constant 0 : index
    %478 = vector.load %arg5[%477, %c0_96, %c0_97] : memref<8x8x64xf32, #tpu.memory_space<vmem>>, vector<1x8x32xf32>
    %479 = vector.shape_cast %478 : vector<1x8x32xf32> to vector<8x32xf32>
    %480 = vector.shape_cast %476 : vector<8x32xf32> to vector<1x8x32xf32>
    tpu.vector_store %arg5[%477, %c0_96, %c0_97], %480 {strides = array<i32>} : memref<8x8x64xf32, #tpu.memory_space<vmem>>, vector<1x8x32xf32>,
    %cst_98 = arith.constant 0.000000e+00 : f32
    %481 = vector.shape_cast %472 : vector<8x1xi1> to vector<8x1xi1>
    %482 = vector.broadcast %481 : vector<8x1xi1> to vector<8x32xi1>
    %483 = vector.broadcast %cst_98 : f32 to vector<8x32xf32>
    %484 = arith.select %482, %468, %483 : vector<8x32xi1>, vector<8x32xf32>
    %485 = arith.index_cast %403 : i32 to index
    %c0_99 = arith.constant 0 : index
    %c32_100 = arith.constant 32 : index
    %486 = vector.load %arg5[%485, %c0_99, %c32_100] : memref<8x8x64xf32, #tpu.memory_space<vmem>>, vector<1x8x32xf32>
    %487 = vector.shape_cast %486 : vector<1x8x32xf32> to vector<8x32xf32>
    %488 = vector.shape_cast %484 : vector<8x32xf32> to vector<1x8x32xf32>
    tpu.vector_store %arg5[%485, %c0_99, %c32_100], %488 {strides = array<i32>} : memref<8x8x64xf32, #tpu.memory_space<vmem>>, vector<1x8x32xf32>,
    %489 = vector.shape_cast %470 : vector<8x1xi1> to vector<8x1xi1>
    %490 = vector.broadcast %489 : vector<8x1xi1> to vector<8x32xi1>
    %491 = arith.select %490, %443, %393 : vector<8x32xi1>, vector<8x32xf32>
    %492 = vector.shape_cast %470 : vector<8x1xi1> to vector<8x1xi1>
    %493 = vector.broadcast %492 : vector<8x1xi1> to vector<8x32xi1>
    %494 = arith.select %493, %441, %396 : vector<8x32xi1>, vector<8x32xf32>
    %495 = vector.shape_cast %472 : vector<8x1xi1> to vector<8x1xi1>
    %496 = vector.broadcast %495 : vector<8x1xi1> to vector<8x32xi1>
    %497 = arith.select %496, %468, %399 : vector<8x32xi1>, vector<8x32xf32>
    %498 = vector.shape_cast %472 : vector<8x1xi1> to vector<8x1xi1>
    %499 = vector.broadcast %498 : vector<8x1xi1> to vector<8x32xi1>
    %500 = arith.select %499, %466, %402 : vector<8x32xi1>, vector<8x32xf32>
    %c5_i32 = arith.constant 5 : i32
    %c7_i32_101 = arith.constant 7 : i32
    %501 = arith.subi %c7_i32_101, %c5_i32 : i32
    %502 = tpu.concatenate %491, %497 in 1 : vector<8x32xf32>, vector<8x32xf32> -> vector<8x64xf32>
    %503 = arith.truncf %502 : vector<8x64xf32> to vector<8x64xbf16>
    %cst_102 = arith.constant dense<0.000000e+00> : vector<8x256xf32>
    %504 = tpu.matmul %503, %8, %cst_102 {dimension_numbers = #tpu.dot_dimension_numbers<[1], [0], [0], [1], [0, 0, 1, 1], [], []>} : vector<8x64xbf16>, vector<64x256xbf16>, vector<8x256xf32> -> vector<8x256xf32>
    %505 = arith.index_cast %c5_i32 : i32 to index
    %c0_103 = arith.constant 0 : index
    %c0_104 = arith.constant 0 : index
    %506 = vector.load %arg8[%505, %c0_103, %c0_104] : memref<8x8x256xf32, #tpu.memory_space<vmem>>, vector<1x8x256xf32>
    %507 = vector.shape_cast %506 : vector<1x8x256xf32> to vector<8x256xf32>
    %508 = vector.extract_strided_slice %507 {offsets = [0, 0], sizes = [8, 128], strides = [1, 1]} : vector<8x256xf32> to vector<8x128xf32>
    %509 = vector.extract_strided_slice %504 {offsets = [0, 0], sizes = [8, 128], strides = [1, 1]} : vector<8x256xf32> to vector<8x128xf32>
    %510 = arith.addf %508, %509 : vector<8x128xf32>
    %511 = arith.index_cast %501 : i32 to index
    %c0_105 = arith.constant 0 : index
    %c0_106 = arith.constant 0 : index
    %512 = vector.load %arg8[%511, %c0_105, %c0_106] : memref<8x8x256xf32, #tpu.memory_space<vmem>>, vector<1x8x256xf32>
    %513 = vector.shape_cast %512 : vector<1x8x256xf32> to vector<8x256xf32>
    %514 = vector.extract_strided_slice %513 {offsets = [0, 128], sizes = [8, 128], strides = [1, 1]} : vector<8x256xf32> to vector<8x128xf32>
    %515 = vector.extract_strided_slice %504 {offsets = [0, 128], sizes = [8, 128], strides = [1, 1]} : vector<8x256xf32> to vector<8x128xf32>
    %516 = arith.addf %514, %515 : vector<8x128xf32>
    %517 = vector.extract_strided_slice %510 {offsets = [0, 0], sizes = [8, 32], strides = [1, 1]} : vector<8x128xf32> to vector<8x32xf32>
    %518 = arith.negf %517 : vector<8x32xf32>
    %519 = math.exp %518 : vector<8x32xf32>
    %cst_107 = arith.constant 1.000000e+00 : f32
    %520 = vector.broadcast %cst_107 : f32 to vector<8x32xf32>
    %521 = arith.addf %520, %519 : vector<8x32xf32>
    %522 = arith.divf %520, %521 : vector<8x32xf32>
    %523 = vector.extract_strided_slice %510 {offsets = [0, 32], sizes = [8, 32], strides = [1, 1]} : vector<8x128xf32> to vector<8x32xf32>
    %524 = arith.negf %523 : vector<8x32xf32>
    %525 = math.exp %524 : vector<8x32xf32>
    %cst_108 = arith.constant 1.000000e+00 : f32
    %526 = vector.broadcast %cst_108 : f32 to vector<8x32xf32>
    %527 = arith.addf %526, %525 : vector<8x32xf32>
    %528 = arith.divf %526, %527 : vector<8x32xf32>
    %529 = vector.extract_strided_slice %510 {offsets = [0, 64], sizes = [8, 32], strides = [1, 1]} : vector<8x128xf32> to vector<8x32xf32>
    %530 = math.tanh %529 : vector<8x32xf32>
    %531 = vector.extract_strided_slice %510 {offsets = [0, 96], sizes = [8, 32], strides = [1, 1]} : vector<8x128xf32> to vector<8x32xf32>
    %532 = arith.negf %531 : vector<8x32xf32>
    %533 = math.exp %532 : vector<8x32xf32>
    %cst_109 = arith.constant 1.000000e+00 : f32
    %534 = vector.broadcast %cst_109 : f32 to vector<8x32xf32>
    %535 = arith.addf %534, %533 : vector<8x32xf32>
    %536 = arith.divf %534, %535 : vector<8x32xf32>
    %537 = arith.mulf %528, %494 : vector<8x32xf32>
    %538 = arith.mulf %522, %530 : vector<8x32xf32>
    %539 = arith.addf %537, %538 : vector<8x32xf32>
    %540 = math.tanh %539 : vector<8x32xf32>
    %541 = arith.mulf %536, %540 : vector<8x32xf32>
    %542 = vector.extract_strided_slice %516 {offsets = [0, 0], sizes = [8, 32], strides = [1, 1]} : vector<8x128xf32> to vector<8x32xf32>
    %543 = arith.negf %542 : vector<8x32xf32>
    %544 = math.exp %543 : vector<8x32xf32>
    %cst_110 = arith.constant 1.000000e+00 : f32
    %545 = vector.broadcast %cst_110 : f32 to vector<8x32xf32>
    %546 = arith.addf %545, %544 : vector<8x32xf32>
    %547 = arith.divf %545, %546 : vector<8x32xf32>
    %548 = vector.extract_strided_slice %516 {offsets = [0, 32], sizes = [8, 32], strides = [1, 1]} : vector<8x128xf32> to vector<8x32xf32>
    %549 = arith.negf %548 : vector<8x32xf32>
    %550 = math.exp %549 : vector<8x32xf32>
    %cst_111 = arith.constant 1.000000e+00 : f32
    %551 = vector.broadcast %cst_111 : f32 to vector<8x32xf32>
    %552 = arith.addf %551, %550 : vector<8x32xf32>
    %553 = arith.divf %551, %552 : vector<8x32xf32>
    %554 = vector.extract_strided_slice %516 {offsets = [0, 64], sizes = [8, 32], strides = [1, 1]} : vector<8x128xf32> to vector<8x32xf32>
    %555 = math.tanh %554 : vector<8x32xf32>
    %556 = vector.extract_strided_slice %516 {offsets = [0, 96], sizes = [8, 32], strides = [1, 1]} : vector<8x128xf32> to vector<8x32xf32>
    %557 = arith.negf %556 : vector<8x32xf32>
    %558 = math.exp %557 : vector<8x32xf32>
    %cst_112 = arith.constant 1.000000e+00 : f32
    %559 = vector.broadcast %cst_112 : f32 to vector<8x32xf32>
    %560 = arith.addf %559, %558 : vector<8x32xf32>
    %561 = arith.divf %559, %560 : vector<8x32xf32>
    %562 = arith.mulf %553, %500 : vector<8x32xf32>
    %563 = arith.mulf %547, %555 : vector<8x32xf32>
    %564 = arith.addf %562, %563 : vector<8x32xf32>
    %565 = math.tanh %564 : vector<8x32xf32>
    %566 = arith.mulf %561, %565 : vector<8x32xf32>
    %567 = vector.broadcast %c5_i32 : i32 to vector<8x1xi32>
    %568 = arith.cmpi sgt, %9, %567 : vector<8x1xi32>
    %569 = vector.broadcast %501 : i32 to vector<8x1xi32>
    %570 = arith.cmpi sgt, %9, %569 : vector<8x1xi32>
    %cst_113 = arith.constant 0.000000e+00 : f32
    %571 = vector.shape_cast %568 : vector<8x1xi1> to vector<8x1xi1>
    %572 = vector.broadcast %571 : vector<8x1xi1> to vector<8x32xi1>
    %573 = vector.broadcast %cst_113 : f32 to vector<8x32xf32>
    %574 = arith.select %572, %541, %573 : vector<8x32xi1>, vector<8x32xf32>
    %575 = arith.index_cast %c5_i32 : i32 to index
    %c0_114 = arith.constant 0 : index
    %c0_115 = arith.constant 0 : index
    %576 = vector.load %arg5[%575, %c0_114, %c0_115] : memref<8x8x64xf32, #tpu.memory_space<vmem>>, vector<1x8x32xf32>
    %577 = vector.shape_cast %576 : vector<1x8x32xf32> to vector<8x32xf32>
    %578 = vector.shape_cast %574 : vector<8x32xf32> to vector<1x8x32xf32>
    tpu.vector_store %arg5[%575, %c0_114, %c0_115], %578 {strides = array<i32>} : memref<8x8x64xf32, #tpu.memory_space<vmem>>, vector<1x8x32xf32>,
    %cst_116 = arith.constant 0.000000e+00 : f32
    %579 = vector.shape_cast %570 : vector<8x1xi1> to vector<8x1xi1>
    %580 = vector.broadcast %579 : vector<8x1xi1> to vector<8x32xi1>
    %581 = vector.broadcast %cst_116 : f32 to vector<8x32xf32>
    %582 = arith.select %580, %566, %581 : vector<8x32xi1>, vector<8x32xf32>
    %583 = arith.index_cast %501 : i32 to index
    %c0_117 = arith.constant 0 : index
    %c32_118 = arith.constant 32 : index
    %584 = vector.load %arg5[%583, %c0_117, %c32_118] : memref<8x8x64xf32, #tpu.memory_space<vmem>>, vector<1x8x32xf32>
    %585 = vector.shape_cast %584 : vector<1x8x32xf32> to vector<8x32xf32>
    %586 = vector.shape_cast %582 : vector<8x32xf32> to vector<1x8x32xf32>
    tpu.vector_store %arg5[%583, %c0_117, %c32_118], %586 {strides = array<i32>} : memref<8x8x64xf32, #tpu.memory_space<vmem>>, vector<1x8x32xf32>,
    %587 = vector.shape_cast %568 : vector<8x1xi1> to vector<8x1xi1>
    %588 = vector.broadcast %587 : vector<8x1xi1> to vector<8x32xi1>
    %589 = arith.select %588, %541, %491 : vector<8x32xi1>, vector<8x32xf32>
    %590 = vector.shape_cast %568 : vector<8x1xi1> to vector<8x1xi1>
    %591 = vector.broadcast %590 : vector<8x1xi1> to vector<8x32xi1>
    %592 = arith.select %591, %539, %494 : vector<8x32xi1>, vector<8x32xf32>
    %593 = vector.shape_cast %570 : vector<8x1xi1> to vector<8x1xi1>
    %594 = vector.broadcast %593 : vector<8x1xi1> to vector<8x32xi1>
    %595 = arith.select %594, %566, %497 : vector<8x32xi1>, vector<8x32xf32>
    %596 = vector.shape_cast %570 : vector<8x1xi1> to vector<8x1xi1>
    %597 = vector.broadcast %596 : vector<8x1xi1> to vector<8x32xi1>
    %598 = arith.select %597, %564, %500 : vector<8x32xi1>, vector<8x32xf32>
    %c6_i32 = arith.constant 6 : i32
    %c7_i32_119 = arith.constant 7 : i32
    %599 = arith.subi %c7_i32_119, %c6_i32 : i32
    %600 = tpu.concatenate %589, %595 in 1 : vector<8x32xf32>, vector<8x32xf32> -> vector<8x64xf32>
    %601 = arith.truncf %600 : vector<8x64xf32> to vector<8x64xbf16>
    %cst_120 = arith.constant dense<0.000000e+00> : vector<8x256xf32>
    %602 = tpu.matmul %601, %8, %cst_120 {dimension_numbers = #tpu.dot_dimension_numbers<[1], [0], [0], [1], [0, 0, 1, 1], [], []>} : vector<8x64xbf16>, vector<64x256xbf16>, vector<8x256xf32> -> vector<8x256xf32>
    %603 = arith.index_cast %c6_i32 : i32 to index
    %c0_121 = arith.constant 0 : index
    %c0_122 = arith.constant 0 : index
    %604 = vector.load %arg8[%603, %c0_121, %c0_122] : memref<8x8x256xf32, #tpu.memory_space<vmem>>, vector<1x8x256xf32>
    %605 = vector.shape_cast %604 : vector<1x8x256xf32> to vector<8x256xf32>
    %606 = vector.extract_strided_slice %605 {offsets = [0, 0], sizes = [8, 128], strides = [1, 1]} : vector<8x256xf32> to vector<8x128xf32>
    %607 = vector.extract_strided_slice %602 {offsets = [0, 0], sizes = [8, 128], strides = [1, 1]} : vector<8x256xf32> to vector<8x128xf32>
    %608 = arith.addf %606, %607 : vector<8x128xf32>
    %609 = arith.index_cast %599 : i32 to index
    %c0_123 = arith.constant 0 : index
    %c0_124 = arith.constant 0 : index
    %610 = vector.load %arg8[%609, %c0_123, %c0_124] : memref<8x8x256xf32, #tpu.memory_space<vmem>>, vector<1x8x256xf32>
    %611 = vector.shape_cast %610 : vector<1x8x256xf32> to vector<8x256xf32>
    %612 = vector.extract_strided_slice %611 {offsets = [0, 128], sizes = [8, 128], strides = [1, 1]} : vector<8x256xf32> to vector<8x128xf32>
    %613 = vector.extract_strided_slice %602 {offsets = [0, 128], sizes = [8, 128], strides = [1, 1]} : vector<8x256xf32> to vector<8x128xf32>
    %614 = arith.addf %612, %613 : vector<8x128xf32>
    %615 = vector.extract_strided_slice %608 {offsets = [0, 0], sizes = [8, 32], strides = [1, 1]} : vector<8x128xf32> to vector<8x32xf32>
    %616 = arith.negf %615 : vector<8x32xf32>
    %617 = math.exp %616 : vector<8x32xf32>
    %cst_125 = arith.constant 1.000000e+00 : f32
    %618 = vector.broadcast %cst_125 : f32 to vector<8x32xf32>
    %619 = arith.addf %618, %617 : vector<8x32xf32>
    %620 = arith.divf %618, %619 : vector<8x32xf32>
    %621 = vector.extract_strided_slice %608 {offsets = [0, 32], sizes = [8, 32], strides = [1, 1]} : vector<8x128xf32> to vector<8x32xf32>
    %622 = arith.negf %621 : vector<8x32xf32>
    %623 = math.exp %622 : vector<8x32xf32>
    %cst_126 = arith.constant 1.000000e+00 : f32
    %624 = vector.broadcast %cst_126 : f32 to vector<8x32xf32>
    %625 = arith.addf %624, %623 : vector<8x32xf32>
    %626 = arith.divf %624, %625 : vector<8x32xf32>
    %627 = vector.extract_strided_slice %608 {offsets = [0, 64], sizes = [8, 32], strides = [1, 1]} : vector<8x128xf32> to vector<8x32xf32>
    %628 = math.tanh %627 : vector<8x32xf32>
    %629 = vector.extract_strided_slice %608 {offsets = [0, 96], sizes = [8, 32], strides = [1, 1]} : vector<8x128xf32> to vector<8x32xf32>
    %630 = arith.negf %629 : vector<8x32xf32>
    %631 = math.exp %630 : vector<8x32xf32>
    %cst_127 = arith.constant 1.000000e+00 : f32
    %632 = vector.broadcast %cst_127 : f32 to vector<8x32xf32>
    %633 = arith.addf %632, %631 : vector<8x32xf32>
    %634 = arith.divf %632, %633 : vector<8x32xf32>
    %635 = arith.mulf %626, %592 : vector<8x32xf32>
    %636 = arith.mulf %620, %628 : vector<8x32xf32>
    %637 = arith.addf %635, %636 : vector<8x32xf32>
    %638 = math.tanh %637 : vector<8x32xf32>
    %639 = arith.mulf %634, %638 : vector<8x32xf32>
    %640 = vector.extract_strided_slice %614 {offsets = [0, 0], sizes = [8, 32], strides = [1, 1]} : vector<8x128xf32> to vector<8x32xf32>
    %641 = arith.negf %640 : vector<8x32xf32>
    %642 = math.exp %641 : vector<8x32xf32>
    %cst_128 = arith.constant 1.000000e+00 : f32
    %643 = vector.broadcast %cst_128 : f32 to vector<8x32xf32>
    %644 = arith.addf %643, %642 : vector<8x32xf32>
    %645 = arith.divf %643, %644 : vector<8x32xf32>
    %646 = vector.extract_strided_slice %614 {offsets = [0, 32], sizes = [8, 32], strides = [1, 1]} : vector<8x128xf32> to vector<8x32xf32>
    %647 = arith.negf %646 : vector<8x32xf32>
    %648 = math.exp %647 : vector<8x32xf32>
    %cst_129 = arith.constant 1.000000e+00 : f32
    %649 = vector.broadcast %cst_129 : f32 to vector<8x32xf32>
    %650 = arith.addf %649, %648 : vector<8x32xf32>
    %651 = arith.divf %649, %650 : vector<8x32xf32>
    %652 = vector.extract_strided_slice %614 {offsets = [0, 64], sizes = [8, 32], strides = [1, 1]} : vector<8x128xf32> to vector<8x32xf32>
    %653 = math.tanh %652 : vector<8x32xf32>
    %654 = vector.extract_strided_slice %614 {offsets = [0, 96], sizes = [8, 32], strides = [1, 1]} : vector<8x128xf32> to vector<8x32xf32>
    %655 = arith.negf %654 : vector<8x32xf32>
    %656 = math.exp %655 : vector<8x32xf32>
    %cst_130 = arith.constant 1.000000e+00 : f32
    %657 = vector.broadcast %cst_130 : f32 to vector<8x32xf32>
    %658 = arith.addf %657, %656 : vector<8x32xf32>
    %659 = arith.divf %657, %658 : vector<8x32xf32>
    %660 = arith.mulf %651, %598 : vector<8x32xf32>
    %661 = arith.mulf %645, %653 : vector<8x32xf32>
    %662 = arith.addf %660, %661 : vector<8x32xf32>
    %663 = math.tanh %662 : vector<8x32xf32>
    %664 = arith.mulf %659, %663 : vector<8x32xf32>
    %665 = vector.broadcast %c6_i32 : i32 to vector<8x1xi32>
    %666 = arith.cmpi sgt, %9, %665 : vector<8x1xi32>
    %667 = vector.broadcast %599 : i32 to vector<8x1xi32>
    %668 = arith.cmpi sgt, %9, %667 : vector<8x1xi32>
    %cst_131 = arith.constant 0.000000e+00 : f32
    %669 = vector.shape_cast %666 : vector<8x1xi1> to vector<8x1xi1>
    %670 = vector.broadcast %669 : vector<8x1xi1> to vector<8x32xi1>
    %671 = vector.broadcast %cst_131 : f32 to vector<8x32xf32>
    %672 = arith.select %670, %639, %671 : vector<8x32xi1>, vector<8x32xf32>
    %673 = arith.index_cast %c6_i32 : i32 to index
    %c0_132 = arith.constant 0 : index
    %c0_133 = arith.constant 0 : index
    %674 = vector.load %arg5[%673, %c0_132, %c0_133] : memref<8x8x64xf32, #tpu.memory_space<vmem>>, vector<1x8x32xf32>
    %675 = vector.shape_cast %674 : vector<1x8x32xf32> to vector<8x32xf32>
    %676 = vector.shape_cast %672 : vector<8x32xf32> to vector<1x8x32xf32>
    tpu.vector_store %arg5[%673, %c0_132, %c0_133], %676 {strides = array<i32>} : memref<8x8x64xf32, #tpu.memory_space<vmem>>, vector<1x8x32xf32>,
    %cst_134 = arith.constant 0.000000e+00 : f32
    %677 = vector.shape_cast %668 : vector<8x1xi1> to vector<8x1xi1>
    %678 = vector.broadcast %677 : vector<8x1xi1> to vector<8x32xi1>
    %679 = vector.broadcast %cst_134 : f32 to vector<8x32xf32>
    %680 = arith.select %678, %664, %679 : vector<8x32xi1>, vector<8x32xf32>
    %681 = arith.index_cast %599 : i32 to index
    %c0_135 = arith.constant 0 : index
    %c32_136 = arith.constant 32 : index
    %682 = vector.load %arg5[%681, %c0_135, %c32_136] : memref<8x8x64xf32, #tpu.memory_space<vmem>>, vector<1x8x32xf32>
    %683 = vector.shape_cast %682 : vector<1x8x32xf32> to vector<8x32xf32>
    %684 = vector.shape_cast %680 : vector<8x32xf32> to vector<1x8x32xf32>
    tpu.vector_store %arg5[%681, %c0_135, %c32_136], %684 {strides = array<i32>} : memref<8x8x64xf32, #tpu.memory_space<vmem>>, vector<1x8x32xf32>,
    %685 = vector.shape_cast %666 : vector<8x1xi1> to vector<8x1xi1>
    %686 = vector.broadcast %685 : vector<8x1xi1> to vector<8x32xi1>
    %687 = arith.select %686, %639, %589 : vector<8x32xi1>, vector<8x32xf32>
    %688 = vector.shape_cast %666 : vector<8x1xi1> to vector<8x1xi1>
    %689 = vector.broadcast %688 : vector<8x1xi1> to vector<8x32xi1>
    %690 = arith.select %689, %637, %592 : vector<8x32xi1>, vector<8x32xf32>
    %691 = vector.shape_cast %668 : vector<8x1xi1> to vector<8x1xi1>
    %692 = vector.broadcast %691 : vector<8x1xi1> to vector<8x32xi1>
    %693 = arith.select %692, %664, %595 : vector<8x32xi1>, vector<8x32xf32>
    %694 = vector.shape_cast %668 : vector<8x1xi1> to vector<8x1xi1>
    %695 = vector.broadcast %694 : vector<8x1xi1> to vector<8x32xi1>
    %696 = arith.select %695, %662, %598 : vector<8x32xi1>, vector<8x32xf32>
    %c7_i32_137 = arith.constant 7 : i32
    %c7_i32_138 = arith.constant 7 : i32
    %697 = arith.subi %c7_i32_138, %c7_i32_137 : i32
    %698 = tpu.concatenate %687, %693 in 1 : vector<8x32xf32>, vector<8x32xf32> -> vector<8x64xf32>
    %699 = arith.truncf %698 : vector<8x64xf32> to vector<8x64xbf16>
    %cst_139 = arith.constant dense<0.000000e+00> : vector<8x256xf32>
    %700 = tpu.matmul %699, %8, %cst_139 {dimension_numbers = #tpu.dot_dimension_numbers<[1], [0], [0], [1], [0, 0, 1, 1], [], []>} : vector<8x64xbf16>, vector<64x256xbf16>, vector<8x256xf32> -> vector<8x256xf32>
    %701 = arith.index_cast %c7_i32_137 : i32 to index
    %c0_140 = arith.constant 0 : index
    %c0_141 = arith.constant 0 : index
    %702 = vector.load %arg8[%701, %c0_140, %c0_141] : memref<8x8x256xf32, #tpu.memory_space<vmem>>, vector<1x8x256xf32>
    %703 = vector.shape_cast %702 : vector<1x8x256xf32> to vector<8x256xf32>
    %704 = vector.extract_strided_slice %703 {offsets = [0, 0], sizes = [8, 128], strides = [1, 1]} : vector<8x256xf32> to vector<8x128xf32>
    %705 = vector.extract_strided_slice %700 {offsets = [0, 0], sizes = [8, 128], strides = [1, 1]} : vector<8x256xf32> to vector<8x128xf32>
    %706 = arith.addf %704, %705 : vector<8x128xf32>
    %707 = arith.index_cast %697 : i32 to index
    %c0_142 = arith.constant 0 : index
    %c0_143 = arith.constant 0 : index
    %708 = vector.load %arg8[%707, %c0_142, %c0_143] : memref<8x8x256xf32, #tpu.memory_space<vmem>>, vector<1x8x256xf32>
    %709 = vector.shape_cast %708 : vector<1x8x256xf32> to vector<8x256xf32>
    %710 = vector.extract_strided_slice %709 {offsets = [0, 128], sizes = [8, 128], strides = [1, 1]} : vector<8x256xf32> to vector<8x128xf32>
    %711 = vector.extract_strided_slice %700 {offsets = [0, 128], sizes = [8, 128], strides = [1, 1]} : vector<8x256xf32> to vector<8x128xf32>
    %712 = arith.addf %710, %711 : vector<8x128xf32>
    %713 = vector.extract_strided_slice %706 {offsets = [0, 0], sizes = [8, 32], strides = [1, 1]} : vector<8x128xf32> to vector<8x32xf32>
    %714 = arith.negf %713 : vector<8x32xf32>
    %715 = math.exp %714 : vector<8x32xf32>
    %cst_144 = arith.constant 1.000000e+00 : f32
    %716 = vector.broadcast %cst_144 : f32 to vector<8x32xf32>
    %717 = arith.addf %716, %715 : vector<8x32xf32>
    %718 = arith.divf %716, %717 : vector<8x32xf32>
    %719 = vector.extract_strided_slice %706 {offsets = [0, 32], sizes = [8, 32], strides = [1, 1]} : vector<8x128xf32> to vector<8x32xf32>
    %720 = arith.negf %719 : vector<8x32xf32>
    %721 = math.exp %720 : vector<8x32xf32>
    %cst_145 = arith.constant 1.000000e+00 : f32
    %722 = vector.broadcast %cst_145 : f32 to vector<8x32xf32>
    %723 = arith.addf %722, %721 : vector<8x32xf32>
    %724 = arith.divf %722, %723 : vector<8x32xf32>
    %725 = vector.extract_strided_slice %706 {offsets = [0, 64], sizes = [8, 32], strides = [1, 1]} : vector<8x128xf32> to vector<8x32xf32>
    %726 = math.tanh %725 : vector<8x32xf32>
    %727 = vector.extract_strided_slice %706 {offsets = [0, 96], sizes = [8, 32], strides = [1, 1]} : vector<8x128xf32> to vector<8x32xf32>
    %728 = arith.negf %727 : vector<8x32xf32>
    %729 = math.exp %728 : vector<8x32xf32>
    %cst_146 = arith.constant 1.000000e+00 : f32
    %730 = vector.broadcast %cst_146 : f32 to vector<8x32xf32>
    %731 = arith.addf %730, %729 : vector<8x32xf32>
    %732 = arith.divf %730, %731 : vector<8x32xf32>
    %733 = arith.mulf %724, %690 : vector<8x32xf32>
    %734 = arith.mulf %718, %726 : vector<8x32xf32>
    %735 = arith.addf %733, %734 : vector<8x32xf32>
    %736 = math.tanh %735 : vector<8x32xf32>
    %737 = arith.mulf %732, %736 : vector<8x32xf32>
    %738 = vector.extract_strided_slice %712 {offsets = [0, 0], sizes = [8, 32], strides = [1, 1]} : vector<8x128xf32> to vector<8x32xf32>
    %739 = arith.negf %738 : vector<8x32xf32>
    %740 = math.exp %739 : vector<8x32xf32>
    %cst_147 = arith.constant 1.000000e+00 : f32
    %741 = vector.broadcast %cst_147 : f32 to vector<8x32xf32>
    %742 = arith.addf %741, %740 : vector<8x32xf32>
    %743 = arith.divf %741, %742 : vector<8x32xf32>
    %744 = vector.extract_strided_slice %712 {offsets = [0, 32], sizes = [8, 32], strides = [1, 1]} : vector<8x128xf32> to vector<8x32xf32>
    %745 = arith.negf %744 : vector<8x32xf32>
    %746 = math.exp %745 : vector<8x32xf32>
    %cst_148 = arith.constant 1.000000e+00 : f32
    %747 = vector.broadcast %cst_148 : f32 to vector<8x32xf32>
    %748 = arith.addf %747, %746 : vector<8x32xf32>
    %749 = arith.divf %747, %748 : vector<8x32xf32>
    %750 = vector.extract_strided_slice %712 {offsets = [0, 64], sizes = [8, 32], strides = [1, 1]} : vector<8x128xf32> to vector<8x32xf32>
    %751 = math.tanh %750 : vector<8x32xf32>
    %752 = vector.extract_strided_slice %712 {offsets = [0, 96], sizes = [8, 32], strides = [1, 1]} : vector<8x128xf32> to vector<8x32xf32>
    %753 = arith.negf %752 : vector<8x32xf32>
    %754 = math.exp %753 : vector<8x32xf32>
    %cst_149 = arith.constant 1.000000e+00 : f32
    %755 = vector.broadcast %cst_149 : f32 to vector<8x32xf32>
    %756 = arith.addf %755, %754 : vector<8x32xf32>
    %757 = arith.divf %755, %756 : vector<8x32xf32>
    %758 = arith.mulf %749, %696 : vector<8x32xf32>
    %759 = arith.mulf %743, %751 : vector<8x32xf32>
    %760 = arith.addf %758, %759 : vector<8x32xf32>
    %761 = math.tanh %760 : vector<8x32xf32>
    %762 = arith.mulf %757, %761 : vector<8x32xf32>
    %763 = vector.broadcast %c7_i32_137 : i32 to vector<8x1xi32>
    %764 = arith.cmpi sgt, %9, %763 : vector<8x1xi32>
    %765 = vector.broadcast %697 : i32 to vector<8x1xi32>
    %766 = arith.cmpi sgt, %9, %765 : vector<8x1xi32>
    %cst_150 = arith.constant 0.000000e+00 : f32
    %767 = vector.shape_cast %764 : vector<8x1xi1> to vector<8x1xi1>
    %768 = vector.broadcast %767 : vector<8x1xi1> to vector<8x32xi1>
    %769 = vector.broadcast %cst_150 : f32 to vector<8x32xf32>
    %770 = arith.select %768, %737, %769 : vector<8x32xi1>, vector<8x32xf32>
    %771 = arith.index_cast %c7_i32_137 : i32 to index
    %c0_151 = arith.constant 0 : index
    %c0_152 = arith.constant 0 : index
    %772 = vector.load %arg5[%771, %c0_151, %c0_152] : memref<8x8x64xf32, #tpu.memory_space<vmem>>, vector<1x8x32xf32>
    %773 = vector.shape_cast %772 : vector<1x8x32xf32> to vector<8x32xf32>
    %774 = vector.shape_cast %770 : vector<8x32xf32> to vector<1x8x32xf32>
    tpu.vector_store %arg5[%771, %c0_151, %c0_152], %774 {strides = array<i32>} : memref<8x8x64xf32, #tpu.memory_space<vmem>>, vector<1x8x32xf32>,
    %cst_153 = arith.constant 0.000000e+00 : f32
    %775 = vector.shape_cast %766 : vector<8x1xi1> to vector<8x1xi1>
    %776 = vector.broadcast %775 : vector<8x1xi1> to vector<8x32xi1>
    %777 = vector.broadcast %cst_153 : f32 to vector<8x32xf32>
    %778 = arith.select %776, %762, %777 : vector<8x32xi1>, vector<8x32xf32>
    %779 = arith.index_cast %697 : i32 to index
    %c0_154 = arith.constant 0 : index
    %c32_155 = arith.constant 32 : index
    %780 = vector.load %arg5[%779, %c0_154, %c32_155] : memref<8x8x64xf32, #tpu.memory_space<vmem>>, vector<1x8x32xf32>
    %781 = vector.shape_cast %780 : vector<1x8x32xf32> to vector<8x32xf32>
    %782 = vector.shape_cast %778 : vector<8x32xf32> to vector<1x8x32xf32>
    tpu.vector_store %arg5[%779, %c0_154, %c32_155], %782 {strides = array<i32>} : memref<8x8x64xf32, #tpu.memory_space<vmem>>, vector<1x8x32xf32>,
    %783 = vector.shape_cast %764 : vector<8x1xi1> to vector<8x1xi1>
    %784 = vector.broadcast %783 : vector<8x1xi1> to vector<8x32xi1>
    %785 = arith.select %784, %737, %687 : vector<8x32xi1>, vector<8x32xf32>
    %786 = vector.shape_cast %764 : vector<8x1xi1> to vector<8x1xi1>
    %787 = vector.broadcast %786 : vector<8x1xi1> to vector<8x32xi1>
    %788 = arith.select %787, %735, %690 : vector<8x32xi1>, vector<8x32xf32>
    %789 = vector.shape_cast %766 : vector<8x1xi1> to vector<8x1xi1>
    %790 = vector.broadcast %789 : vector<8x1xi1> to vector<8x32xi1>
    %791 = arith.select %790, %762, %693 : vector<8x32xi1>, vector<8x32xf32>
    %792 = vector.shape_cast %766 : vector<8x1xi1> to vector<8x1xi1>
    %793 = vector.broadcast %792 : vector<8x1xi1> to vector<8x32xi1>
    %794 = arith.select %793, %760, %696 : vector<8x32xi1>, vector<8x32xf32>
    %c8_i32 = arith.constant 8 : i32
    %795 = tpu.concatenate %785, %791 in 1 : vector<8x32xf32>, vector<8x32xf32> -> vector<8x64xf32>
    %c0_156 = arith.constant 0 : index
    %c0_157 = arith.constant 0 : index
    %796 = vector.load %arg6[%c0_156, %c0_157] : memref<8x64xf32, #tpu.memory_space<vmem>>, vector<8x64xf32>
    tpu.vector_store %arg6[%c0_156, %c0_157], %795 {strides = array<i32>} : memref<8x64xf32, #tpu.memory_space<vmem>>, vector<8x64xf32>,
    %797 = tpu.concatenate %788, %794 in 1 : vector<8x32xf32>, vector<8x32xf32> -> vector<8x64xf32>
    %c0_158 = arith.constant 0 : index
    %c0_159 = arith.constant 0 : index
    %798 = vector.load %arg7[%c0_158, %c0_159] : memref<8x64xf32, #tpu.memory_space<vmem>>, vector<8x64xf32>
    tpu.vector_store %arg7[%c0_158, %c0_159], %797 {strides = array<i32>} : memref<8x64xf32, #tpu.memory_space<vmem>>, vector<8x64xf32>,
    return
  }
}

module attributes {stable_mosaic.version = 11 : i64} {
  func.func @_bilstm_layer_kernel(%arg0: memref<8x1xi32, #tpu.memory_space<vmem>>, %arg1: memref<64x16xbf16, #tpu.memory_space<vmem>>, %arg2: memref<16x256xbf16, #tpu.memory_space<vmem>>, %arg3: memref<64x256xbf16, #tpu.memory_space<vmem>>, %arg4: memref<1x256xf32, #tpu.memory_space<vmem>>, %arg5: memref<8x8x64xf32, #tpu.memory_space<vmem>>, %arg6: memref<8x64xf32, #tpu.memory_space<vmem>>, %arg7: memref<8x64xf32, #tpu.memory_space<vmem>>, %arg8: memref<8x8x256xf32, #tpu.memory_space<vmem>>) attributes {dimension_semantics = [], scalar_prefetch = 0 : i64, scratch_operands = 1 : i64, tpu.core_type = #tpu.core_type<tc>} {
    %c0 = arith.constant 0 : index
    %c0_0 = arith.constant 0 : index
    %0 = vector.load %arg1[%c0, %c0_0] : memref<64x16xbf16, #tpu.memory_space<vmem>>, vector<64x16xbf16>
    %c0_1 = arith.constant 0 : index
    %c0_2 = arith.constant 0 : index
    %1 = vector.load %arg2[%c0_1, %c0_2] : memref<16x256xbf16, #tpu.memory_space<vmem>>, vector<16x256xbf16>
    %cst = arith.constant dense<0.000000e+00> : vector<64x256xf32>
    %2 = tpu.matmul %0, %1, %cst {dimension_numbers = #tpu.dot_dimension_numbers<[1], [0], [0], [1], [0, 0, 1, 1], [], []>} : vector<64x16xbf16>, vector<16x256xbf16>, vector<64x256xf32> -> vector<64x256xf32>
    %c0_3 = arith.constant 0 : index
    %c0_4 = arith.constant 0 : index
    %3 = vector.load %arg4[%c0_3, %c0_4] : memref<1x256xf32, #tpu.memory_space<vmem>>, vector<1x256xf32>
    %4 = vector.broadcast %3 : vector<1x256xf32> to vector<64x256xf32>
    %5 = arith.addf %2, %4 : vector<64x256xf32>
    %6 = vector.shape_cast %5 : vector<64x256xf32> to vector<8x8x256xf32>
    %c0_5 = arith.constant 0 : index
    %c0_6 = arith.constant 0 : index
    %c0_7 = arith.constant 0 : index
    %7 = vector.load %arg8[%c0_5, %c0_6, %c0_7] : memref<8x8x256xf32, #tpu.memory_space<vmem>>, vector<8x8x256xf32>
    tpu.vector_store %arg8[%c0_5, %c0_6, %c0_7], %6 {strides = array<i32>} : memref<8x8x256xf32, #tpu.memory_space<vmem>>, vector<8x8x256xf32>,
    %c0_8 = arith.constant 0 : index
    %c0_9 = arith.constant 0 : index
    %8 = vector.load %arg3[%c0_8, %c0_9] : memref<64x256xbf16, #tpu.memory_space<vmem>>, vector<64x256xbf16>
    %c0_10 = arith.constant 0 : index
    %c0_11 = arith.constant 0 : index
    %9 = vector.load %arg0[%c0_10, %c0_11] : memref<8x1xi32, #tpu.memory_space<vmem>>, vector<8x1xi32>
    %cst_12 = arith.constant 0.000000e+00 : f32
    %10 = vector.broadcast %cst_12 : f32 to vector<8x32xf32>
    %c0_i32 = arith.constant 0 : i32
    %c7_i32 = arith.constant 7 : i32
    %11 = arith.subi %c7_i32, %c0_i32 : i32
    %12 = tpu.concatenate %10, %10 in 1 : vector<8x32xf32>, vector<8x32xf32> -> vector<8x64xf32>
    %13 = arith.truncf %12 : vector<8x64xf32> to vector<8x64xbf16>
    %cst_13 = arith.constant dense<0.000000e+00> : vector<8x256xf32>
    %14 = tpu.matmul %13, %8, %cst_13 {dimension_numbers = #tpu.dot_dimension_numbers<[1], [0], [0], [1], [0, 0, 1, 1], [], []>} : vector<8x64xbf16>, vector<64x256xbf16>, vector<8x256xf32> -> vector<8x256xf32>
    %15 = arith.index_cast %c0_i32 : i32 to index
    %c0_14 = arith.constant 0 : index
    %c0_15 = arith.constant 0 : index
    %16 = vector.load %arg8[%15, %c0_14, %c0_15] : memref<8x8x256xf32, #tpu.memory_space<vmem>>, vector<1x8x256xf32>
    %17 = vector.shape_cast %16 : vector<1x8x256xf32> to vector<8x256xf32>
    %18 = vector.extract_strided_slice %17 {offsets = [0, 0], sizes = [8, 128], strides = [1, 1]} : vector<8x256xf32> to vector<8x128xf32>
    %19 = vector.extract_strided_slice %14 {offsets = [0, 0], sizes = [8, 128], strides = [1, 1]} : vector<8x256xf32> to vector<8x128xf32>
    %20 = arith.addf %18, %19 : vector<8x128xf32>
    %21 = arith.index_cast %11 : i32 to index
    %c0_16 = arith.constant 0 : index
    %c0_17 = arith.constant 0 : index
    %22 = vector.load %arg8[%21, %c0_16, %c0_17] : memref<8x8x256xf32, #tpu.memory_space<vmem>>, vector<1x8x256xf32>
    %23 = vector.shape_cast %22 : vector<1x8x256xf32> to vector<8x256xf32>
    %24 = vector.extract_strided_slice %23 {offsets = [0, 128], sizes = [8, 128], strides = [1, 1]} : vector<8x256xf32> to vector<8x128xf32>
    %25 = vector.extract_strided_slice %14 {offsets = [0, 128], sizes = [8, 128], strides = [1, 1]} : vector<8x256xf32> to vector<8x128xf32>
    %26 = arith.addf %24, %25 : vector<8x128xf32>
    %27 = vector.extract_strided_slice %20 {offsets = [0, 0], sizes = [8, 32], strides = [1, 1]} : vector<8x128xf32> to vector<8x32xf32>
    %28 = arith.negf %27 : vector<8x32xf32>
    %29 = math.exp %28 : vector<8x32xf32>
    %cst_18 = arith.constant 1.000000e+00 : f32
    %30 = vector.broadcast %cst_18 : f32 to vector<8x32xf32>
    %31 = arith.addf %30, %29 : vector<8x32xf32>
    %32 = arith.divf %30, %31 : vector<8x32xf32>
    %33 = vector.extract_strided_slice %20 {offsets = [0, 32], sizes = [8, 32], strides = [1, 1]} : vector<8x128xf32> to vector<8x32xf32>
    %34 = arith.negf %33 : vector<8x32xf32>
    %35 = math.exp %34 : vector<8x32xf32>
    %cst_19 = arith.constant 1.000000e+00 : f32
    %36 = vector.broadcast %cst_19 : f32 to vector<8x32xf32>
    %37 = arith.addf %36, %35 : vector<8x32xf32>
    %38 = arith.divf %36, %37 : vector<8x32xf32>
    %39 = vector.extract_strided_slice %20 {offsets = [0, 64], sizes = [8, 32], strides = [1, 1]} : vector<8x128xf32> to vector<8x32xf32>
    %40 = math.tanh %39 : vector<8x32xf32>
    %41 = vector.extract_strided_slice %20 {offsets = [0, 96], sizes = [8, 32], strides = [1, 1]} : vector<8x128xf32> to vector<8x32xf32>
    %42 = arith.negf %41 : vector<8x32xf32>
    %43 = math.exp %42 : vector<8x32xf32>
    %cst_20 = arith.constant 1.000000e+00 : f32
    %44 = vector.broadcast %cst_20 : f32 to vector<8x32xf32>
    %45 = arith.addf %44, %43 : vector<8x32xf32>
    %46 = arith.divf %44, %45 : vector<8x32xf32>
    %47 = arith.mulf %38, %10 : vector<8x32xf32>
    %48 = arith.mulf %32, %40 : vector<8x32xf32>
    %49 = arith.addf %47, %48 : vector<8x32xf32>
    %50 = math.tanh %49 : vector<8x32xf32>
    %51 = arith.mulf %46, %50 : vector<8x32xf32>
    %52 = vector.extract_strided_slice %26 {offsets = [0, 0], sizes = [8, 32], strides = [1, 1]} : vector<8x128xf32> to vector<8x32xf32>
    %53 = arith.negf %52 : vector<8x32xf32>
    %54 = math.exp %53 : vector<8x32xf32>
    %cst_21 = arith.constant 1.000000e+00 : f32
    %55 = vector.broadcast %cst_21 : f32 to vector<8x32xf32>
    %56 = arith.addf %55, %54 : vector<8x32xf32>
    %57 = arith.divf %55, %56 : vector<8x32xf32>
    %58 = vector.extract_strided_slice %26 {offsets = [0, 32], sizes = [8, 32], strides = [1, 1]} : vector<8x128xf32> to vector<8x32xf32>
    %59 = arith.negf %58 : vector<8x32xf32>
    %60 = math.exp %59 : vector<8x32xf32>
    %cst_22 = arith.constant 1.000000e+00 : f32
    %61 = vector.broadcast %cst_22 : f32 to vector<8x32xf32>
    %62 = arith.addf %61, %60 : vector<8x32xf32>
    %63 = arith.divf %61, %62 : vector<8x32xf32>
    %64 = vector.extract_strided_slice %26 {offsets = [0, 64], sizes = [8, 32], strides = [1, 1]} : vector<8x128xf32> to vector<8x32xf32>
    %65 = math.tanh %64 : vector<8x32xf32>
    %66 = vector.extract_strided_slice %26 {offsets = [0, 96], sizes = [8, 32], strides = [1, 1]} : vector<8x128xf32> to vector<8x32xf32>
    %67 = arith.negf %66 : vector<8x32xf32>
    %68 = math.exp %67 : vector<8x32xf32>
    %cst_23 = arith.constant 1.000000e+00 : f32
    %69 = vector.broadcast %cst_23 : f32 to vector<8x32xf32>
    %70 = arith.addf %69, %68 : vector<8x32xf32>
    %71 = arith.divf %69, %70 : vector<8x32xf32>
    %72 = arith.mulf %63, %10 : vector<8x32xf32>
    %73 = arith.mulf %57, %65 : vector<8x32xf32>
    %74 = arith.addf %72, %73 : vector<8x32xf32>
    %75 = math.tanh %74 : vector<8x32xf32>
    %76 = arith.mulf %71, %75 : vector<8x32xf32>
    %77 = vector.broadcast %c0_i32 : i32 to vector<8x1xi32>
    %78 = arith.cmpi sgt, %9, %77 : vector<8x1xi32>
    %79 = vector.broadcast %11 : i32 to vector<8x1xi32>
    %80 = arith.cmpi sgt, %9, %79 : vector<8x1xi32>
    %cst_24 = arith.constant 0.000000e+00 : f32
    %81 = vector.shape_cast %78 : vector<8x1xi1> to vector<8x1xi1>
    %82 = vector.broadcast %81 : vector<8x1xi1> to vector<8x32xi1>
    %83 = vector.broadcast %cst_24 : f32 to vector<8x32xf32>
    %84 = arith.select %82, %51, %83 : vector<8x32xi1>, vector<8x32xf32>
    %85 = arith.index_cast %c0_i32 : i32 to index
    %c0_25 = arith.constant 0 : index
    %c0_26 = arith.constant 0 : index
    %86 = vector.load %arg5[%85, %c0_25, %c0_26] : memref<8x8x64xf32, #tpu.memory_space<vmem>>, vector<1x8x32xf32>
    %87 = vector.shape_cast %86 : vector<1x8x32xf32> to vector<8x32xf32>
    %88 = vector.shape_cast %84 : vector<8x32xf32> to vector<1x8x32xf32>
    tpu.vector_store %arg5[%85, %c0_25, %c0_26], %88 {strides = array<i32>} : memref<8x8x64xf32, #tpu.memory_space<vmem>>, vector<1x8x32xf32>,
    %cst_27 = arith.constant 0.000000e+00 : f32
    %89 = vector.shape_cast %80 : vector<8x1xi1> to vector<8x1xi1>
    %90 = vector.broadcast %89 : vector<8x1xi1> to vector<8x32xi1>
    %91 = vector.broadcast %cst_27 : f32 to vector<8x32xf32>
    %92 = arith.select %90, %76, %91 : vector<8x32xi1>, vector<8x32xf32>
    %93 = arith.index_cast %11 : i32 to index
    %c0_28 = arith.constant 0 : index
    %c32 = arith.constant 32 : index
    %94 = vector.load %arg5[%93, %c0_28, %c32] : memref<8x8x64xf32, #tpu.memory_space<vmem>>, vector<1x8x32xf32>
    %95 = vector.shape_cast %94 : vector<1x8x32xf32> to vector<8x32xf32>
    %96 = vector.shape_cast %92 : vector<8x32xf32> to vector<1x8x32xf32>
    tpu.vector_store %arg5[%93, %c0_28, %c32], %96 {strides = array<i32>} : memref<8x8x64xf32, #tpu.memory_space<vmem>>, vector<1x8x32xf32>,
    %97 = vector.shape_cast %78 : vector<8x1xi1> to vector<8x1xi1>
    %98 = vector.broadcast %97 : vector<8x1xi1> to vector<8x32xi1>
    %99 = arith.select %98, %51, %10 : vector<8x32xi1>, vector<8x32xf32>
    %100 = vector.shape_cast %78 : vector<8x1xi1> to vector<8x1xi1>
    %101 = vector.broadcast %100 : vector<8x1xi1> to vector<8x32xi1>
    %102 = arith.select %101, %49, %10 : vector<8x32xi1>, vector<8x32xf32>
    %103 = vector.shape_cast %80 : vector<8x1xi1> to vector<8x1xi1>
    %104 = vector.broadcast %103 : vector<8x1xi1> to vector<8x32xi1>
    %105 = arith.select %104, %76, %10 : vector<8x32xi1>, vector<8x32xf32>
    %106 = vector.shape_cast %80 : vector<8x1xi1> to vector<8x1xi1>
    %107 = vector.broadcast %106 : vector<8x1xi1> to vector<8x32xi1>
    %108 = arith.select %107, %74, %10 : vector<8x32xi1>, vector<8x32xf32>
    %c1_i32 = arith.constant 1 : i32
    %c7_i32_29 = arith.constant 7 : i32
    %109 = arith.subi %c7_i32_29, %c1_i32 : i32
    %110 = tpu.concatenate %99, %105 in 1 : vector<8x32xf32>, vector<8x32xf32> -> vector<8x64xf32>
    %111 = arith.truncf %110 : vector<8x64xf32> to vector<8x64xbf16>
    %cst_30 = arith.constant dense<0.000000e+00> : vector<8x256xf32>
    %112 = tpu.matmul %111, %8, %cst_30 {dimension_numbers = #tpu.dot_dimension_numbers<[1], [0], [0], [1], [0, 0, 1, 1], [], []>} : vector<8x64xbf16>, vector<64x256xbf16>, vector<8x256xf32> -> vector<8x256xf32>
    %113 = arith.index_cast %c1_i32 : i32 to index
    %c0_31 = arith.constant 0 : index
    %c0_32 = arith.constant 0 : index
    %114 = vector.load %arg8[%113, %c0_31, %c0_32] : memref<8x8x256xf32, #tpu.memory_space<vmem>>, vector<1x8x256xf32>
    %115 = vector.shape_cast %114 : vector<1x8x256xf32> to vector<8x256xf32>
    %116 = vector.extract_strided_slice %115 {offsets = [0, 0], sizes = [8, 128], strides = [1, 1]} : vector<8x256xf32> to vector<8x128xf32>
    %117 = vector.extract_strided_slice %112 {offsets = [0, 0], sizes = [8, 128], strides = [1, 1]} : vector<8x256xf32> to vector<8x128xf32>
    %118 = arith.addf %116, %117 : vector<8x128xf32>
    %119 = arith.index_cast %109 : i32 to index
    %c0_33 = arith.constant 0 : index
    %c0_34 = arith.constant 0 : index
    %120 = vector.load %arg8[%119, %c0_33, %c0_34] : memref<8x8x256xf32, #tpu.memory_space<vmem>>, vector<1x8x256xf32>
    %121 = vector.shape_cast %120 : vector<1x8x256xf32> to vector<8x256xf32>
    %122 = vector.extract_strided_slice %121 {offsets = [0, 128], sizes = [8, 128], strides = [1, 1]} : vector<8x256xf32> to vector<8x128xf32>
    %123 = vector.extract_strided_slice %112 {offsets = [0, 128], sizes = [8, 128], strides = [1, 1]} : vector<8x256xf32> to vector<8x128xf32>
    %124 = arith.addf %122, %123 : vector<8x128xf32>
    %125 = vector.extract_strided_slice %118 {offsets = [0, 0], sizes = [8, 32], strides = [1, 1]} : vector<8x128xf32> to vector<8x32xf32>
    %126 = arith.negf %125 : vector<8x32xf32>
    %127 = math.exp %126 : vector<8x32xf32>
    %cst_35 = arith.constant 1.000000e+00 : f32
    %128 = vector.broadcast %cst_35 : f32 to vector<8x32xf32>
    %129 = arith.addf %128, %127 : vector<8x32xf32>
    %130 = arith.divf %128, %129 : vector<8x32xf32>
    %131 = vector.extract_strided_slice %118 {offsets = [0, 32], sizes = [8, 32], strides = [1, 1]} : vector<8x128xf32> to vector<8x32xf32>
    %132 = arith.negf %131 : vector<8x32xf32>
    %133 = math.exp %132 : vector<8x32xf32>
    %cst_36 = arith.constant 1.000000e+00 : f32
    %134 = vector.broadcast %cst_36 : f32 to vector<8x32xf32>
    %135 = arith.addf %134, %133 : vector<8x32xf32>
    %136 = arith.divf %134, %135 : vector<8x32xf32>
    %137 = vector.extract_strided_slice %118 {offsets = [0, 64], sizes = [8, 32], strides = [1, 1]} : vector<8x128xf32> to vector<8x32xf32>
    %138 = math.tanh %137 : vector<8x32xf32>
    %139 = vector.extract_strided_slice %118 {offsets = [0, 96], sizes = [8, 32], strides = [1, 1]} : vector<8x128xf32> to vector<8x32xf32>
    %140 = arith.negf %139 : vector<8x32xf32>
    %141 = math.exp %140 : vector<8x32xf32>
    %cst_37 = arith.constant 1.000000e+00 : f32
    %142 = vector.broadcast %cst_37 : f32 to vector<8x32xf32>
    %143 = arith.addf %142, %141 : vector<8x32xf32>
    %144 = arith.divf %142, %143 : vector<8x32xf32>
    %145 = arith.mulf %136, %102 : vector<8x32xf32>
    %146 = arith.mulf %130, %138 : vector<8x32xf32>
    %147 = arith.addf %145, %146 : vector<8x32xf32>
    %148 = math.tanh %147 : vector<8x32xf32>
    %149 = arith.mulf %144, %148 : vector<8x32xf32>
    %150 = vector.extract_strided_slice %124 {offsets = [0, 0], sizes = [8, 32], strides = [1, 1]} : vector<8x128xf32> to vector<8x32xf32>
    %151 = arith.negf %150 : vector<8x32xf32>
    %152 = math.exp %151 : vector<8x32xf32>
    %cst_38 = arith.constant 1.000000e+00 : f32
    %153 = vector.broadcast %cst_38 : f32 to vector<8x32xf32>
    %154 = arith.addf %153, %152 : vector<8x32xf32>
    %155 = arith.divf %153, %154 : vector<8x32xf32>
    %156 = vector.extract_strided_slice %124 {offsets = [0, 32], sizes = [8, 32], strides = [1, 1]} : vector<8x128xf32> to vector<8x32xf32>
    %157 = arith.negf %156 : vector<8x32xf32>
    %158 = math.exp %157 : vector<8x32xf32>
    %cst_39 = arith.constant 1.000000e+00 : f32
    %159 = vector.broadcast %cst_39 : f32 to vector<8x32xf32>
    %160 = arith.addf %159, %158 : vector<8x32xf32>
    %161 = arith.divf %159, %160 : vector<8x32xf32>
    %162 = vector.extract_strided_slice %124 {offsets = [0, 64], sizes = [8, 32], strides = [1, 1]} : vector<8x128xf32> to vector<8x32xf32>
    %163 = math.tanh %162 : vector<8x32xf32>
    %164 = vector.extract_strided_slice %124 {offsets = [0, 96], sizes = [8, 32], strides = [1, 1]} : vector<8x128xf32> to vector<8x32xf32>
    %165 = arith.negf %164 : vector<8x32xf32>
    %166 = math.exp %165 : vector<8x32xf32>
    %cst_40 = arith.constant 1.000000e+00 : f32
    %167 = vector.broadcast %cst_40 : f32 to vector<8x32xf32>
    %168 = arith.addf %167, %166 : vector<8x32xf32>
    %169 = arith.divf %167, %168 : vector<8x32xf32>
    %170 = arith.mulf %161, %108 : vector<8x32xf32>
    %171 = arith.mulf %155, %163 : vector<8x32xf32>
    %172 = arith.addf %170, %171 : vector<8x32xf32>
    %173 = math.tanh %172 : vector<8x32xf32>
    %174 = arith.mulf %169, %173 : vector<8x32xf32>
    %175 = vector.broadcast %c1_i32 : i32 to vector<8x1xi32>
    %176 = arith.cmpi sgt, %9, %175 : vector<8x1xi32>
    %177 = vector.broadcast %109 : i32 to vector<8x1xi32>
    %178 = arith.cmpi sgt, %9, %177 : vector<8x1xi32>
    %cst_41 = arith.constant 0.000000e+00 : f32
    %179 = vector.shape_cast %176 : vector<8x1xi1> to vector<8x1xi1>
    %180 = vector.broadcast %179 : vector<8x1xi1> to vector<8x32xi1>
    %181 = vector.broadcast %cst_41 : f32 to vector<8x32xf32>
    %182 = arith.select %180, %149, %181 : vector<8x32xi1>, vector<8x32xf32>
    %183 = arith.index_cast %c1_i32 : i32 to index
    %c0_42 = arith.constant 0 : index
    %c0_43 = arith.constant 0 : index
    %184 = vector.load %arg5[%183, %c0_42, %c0_43] : memref<8x8x64xf32, #tpu.memory_space<vmem>>, vector<1x8x32xf32>
    %185 = vector.shape_cast %184 : vector<1x8x32xf32> to vector<8x32xf32>
    %186 = vector.shape_cast %182 : vector<8x32xf32> to vector<1x8x32xf32>
    tpu.vector_store %arg5[%183, %c0_42, %c0_43], %186 {strides = array<i32>} : memref<8x8x64xf32, #tpu.memory_space<vmem>>, vector<1x8x32xf32>,
    %cst_44 = arith.constant 0.000000e+00 : f32
    %187 = vector.shape_cast %178 : vector<8x1xi1> to vector<8x1xi1>
    %188 = vector.broadcast %187 : vector<8x1xi1> to vector<8x32xi1>
    %189 = vector.broadcast %cst_44 : f32 to vector<8x32xf32>
    %190 = arith.select %188, %174, %189 : vector<8x32xi1>, vector<8x32xf32>
    %191 = arith.index_cast %109 : i32 to index
    %c0_45 = arith.constant 0 : index
    %c32_46 = arith.constant 32 : index
    %192 = vector.load %arg5[%191, %c0_45, %c32_46] : memref<8x8x64xf32, #tpu.memory_space<vmem>>, vector<1x8x32xf32>
    %193 = vector.shape_cast %192 : vector<1x8x32xf32> to vector<8x32xf32>
    %194 = vector.shape_cast %190 : vector<8x32xf32> to vector<1x8x32xf32>
    tpu.vector_store %arg5[%191, %c0_45, %c32_46], %194 {strides = array<i32>} : memref<8x8x64xf32, #tpu.memory_space<vmem>>, vector<1x8x32xf32>,
    %195 = vector.shape_cast %176 : vector<8x1xi1> to vector<8x1xi1>
    %196 = vector.broadcast %195 : vector<8x1xi1> to vector<8x32xi1>
    %197 = arith.select %196, %149, %99 : vector<8x32xi1>, vector<8x32xf32>
    %198 = vector.shape_cast %176 : vector<8x1xi1> to vector<8x1xi1>
    %199 = vector.broadcast %198 : vector<8x1xi1> to vector<8x32xi1>
    %200 = arith.select %199, %147, %102 : vector<8x32xi1>, vector<8x32xf32>
    %201 = vector.shape_cast %178 : vector<8x1xi1> to vector<8x1xi1>
    %202 = vector.broadcast %201 : vector<8x1xi1> to vector<8x32xi1>
    %203 = arith.select %202, %174, %105 : vector<8x32xi1>, vector<8x32xf32>
    %204 = vector.shape_cast %178 : vector<8x1xi1> to vector<8x1xi1>
    %205 = vector.broadcast %204 : vector<8x1xi1> to vector<8x32xi1>
    %206 = arith.select %205, %172, %108 : vector<8x32xi1>, vector<8x32xf32>
    %c2_i32 = arith.constant 2 : i32
    %c7_i32_47 = arith.constant 7 : i32
    %207 = arith.subi %c7_i32_47, %c2_i32 : i32
    %208 = tpu.concatenate %197, %203 in 1 : vector<8x32xf32>, vector<8x32xf32> -> vector<8x64xf32>
    %209 = arith.truncf %208 : vector<8x64xf32> to vector<8x64xbf16>
    %cst_48 = arith.constant dense<0.000000e+00> : vector<8x256xf32>
    %210 = tpu.matmul %209, %8, %cst_48 {dimension_numbers = #tpu.dot_dimension_numbers<[1], [0], [0], [1], [0, 0, 1, 1], [], []>} : vector<8x64xbf16>, vector<64x256xbf16>, vector<8x256xf32> -> vector<8x256xf32>
    %211 = arith.index_cast %c2_i32 : i32 to index
    %c0_49 = arith.constant 0 : index
    %c0_50 = arith.constant 0 : index
    %212 = vector.load %arg8[%211, %c0_49, %c0_50] : memref<8x8x256xf32, #tpu.memory_space<vmem>>, vector<1x8x256xf32>
    %213 = vector.shape_cast %212 : vector<1x8x256xf32> to vector<8x256xf32>
    %214 = vector.extract_strided_slice %213 {offsets = [0, 0], sizes = [8, 128], strides = [1, 1]} : vector<8x256xf32> to vector<8x128xf32>
    %215 = vector.extract_strided_slice %210 {offsets = [0, 0], sizes = [8, 128], strides = [1, 1]} : vector<8x256xf32> to vector<8x128xf32>
    %216 = arith.addf %214, %215 : vector<8x128xf32>
    %217 = arith.index_cast %207 : i32 to index
    %c0_51 = arith.constant 0 : index
    %c0_52 = arith.constant 0 : index
    %218 = vector.load %arg8[%217, %c0_51, %c0_52] : memref<8x8x256xf32, #tpu.memory_space<vmem>>, vector<1x8x256xf32>
    %219 = vector.shape_cast %218 : vector<1x8x256xf32> to vector<8x256xf32>
    %220 = vector.extract_strided_slice %219 {offsets = [0, 128], sizes = [8, 128], strides = [1, 1]} : vector<8x256xf32> to vector<8x128xf32>
    %221 = vector.extract_strided_slice %210 {offsets = [0, 128], sizes = [8, 128], strides = [1, 1]} : vector<8x256xf32> to vector<8x128xf32>
    %222 = arith.addf %220, %221 : vector<8x128xf32>
    %223 = vector.extract_strided_slice %216 {offsets = [0, 0], sizes = [8, 32], strides = [1, 1]} : vector<8x128xf32> to vector<8x32xf32>
    %224 = arith.negf %223 : vector<8x32xf32>
    %225 = math.exp %224 : vector<8x32xf32>
    %cst_53 = arith.constant 1.000000e+00 : f32
    %226 = vector.broadcast %cst_53 : f32 to vector<8x32xf32>
    %227 = arith.addf %226, %225 : vector<8x32xf32>
    %228 = arith.divf %226, %227 : vector<8x32xf32>
    %229 = vector.extract_strided_slice %216 {offsets = [0, 32], sizes = [8, 32], strides = [1, 1]} : vector<8x128xf32> to vector<8x32xf32>
    %230 = arith.negf %229 : vector<8x32xf32>
    %231 = math.exp %230 : vector<8x32xf32>
    %cst_54 = arith.constant 1.000000e+00 : f32
    %232 = vector.broadcast %cst_54 : f32 to vector<8x32xf32>
    %233 = arith.addf %232, %231 : vector<8x32xf32>
    %234 = arith.divf %232, %233 : vector<8x32xf32>
    %235 = vector.extract_strided_slice %216 {offsets = [0, 64], sizes = [8, 32], strides = [1, 1]} : vector<8x128xf32> to vector<8x32xf32>
    %236 = math.tanh %235 : vector<8x32xf32>
    %237 = vector.extract_strided_slice %216 {offsets = [0, 96], sizes = [8, 32], strides = [1, 1]} : vector<8x128xf32> to vector<8x32xf32>
    %238 = arith.negf %237 : vector<8x32xf32>
    %239 = math.exp %238 : vector<8x32xf32>
    %cst_55 = arith.constant 1.000000e+00 : f32
    %240 = vector.broadcast %cst_55 : f32 to vector<8x32xf32>
    %241 = arith.addf %240, %239 : vector<8x32xf32>
    %242 = arith.divf %240, %241 : vector<8x32xf32>
    %243 = arith.mulf %234, %200 : vector<8x32xf32>
    %244 = arith.mulf %228, %236 : vector<8x32xf32>
    %245 = arith.addf %243, %244 : vector<8x32xf32>
    %246 = math.tanh %245 : vector<8x32xf32>
    %247 = arith.mulf %242, %246 : vector<8x32xf32>
    %248 = vector.extract_strided_slice %222 {offsets = [0, 0], sizes = [8, 32], strides = [1, 1]} : vector<8x128xf32> to vector<8x32xf32>
    %249 = arith.negf %248 : vector<8x32xf32>
    %250 = math.exp %249 : vector<8x32xf32>
    %cst_56 = arith.constant 1.000000e+00 : f32
    %251 = vector.broadcast %cst_56 : f32 to vector<8x32xf32>
    %252 = arith.addf %251, %250 : vector<8x32xf32>
    %253 = arith.divf %251, %252 : vector<8x32xf32>
    %254 = vector.extract_strided_slice %222 {offsets = [0, 32], sizes = [8, 32], strides = [1, 1]} : vector<8x128xf32> to vector<8x32xf32>
    %255 = arith.negf %254 : vector<8x32xf32>
    %256 = math.exp %255 : vector<8x32xf32>
    %cst_57 = arith.constant 1.000000e+00 : f32
    %257 = vector.broadcast %cst_57 : f32 to vector<8x32xf32>
    %258 = arith.addf %257, %256 : vector<8x32xf32>
    %259 = arith.divf %257, %258 : vector<8x32xf32>
    %260 = vector.extract_strided_slice %222 {offsets = [0, 64], sizes = [8, 32], strides = [1, 1]} : vector<8x128xf32> to vector<8x32xf32>
    %261 = math.tanh %260 : vector<8x32xf32>
    %262 = vector.extract_strided_slice %222 {offsets = [0, 96], sizes = [8, 32], strides = [1, 1]} : vector<8x128xf32> to vector<8x32xf32>
    %263 = arith.negf %262 : vector<8x32xf32>
    %264 = math.exp %263 : vector<8x32xf32>
    %cst_58 = arith.constant 1.000000e+00 : f32
    %265 = vector.broadcast %cst_58 : f32 to vector<8x32xf32>
    %266 = arith.addf %265, %264 : vector<8x32xf32>
    %267 = arith.divf %265, %266 : vector<8x32xf32>
    %268 = arith.mulf %259, %206 : vector<8x32xf32>
    %269 = arith.mulf %253, %261 : vector<8x32xf32>
    %270 = arith.addf %268, %269 : vector<8x32xf32>
    %271 = math.tanh %270 : vector<8x32xf32>
    %272 = arith.mulf %267, %271 : vector<8x32xf32>
    %273 = vector.broadcast %c2_i32 : i32 to vector<8x1xi32>
    %274 = arith.cmpi sgt, %9, %273 : vector<8x1xi32>
    %275 = vector.broadcast %207 : i32 to vector<8x1xi32>
    %276 = arith.cmpi sgt, %9, %275 : vector<8x1xi32>
    %cst_59 = arith.constant 0.000000e+00 : f32
    %277 = vector.shape_cast %274 : vector<8x1xi1> to vector<8x1xi1>
    %278 = vector.broadcast %277 : vector<8x1xi1> to vector<8x32xi1>
    %279 = vector.broadcast %cst_59 : f32 to vector<8x32xf32>
    %280 = arith.select %278, %247, %279 : vector<8x32xi1>, vector<8x32xf32>
    %281 = arith.index_cast %c2_i32 : i32 to index
    %c0_60 = arith.constant 0 : index
    %c0_61 = arith.constant 0 : index
    %282 = vector.load %arg5[%281, %c0_60, %c0_61] : memref<8x8x64xf32, #tpu.memory_space<vmem>>, vector<1x8x32xf32>
    %283 = vector.shape_cast %282 : vector<1x8x32xf32> to vector<8x32xf32>
    %284 = vector.shape_cast %280 : vector<8x32xf32> to vector<1x8x32xf32>
    tpu.vector_store %arg5[%281, %c0_60, %c0_61], %284 {strides = array<i32>} : memref<8x8x64xf32, #tpu.memory_space<vmem>>, vector<1x8x32xf32>,
    %cst_62 = arith.constant 0.000000e+00 : f32
    %285 = vector.shape_cast %276 : vector<8x1xi1> to vector<8x1xi1>
    %286 = vector.broadcast %285 : vector<8x1xi1> to vector<8x32xi1>
    %287 = vector.broadcast %cst_62 : f32 to vector<8x32xf32>
    %288 = arith.select %286, %272, %287 : vector<8x32xi1>, vector<8x32xf32>
    %289 = arith.index_cast %207 : i32 to index
    %c0_63 = arith.constant 0 : index
    %c32_64 = arith.constant 32 : index
    %290 = vector.load %arg5[%289, %c0_63, %c32_64] : memref<8x8x64xf32, #tpu.memory_space<vmem>>, vector<1x8x32xf32>
    %291 = vector.shape_cast %290 : vector<1x8x32xf32> to vector<8x32xf32>
    %292 = vector.shape_cast %288 : vector<8x32xf32> to vector<1x8x32xf32>
    tpu.vector_store %arg5[%289, %c0_63, %c32_64], %292 {strides = array<i32>} : memref<8x8x64xf32, #tpu.memory_space<vmem>>, vector<1x8x32xf32>,
    %293 = vector.shape_cast %274 : vector<8x1xi1> to vector<8x1xi1>
    %294 = vector.broadcast %293 : vector<8x1xi1> to vector<8x32xi1>
    %295 = arith.select %294, %247, %197 : vector<8x32xi1>, vector<8x32xf32>
    %296 = vector.shape_cast %274 : vector<8x1xi1> to vector<8x1xi1>
    %297 = vector.broadcast %296 : vector<8x1xi1> to vector<8x32xi1>
    %298 = arith.select %297, %245, %200 : vector<8x32xi1>, vector<8x32xf32>
    %299 = vector.shape_cast %276 : vector<8x1xi1> to vector<8x1xi1>
    %300 = vector.broadcast %299 : vector<8x1xi1> to vector<8x32xi1>
    %301 = arith.select %300, %272, %203 : vector<8x32xi1>, vector<8x32xf32>
    %302 = vector.shape_cast %276 : vector<8x1xi1> to vector<8x1xi1>
    %303 = vector.broadcast %302 : vector<8x1xi1> to vector<8x32xi1>
    %304 = arith.select %303, %270, %206 : vector<8x32xi1>, vector<8x32xf32>
    %c3_i32 = arith.constant 3 : i32
    %c7_i32_65 = arith.constant 7 : i32
    %305 = arith.subi %c7_i32_65, %c3_i32 : i32
    %306 = tpu.concatenate %295, %301 in 1 : vector<8x32xf32>, vector<8x32xf32> -> vector<8x64xf32>
    %307 = arith.truncf %306 : vector<8x64xf32> to vector<8x64xbf16>
    %cst_66 = arith.constant dense<0.000000e+00> : vector<8x256xf32>
    %308 = tpu.matmul %307, %8, %cst_66 {dimension_numbers = #tpu.dot_dimension_numbers<[1], [0], [0], [1], [0, 0, 1, 1], [], []>} : vector<8x64xbf16>, vector<64x256xbf16>, vector<8x256xf32> -> vector<8x256xf32>
    %309 = arith.index_cast %c3_i32 : i32 to index
    %c0_67 = arith.constant 0 : index
    %c0_68 = arith.constant 0 : index
    %310 = vector.load %arg8[%309, %c0_67, %c0_68] : memref<8x8x256xf32, #tpu.memory_space<vmem>>, vector<1x8x256xf32>
    %311 = vector.shape_cast %310 : vector<1x8x256xf32> to vector<8x256xf32>
    %312 = vector.extract_strided_slice %311 {offsets = [0, 0], sizes = [8, 128], strides = [1, 1]} : vector<8x256xf32> to vector<8x128xf32>
    %313 = vector.extract_strided_slice %308 {offsets = [0, 0], sizes = [8, 128], strides = [1, 1]} : vector<8x256xf32> to vector<8x128xf32>
    %314 = arith.addf %312, %313 : vector<8x128xf32>
    %315 = arith.index_cast %305 : i32 to index
    %c0_69 = arith.constant 0 : index
    %c0_70 = arith.constant 0 : index
    %316 = vector.load %arg8[%315, %c0_69, %c0_70] : memref<8x8x256xf32, #tpu.memory_space<vmem>>, vector<1x8x256xf32>
    %317 = vector.shape_cast %316 : vector<1x8x256xf32> to vector<8x256xf32>
    %318 = vector.extract_strided_slice %317 {offsets = [0, 128], sizes = [8, 128], strides = [1, 1]} : vector<8x256xf32> to vector<8x128xf32>
    %319 = vector.extract_strided_slice %308 {offsets = [0, 128], sizes = [8, 128], strides = [1, 1]} : vector<8x256xf32> to vector<8x128xf32>
    %320 = arith.addf %318, %319 : vector<8x128xf32>
    %321 = vector.extract_strided_slice %314 {offsets = [0, 0], sizes = [8, 32], strides = [1, 1]} : vector<8x128xf32> to vector<8x32xf32>
    %322 = arith.negf %321 : vector<8x32xf32>
    %323 = math.exp %322 : vector<8x32xf32>
    %cst_71 = arith.constant 1.000000e+00 : f32
    %324 = vector.broadcast %cst_71 : f32 to vector<8x32xf32>
    %325 = arith.addf %324, %323 : vector<8x32xf32>
    %326 = arith.divf %324, %325 : vector<8x32xf32>
    %327 = vector.extract_strided_slice %314 {offsets = [0, 32], sizes = [8, 32], strides = [1, 1]} : vector<8x128xf32> to vector<8x32xf32>
    %328 = arith.negf %327 : vector<8x32xf32>
    %329 = math.exp %328 : vector<8x32xf32>
    %cst_72 = arith.constant 1.000000e+00 : f32
    %330 = vector.broadcast %cst_72 : f32 to vector<8x32xf32>
    %331 = arith.addf %330, %329 : vector<8x32xf32>
    %332 = arith.divf %330, %331 : vector<8x32xf32>
    %333 = vector.extract_strided_slice %314 {offsets = [0, 64], sizes = [8, 32], strides = [1, 1]} : vector<8x128xf32> to vector<8x32xf32>
    %334 = math.tanh %333 : vector<8x32xf32>
    %335 = vector.extract_strided_slice %314 {offsets = [0, 96], sizes = [8, 32], strides = [1, 1]} : vector<8x128xf32> to vector<8x32xf32>
    %336 = arith.negf %335 : vector<8x32xf32>
    %337 = math.exp %336 : vector<8x32xf32>
    %cst_73 = arith.constant 1.000000e+00 : f32
    %338 = vector.broadcast %cst_73 : f32 to vector<8x32xf32>
    %339 = arith.addf %338, %337 : vector<8x32xf32>
    %340 = arith.divf %338, %339 : vector<8x32xf32>
    %341 = arith.mulf %332, %298 : vector<8x32xf32>
    %342 = arith.mulf %326, %334 : vector<8x32xf32>
    %343 = arith.addf %341, %342 : vector<8x32xf32>
    %344 = math.tanh %343 : vector<8x32xf32>
    %345 = arith.mulf %340, %344 : vector<8x32xf32>
    %346 = vector.extract_strided_slice %320 {offsets = [0, 0], sizes = [8, 32], strides = [1, 1]} : vector<8x128xf32> to vector<8x32xf32>
    %347 = arith.negf %346 : vector<8x32xf32>
    %348 = math.exp %347 : vector<8x32xf32>
    %cst_74 = arith.constant 1.000000e+00 : f32
    %349 = vector.broadcast %cst_74 : f32 to vector<8x32xf32>
    %350 = arith.addf %349, %348 : vector<8x32xf32>
    %351 = arith.divf %349, %350 : vector<8x32xf32>
    %352 = vector.extract_strided_slice %320 {offsets = [0, 32], sizes = [8, 32], strides = [1, 1]} : vector<8x128xf32> to vector<8x32xf32>
    %353 = arith.negf %352 : vector<8x32xf32>
    %354 = math.exp %353 : vector<8x32xf32>
    %cst_75 = arith.constant 1.000000e+00 : f32
    %355 = vector.broadcast %cst_75 : f32 to vector<8x32xf32>
    %356 = arith.addf %355, %354 : vector<8x32xf32>
    %357 = arith.divf %355, %356 : vector<8x32xf32>
    %358 = vector.extract_strided_slice %320 {offsets = [0, 64], sizes = [8, 32], strides = [1, 1]} : vector<8x128xf32> to vector<8x32xf32>
    %359 = math.tanh %358 : vector<8x32xf32>
    %360 = vector.extract_strided_slice %320 {offsets = [0, 96], sizes = [8, 32], strides = [1, 1]} : vector<8x128xf32> to vector<8x32xf32>
    %361 = arith.negf %360 : vector<8x32xf32>
    %362 = math.exp %361 : vector<8x32xf32>
    %cst_76 = arith.constant 1.000000e+00 : f32
    %363 = vector.broadcast %cst_76 : f32 to vector<8x32xf32>
    %364 = arith.addf %363, %362 : vector<8x32xf32>
    %365 = arith.divf %363, %364 : vector<8x32xf32>
    %366 = arith.mulf %357, %304 : vector<8x32xf32>
    %367 = arith.mulf %351, %359 : vector<8x32xf32>
    %368 = arith.addf %366, %367 : vector<8x32xf32>
    %369 = math.tanh %368 : vector<8x32xf32>
    %370 = arith.mulf %365, %369 : vector<8x32xf32>
    %371 = vector.broadcast %c3_i32 : i32 to vector<8x1xi32>
    %372 = arith.cmpi sgt, %9, %371 : vector<8x1xi32>
    %373 = vector.broadcast %305 : i32 to vector<8x1xi32>
    %374 = arith.cmpi sgt, %9, %373 : vector<8x1xi32>
    %cst_77 = arith.constant 0.000000e+00 : f32
    %375 = vector.shape_cast %372 : vector<8x1xi1> to vector<8x1xi1>
    %376 = vector.broadcast %375 : vector<8x1xi1> to vector<8x32xi1>
    %377 = vector.broadcast %cst_77 : f32 to vector<8x32xf32>
    %378 = arith.select %376, %345, %377 : vector<8x32xi1>, vector<8x32xf32>
    %379 = arith.index_cast %c3_i32 : i32 to index
    %c0_78 = arith.constant 0 : index
    %c0_79 = arith.constant 0 : index
    %380 = vector.load %arg5[%379, %c0_78, %c0_79] : memref<8x8x64xf32, #tpu.memory_space<vmem>>, vector<1x8x32xf32>
    %381 = vector.shape_cast %380 : vector<1x8x32xf32> to vector<8x32xf32>
    %382 = vector.shape_cast %378 : vector<8x32xf32> to vector<1x8x32xf32>
    tpu.vector_store %arg5[%379, %c0_78, %c0_79], %382 {strides = array<i32>} : memref<8x8x64xf32, #tpu.memory_space<vmem>>, vector<1x8x32xf32>,
    %cst_80 = arith.constant 0.000000e+00 : f32
    %383 = vector.shape_cast %374 : vector<8x1xi1> to vector<8x1xi1>
    %384 = vector.broadcast %383 : vector<8x1xi1> to vector<8x32xi1>
    %385 = vector.broadcast %cst_80 : f32 to vector<8x32xf32>
    %386 = arith.select %384, %370, %385 : vector<8x32xi1>, vector<8x32xf32>
    %387 = arith.index_cast %305 : i32 to index
    %c0_81 = arith.constant 0 : index
    %c32_82 = arith.constant 32 : index
    %388 = vector.load %arg5[%387, %c0_81, %c32_82] : memref<8x8x64xf32, #tpu.memory_space<vmem>>, vector<1x8x32xf32>
    %389 = vector.shape_cast %388 : vector<1x8x32xf32> to vector<8x32xf32>
    %390 = vector.shape_cast %386 : vector<8x32xf32> to vector<1x8x32xf32>
    tpu.vector_store %arg5[%387, %c0_81, %c32_82], %390 {strides = array<i32>} : memref<8x8x64xf32, #tpu.memory_space<vmem>>, vector<1x8x32xf32>,
    %391 = vector.shape_cast %372 : vector<8x1xi1> to vector<8x1xi1>
    %392 = vector.broadcast %391 : vector<8x1xi1> to vector<8x32xi1>
    %393 = arith.select %392, %345, %295 : vector<8x32xi1>, vector<8x32xf32>
    %394 = vector.shape_cast %372 : vector<8x1xi1> to vector<8x1xi1>
    %395 = vector.broadcast %394 : vector<8x1xi1> to vector<8x32xi1>
    %396 = arith.select %395, %343, %298 : vector<8x32xi1>, vector<8x32xf32>
    %397 = vector.shape_cast %374 : vector<8x1xi1> to vector<8x1xi1>
    %398 = vector.broadcast %397 : vector<8x1xi1> to vector<8x32xi1>
    %399 = arith.select %398, %370, %301 : vector<8x32xi1>, vector<8x32xf32>
    %400 = vector.shape_cast %374 : vector<8x1xi1> to vector<8x1xi1>
    %401 = vector.broadcast %400 : vector<8x1xi1> to vector<8x32xi1>
    %402 = arith.select %401, %368, %304 : vector<8x32xi1>, vector<8x32xf32>
    %c4_i32 = arith.constant 4 : i32
    %c7_i32_83 = arith.constant 7 : i32
    %403 = arith.subi %c7_i32_83, %c4_i32 : i32
    %404 = tpu.concatenate %393, %399 in 1 : vector<8x32xf32>, vector<8x32xf32> -> vector<8x64xf32>
    %405 = arith.truncf %404 : vector<8x64xf32> to vector<8x64xbf16>
    %cst_84 = arith.constant dense<0.000000e+00> : vector<8x256xf32>
    %406 = tpu.matmul %405, %8, %cst_84 {dimension_numbers = #tpu.dot_dimension_numbers<[1], [0], [0], [1], [0, 0, 1, 1], [], []>} : vector<8x64xbf16>, vector<64x256xbf16>, vector<8x256xf32> -> vector<8x256xf32>
    %407 = arith.index_cast %c4_i32 : i32 to index
    %c0_85 = arith.constant 0 : index
    %c0_86 = arith.constant 0 : index
    %408 = vector.load %arg8[%407, %c0_85, %c0_86] : memref<8x8x256xf32, #tpu.memory_space<vmem>>, vector<1x8x256xf32>
    %409 = vector.shape_cast %408 : vector<1x8x256xf32> to vector<8x256xf32>
    %410 = vector.extract_strided_slice %409 {offsets = [0, 0], sizes = [8, 128], strides = [1, 1]} : vector<8x256xf32> to vector<8x128xf32>
    %411 = vector.extract_strided_slice %406 {offsets = [0, 0], sizes = [8, 128], strides = [1, 1]} : vector<8x256xf32> to vector<8x128xf32>
    %412 = arith.addf %410, %411 : vector<8x128xf32>
    %413 = arith.index_cast %403 : i32 to index
    %c0_87 = arith.constant 0 : index
    %c0_88 = arith.constant 0 : index
    %414 = vector.load %arg8[%413, %c0_87, %c0_88] : memref<8x8x256xf32, #tpu.memory_space<vmem>>, vector<1x8x256xf32>
    %415 = vector.shape_cast %414 : vector<1x8x256xf32> to vector<8x256xf32>
    %416 = vector.extract_strided_slice %415 {offsets = [0, 128], sizes = [8, 128], strides = [1, 1]} : vector<8x256xf32> to vector<8x128xf32>
    %417 = vector.extract_strided_slice %406 {offsets = [0, 128], sizes = [8, 128], strides = [1, 1]} : vector<8x256xf32> to vector<8x128xf32>
    %418 = arith.addf %416, %417 : vector<8x128xf32>
    %419 = vector.extract_strided_slice %412 {offsets = [0, 0], sizes = [8, 32], strides = [1, 1]} : vector<8x128xf32> to vector<8x32xf32>
    %420 = arith.negf %419 : vector<8x32xf32>
    %421 = math.exp %420 : vector<8x32xf32>
    %cst_89 = arith.constant 1.000000e+00 : f32
    %422 = vector.broadcast %cst_89 : f32 to vector<8x32xf32>
    %423 = arith.addf %422, %421 : vector<8x32xf32>
    %424 = arith.divf %422, %423 : vector<8x32xf32>
    %425 = vector.extract_strided_slice %412 {offsets = [0, 32], sizes = [8, 32], strides = [1, 1]} : vector<8x128xf32> to vector<8x32xf32>
    %426 = arith.negf %425 : vector<8x32xf32>
    %427 = math.exp %426 : vector<8x32xf32>
    %cst_90 = arith.constant 1.000000e+00 : f32
    %428 = vector.broadcast %cst_90 : f32 to vector<8x32xf32>
    %429 = arith.addf %428, %427 : vector<8x32xf32>
    %430 = arith.divf %428, %429 : vector<8x32xf32>
    %431 = vector.extract_strided_slice %412 {offsets = [0, 64], sizes = [8, 32], strides = [1, 1]} : vector<8x128xf32> to vector<8x32xf32>
    %432 = math.tanh %431 : vector<8x32xf32>
    %433 = vector.extract_strided_slice %412 {offsets = [0, 96], sizes = [8, 32], strides = [1, 1]} : vector<8x128xf32> to vector<8x32xf32>
    %434 = arith.negf %433 : vector<8x32xf32>
    %435 = math.exp %434 : vector<8x32xf32>
    %cst_91 = arith.constant 1.000000e+00 : f32
    %436 = vector.broadcast %cst_91 : f32 to vector<8x32xf32>
    %437 = arith.addf %436, %435 : vector<8x32xf32>
    %438 = arith.divf %436, %437 : vector<8x32xf32>
    %439 = arith.mulf %430, %396 : vector<8x32xf32>
    %440 = arith.mulf %424, %432 : vector<8x32xf32>
    %441 = arith.addf %439, %440 : vector<8x32xf32>
    %442 = math.tanh %441 : vector<8x32xf32>
    %443 = arith.mulf %438, %442 : vector<8x32xf32>
    %444 = vector.extract_strided_slice %418 {offsets = [0, 0], sizes = [8, 32], strides = [1, 1]} : vector<8x128xf32> to vector<8x32xf32>
    %445 = arith.negf %444 : vector<8x32xf32>
    %446 = math.exp %445 : vector<8x32xf32>
    %cst_92 = arith.constant 1.000000e+00 : f32
    %447 = vector.broadcast %cst_92 : f32 to vector<8x32xf32>
    %448 = arith.addf %447, %446 : vector<8x32xf32>
    %449 = arith.divf %447, %448 : vector<8x32xf32>
    %450 = vector.extract_strided_slice %418 {offsets = [0, 32], sizes = [8, 32], strides = [1, 1]} : vector<8x128xf32> to vector<8x32xf32>
    %451 = arith.negf %450 : vector<8x32xf32>
    %452 = math.exp %451 : vector<8x32xf32>
    %cst_93 = arith.constant 1.000000e+00 : f32
    %453 = vector.broadcast %cst_93 : f32 to vector<8x32xf32>
    %454 = arith.addf %453, %452 : vector<8x32xf32>
    %455 = arith.divf %453, %454 : vector<8x32xf32>
    %456 = vector.extract_strided_slice %418 {offsets = [0, 64], sizes = [8, 32], strides = [1, 1]} : vector<8x128xf32> to vector<8x32xf32>
    %457 = math.tanh %456 : vector<8x32xf32>
    %458 = vector.extract_strided_slice %418 {offsets = [0, 96], sizes = [8, 32], strides = [1, 1]} : vector<8x128xf32> to vector<8x32xf32>
    %459 = arith.negf %458 : vector<8x32xf32>
    %460 = math.exp %459 : vector<8x32xf32>
    %cst_94 = arith.constant 1.000000e+00 : f32
    %461 = vector.broadcast %cst_94 : f32 to vector<8x32xf32>
    %462 = arith.addf %461, %460 : vector<8x32xf32>
    %463 = arith.divf %461, %462 : vector<8x32xf32>
    %464 = arith.mulf %455, %402 : vector<8x32xf32>
    %465 = arith.mulf %449, %457 : vector<8x32xf32>
    %466 = arith.addf %464, %465 : vector<8x32xf32>
    %467 = math.tanh %466 : vector<8x32xf32>
    %468 = arith.mulf %463, %467 : vector<8x32xf32>
    %469 = vector.broadcast %c4_i32 : i32 to vector<8x1xi32>
    %470 = arith.cmpi sgt, %9, %469 : vector<8x1xi32>
    %471 = vector.broadcast %403 : i32 to vector<8x1xi32>
    %472 = arith.cmpi sgt, %9, %471 : vector<8x1xi32>
    %cst_95 = arith.constant 0.000000e+00 : f32
    %473 = vector.shape_cast %470 : vector<8x1xi1> to vector<8x1xi1>
    %474 = vector.broadcast %473 : vector<8x1xi1> to vector<8x32xi1>
    %475 = vector.broadcast %cst_95 : f32 to vector<8x32xf32>
    %476 = arith.select %474, %443, %475 : vector<8x32xi1>, vector<8x32xf32>
    %477 = arith.index_cast %c4_i32 : i32 to index
    %c0_96 = arith.constant 0 : index
    %c0_97 = arith.constant 0 : index
    %478 = vector.load %arg5[%477, %c0_96, %c0_97] : memref<8x8x64xf32, #tpu.memory_space<vmem>>, vector<1x8x32xf32>
    %479 = vector.shape_cast %478 : vector<1x8x32xf32> to vector<8x32xf32>
    %480 = vector.shape_cast %476 : vector<8x32xf32> to vector<1x8x32xf32>
    tpu.vector_store %arg5[%477, %c0_96, %c0_97], %480 {strides = array<i32>} : memref<8x8x64xf32, #tpu.memory_space<vmem>>, vector<1x8x32xf32>,
    %cst_98 = arith.constant 0.000000e+00 : f32
    %481 = vector.shape_cast %472 : vector<8x1xi1> to vector<8x1xi1>
    %482 = vector.broadcast %481 : vector<8x1xi1> to vector<8x32xi1>
    %483 = vector.broadcast %cst_98 : f32 to vector<8x32xf32>
    %484 = arith.select %482, %468, %483 : vector<8x32xi1>, vector<8x32xf32>
    %485 = arith.index_cast %403 : i32 to index
    %c0_99 = arith.constant 0 : index
    %c32_100 = arith.constant 32 : index
    %486 = vector.load %arg5[%485, %c0_99, %c32_100] : memref<8x8x64xf32, #tpu.memory_space<vmem>>, vector<1x8x32xf32>
    %487 = vector.shape_cast %486 : vector<1x8x32xf32> to vector<8x32xf32>
    %488 = vector.shape_cast %484 : vector<8x32xf32> to vector<1x8x32xf32>
    tpu.vector_store %arg5[%485, %c0_99, %c32_100], %488 {strides = array<i32>} : memref<8x8x64xf32, #tpu.memory_space<vmem>>, vector<1x8x32xf32>,
    %489 = vector.shape_cast %470 : vector<8x1xi1> to vector<8x1xi1>
    %490 = vector.broadcast %489 : vector<8x1xi1> to vector<8x32xi1>
    %491 = arith.select %490, %443, %393 : vector<8x32xi1>, vector<8x32xf32>
    %492 = vector.shape_cast %470 : vector<8x1xi1> to vector<8x1xi1>
    %493 = vector.broadcast %492 : vector<8x1xi1> to vector<8x32xi1>
    %494 = arith.select %493, %441, %396 : vector<8x32xi1>, vector<8x32xf32>
    %495 = vector.shape_cast %472 : vector<8x1xi1> to vector<8x1xi1>
    %496 = vector.broadcast %495 : vector<8x1xi1> to vector<8x32xi1>
    %497 = arith.select %496, %468, %399 : vector<8x32xi1>, vector<8x32xf32>
    %498 = vector.shape_cast %472 : vector<8x1xi1> to vector<8x1xi1>
    %499 = vector.broadcast %498 : vector<8x1xi1> to vector<8x32xi1>
    %500 = arith.select %499, %466, %402 : vector<8x32xi1>, vector<8x32xf32>
    %c5_i32 = arith.constant 5 : i32
    %c7_i32_101 = arith.constant 7 : i32
    %501 = arith.subi %c7_i32_101, %c5_i32 : i32
    %502 = tpu.concatenate %491, %497 in 1 : vector<8x32xf32>, vector<8x32xf32> -> vector<8x64xf32>
    %503 = arith.truncf %502 : vector<8x64xf32> to vector<8x64xbf16>
    %cst_102 = arith.constant dense<0.000000e+00> : vector<8x256xf32>
    %504 = tpu.matmul %503, %8, %cst_102 {dimension_numbers = #tpu.dot_dimension_numbers<[1], [0], [0], [1], [0, 0, 1, 1], [], []>} : vector<8x64xbf16>, vector<64x256xbf16>, vector<8x256xf32> -> vector<8x256xf32>
    %505 = arith.index_cast %c5_i32 : i32 to index
    %c0_103 = arith.constant 0 : index
    %c0_104 = arith.constant 0 : index
    %506 = vector.load %arg8[%505, %c0_103, %c0_104] : memref<8x8x256xf32, #tpu.memory_space<vmem>>, vector<1x8x256xf32>
    %507 = vector.shape_cast %506 : vector<1x8x256xf32> to vector<8x256xf32>
    %508 = vector.extract_strided_slice %507 {offsets = [0, 0], sizes = [8, 128], strides = [1, 1]} : vector<8x256xf32> to vector<8x128xf32>
    %509 = vector.extract_strided_slice %504 {offsets = [0, 0], sizes = [8, 128], strides = [1, 1]} : vector<8x256xf32> to vector<8x128xf32>
    %510 = arith.addf %508, %509 : vector<8x128xf32>
    %511 = arith.index_cast %501 : i32 to index
    %c0_105 = arith.constant 0 : index
    %c0_106 = arith.constant 0 : index
    %512 = vector.load %arg8[%511, %c0_105, %c0_106] : memref<8x8x256xf32, #tpu.memory_space<vmem>>, vector<1x8x256xf32>
    %513 = vector.shape_cast %512 : vector<1x8x256xf32> to vector<8x256xf32>
    %514 = vector.extract_strided_slice %513 {offsets = [0, 128], sizes = [8, 128], strides = [1, 1]} : vector<8x256xf32> to vector<8x128xf32>
    %515 = vector.extract_strided_slice %504 {offsets = [0, 128], sizes = [8, 128], strides = [1, 1]} : vector<8x256xf32> to vector<8x128xf32>
    %516 = arith.addf %514, %515 : vector<8x128xf32>
    %517 = vector.extract_strided_slice %510 {offsets = [0, 0], sizes = [8, 32], strides = [1, 1]} : vector<8x128xf32> to vector<8x32xf32>
    %518 = arith.negf %517 : vector<8x32xf32>
    %519 = math.exp %518 : vector<8x32xf32>
    %cst_107 = arith.constant 1.000000e+00 : f32
    %520 = vector.broadcast %cst_107 : f32 to vector<8x32xf32>
    %521 = arith.addf %520, %519 : vector<8x32xf32>
    %522 = arith.divf %520, %521 : vector<8x32xf32>
    %523 = vector.extract_strided_slice %510 {offsets = [0, 32], sizes = [8, 32], strides = [1, 1]} : vector<8x128xf32> to vector<8x32xf32>
    %524 = arith.negf %523 : vector<8x32xf32>
    %525 = math.exp %524 : vector<8x32xf32>
    %cst_108 = arith.constant 1.000000e+00 : f32
    %526 = vector.broadcast %cst_108 : f32 to vector<8x32xf32>
    %527 = arith.addf %526, %525 : vector<8x32xf32>
    %528 = arith.divf %526, %527 : vector<8x32xf32>
    %529 = vector.extract_strided_slice %510 {offsets = [0, 64], sizes = [8, 32], strides = [1, 1]} : vector<8x128xf32> to vector<8x32xf32>
    %530 = math.tanh %529 : vector<8x32xf32>
    %531 = vector.extract_strided_slice %510 {offsets = [0, 96], sizes = [8, 32], strides = [1, 1]} : vector<8x128xf32> to vector<8x32xf32>
    %532 = arith.negf %531 : vector<8x32xf32>
    %533 = math.exp %532 : vector<8x32xf32>
    %cst_109 = arith.constant 1.000000e+00 : f32
    %534 = vector.broadcast %cst_109 : f32 to vector<8x32xf32>
    %535 = arith.addf %534, %533 : vector<8x32xf32>
    %536 = arith.divf %534, %535 : vector<8x32xf32>
    %537 = arith.mulf %528, %494 : vector<8x32xf32>
    %538 = arith.mulf %522, %530 : vector<8x32xf32>
    %539 = arith.addf %537, %538 : vector<8x32xf32>
    %540 = math.tanh %539 : vector<8x32xf32>
    %541 = arith.mulf %536, %540 : vector<8x32xf32>
    %542 = vector.extract_strided_slice %516 {offsets = [0, 0], sizes = [8, 32], strides = [1, 1]} : vector<8x128xf32> to vector<8x32xf32>
    %543 = arith.negf %542 : vector<8x32xf32>
    %544 = math.exp %543 : vector<8x32xf32>
    %cst_110 = arith.constant 1.000000e+00 : f32
    %545 = vector.broadcast %cst_110 : f32 to vector<8x32xf32>
    %546 = arith.addf %545, %544 : vector<8x32xf32>
    %547 = arith.divf %545, %546 : vector<8x32xf32>
    %548 = vector.extract_strided_slice %516 {offsets = [0, 32], sizes = [8, 32], strides = [1, 1]} : vector<8x128xf32> to vector<8x32xf32>
    %549 = arith.negf %548 : vector<8x32xf32>
    %550 = math.exp %549 : vector<8x32xf32>
    %cst_111 = arith.constant 1.000000e+00 : f32
    %551 = vector.broadcast %cst_111 : f32 to vector<8x32xf32>
    %552 = arith.addf %551, %550 : vector<8x32xf32>
    %553 = arith.divf %551, %552 : vector<8x32xf32>
    %554 = vector.extract_strided_slice %516 {offsets = [0, 64], sizes = [8, 32], strides = [1, 1]} : vector<8x128xf32> to vector<8x32xf32>
    %555 = math.tanh %554 : vector<8x32xf32>
    %556 = vector.extract_strided_slice %516 {offsets = [0, 96], sizes = [8, 32], strides = [1, 1]} : vector<8x128xf32> to vector<8x32xf32>
    %557 = arith.negf %556 : vector<8x32xf32>
    %558 = math.exp %557 : vector<8x32xf32>
    %cst_112 = arith.constant 1.000000e+00 : f32
    %559 = vector.broadcast %cst_112 : f32 to vector<8x32xf32>
    %560 = arith.addf %559, %558 : vector<8x32xf32>
    %561 = arith.divf %559, %560 : vector<8x32xf32>
    %562 = arith.mulf %553, %500 : vector<8x32xf32>
    %563 = arith.mulf %547, %555 : vector<8x32xf32>
    %564 = arith.addf %562, %563 : vector<8x32xf32>
    %565 = math.tanh %564 : vector<8x32xf32>
    %566 = arith.mulf %561, %565 : vector<8x32xf32>
    %567 = vector.broadcast %c5_i32 : i32 to vector<8x1xi32>
    %568 = arith.cmpi sgt, %9, %567 : vector<8x1xi32>
    %569 = vector.broadcast %501 : i32 to vector<8x1xi32>
    %570 = arith.cmpi sgt, %9, %569 : vector<8x1xi32>
    %cst_113 = arith.constant 0.000000e+00 : f32
    %571 = vector.shape_cast %568 : vector<8x1xi1> to vector<8x1xi1>
    %572 = vector.broadcast %571 : vector<8x1xi1> to vector<8x32xi1>
    %573 = vector.broadcast %cst_113 : f32 to vector<8x32xf32>
    %574 = arith.select %572, %541, %573 : vector<8x32xi1>, vector<8x32xf32>
    %575 = arith.index_cast %c5_i32 : i32 to index
    %c0_114 = arith.constant 0 : index
    %c0_115 = arith.constant 0 : index
    %576 = vector.load %arg5[%575, %c0_114, %c0_115] : memref<8x8x64xf32, #tpu.memory_space<vmem>>, vector<1x8x32xf32>
    %577 = vector.shape_cast %576 : vector<1x8x32xf32> to vector<8x32xf32>
    %578 = vector.shape_cast %574 : vector<8x32xf32> to vector<1x8x32xf32>
    tpu.vector_store %arg5[%575, %c0_114, %c0_115], %578 {strides = array<i32>} : memref<8x8x64xf32, #tpu.memory_space<vmem>>, vector<1x8x32xf32>,
    %cst_116 = arith.constant 0.000000e+00 : f32
    %579 = vector.shape_cast %570 : vector<8x1xi1> to vector<8x1xi1>
    %580 = vector.broadcast %579 : vector<8x1xi1> to vector<8x32xi1>
    %581 = vector.broadcast %cst_116 : f32 to vector<8x32xf32>
    %582 = arith.select %580, %566, %581 : vector<8x32xi1>, vector<8x32xf32>
    %583 = arith.index_cast %501 : i32 to index
    %c0_117 = arith.constant 0 : index
    %c32_118 = arith.constant 32 : index
    %584 = vector.load %arg5[%583, %c0_117, %c32_118] : memref<8x8x64xf32, #tpu.memory_space<vmem>>, vector<1x8x32xf32>
    %585 = vector.shape_cast %584 : vector<1x8x32xf32> to vector<8x32xf32>
    %586 = vector.shape_cast %582 : vector<8x32xf32> to vector<1x8x32xf32>
    tpu.vector_store %arg5[%583, %c0_117, %c32_118], %586 {strides = array<i32>} : memref<8x8x64xf32, #tpu.memory_space<vmem>>, vector<1x8x32xf32>,
    %587 = vector.shape_cast %568 : vector<8x1xi1> to vector<8x1xi1>
    %588 = vector.broadcast %587 : vector<8x1xi1> to vector<8x32xi1>
    %589 = arith.select %588, %541, %491 : vector<8x32xi1>, vector<8x32xf32>
    %590 = vector.shape_cast %568 : vector<8x1xi1> to vector<8x1xi1>
    %591 = vector.broadcast %590 : vector<8x1xi1> to vector<8x32xi1>
    %592 = arith.select %591, %539, %494 : vector<8x32xi1>, vector<8x32xf32>
    %593 = vector.shape_cast %570 : vector<8x1xi1> to vector<8x1xi1>
    %594 = vector.broadcast %593 : vector<8x1xi1> to vector<8x32xi1>
    %595 = arith.select %594, %566, %497 : vector<8x32xi1>, vector<8x32xf32>
    %596 = vector.shape_cast %570 : vector<8x1xi1> to vector<8x1xi1>
    %597 = vector.broadcast %596 : vector<8x1xi1> to vector<8x32xi1>
    %598 = arith.select %597, %564, %500 : vector<8x32xi1>, vector<8x32xf32>
    %c6_i32 = arith.constant 6 : i32
    %c7_i32_119 = arith.constant 7 : i32
    %599 = arith.subi %c7_i32_119, %c6_i32 : i32
    %600 = tpu.concatenate %589, %595 in 1 : vector<8x32xf32>, vector<8x32xf32> -> vector<8x64xf32>
    %601 = arith.truncf %600 : vector<8x64xf32> to vector<8x64xbf16>
    %cst_120 = arith.constant dense<0.000000e+00> : vector<8x256xf32>
    %602 = tpu.matmul %601, %8, %cst_120 {dimension_numbers = #tpu.dot_dimension_numbers<[1], [0], [0], [1], [0, 0, 1, 1], [], []>} : vector<8x64xbf16>, vector<64x256xbf16>, vector<8x256xf32> -> vector<8x256xf32>
    %603 = arith.index_cast %c6_i32 : i32 to index
    %c0_121 = arith.constant 0 : index
    %c0_122 = arith.constant 0 : index
    %604 = vector.load %arg8[%603, %c0_121, %c0_122] : memref<8x8x256xf32, #tpu.memory_space<vmem>>, vector<1x8x256xf32>
    %605 = vector.shape_cast %604 : vector<1x8x256xf32> to vector<8x256xf32>
    %606 = vector.extract_strided_slice %605 {offsets = [0, 0], sizes = [8, 128], strides = [1, 1]} : vector<8x256xf32> to vector<8x128xf32>
    %607 = vector.extract_strided_slice %602 {offsets = [0, 0], sizes = [8, 128], strides = [1, 1]} : vector<8x256xf32> to vector<8x128xf32>
    %608 = arith.addf %606, %607 : vector<8x128xf32>
    %609 = arith.index_cast %599 : i32 to index
    %c0_123 = arith.constant 0 : index
    %c0_124 = arith.constant 0 : index
    %610 = vector.load %arg8[%609, %c0_123, %c0_124] : memref<8x8x256xf32, #tpu.memory_space<vmem>>, vector<1x8x256xf32>
    %611 = vector.shape_cast %610 : vector<1x8x256xf32> to vector<8x256xf32>
    %612 = vector.extract_strided_slice %611 {offsets = [0, 128], sizes = [8, 128], strides = [1, 1]} : vector<8x256xf32> to vector<8x128xf32>
    %613 = vector.extract_strided_slice %602 {offsets = [0, 128], sizes = [8, 128], strides = [1, 1]} : vector<8x256xf32> to vector<8x128xf32>
    %614 = arith.addf %612, %613 : vector<8x128xf32>
    %615 = vector.extract_strided_slice %608 {offsets = [0, 0], sizes = [8, 32], strides = [1, 1]} : vector<8x128xf32> to vector<8x32xf32>
    %616 = arith.negf %615 : vector<8x32xf32>
    %617 = math.exp %616 : vector<8x32xf32>
    %cst_125 = arith.constant 1.000000e+00 : f32
    %618 = vector.broadcast %cst_125 : f32 to vector<8x32xf32>
    %619 = arith.addf %618, %617 : vector<8x32xf32>
    %620 = arith.divf %618, %619 : vector<8x32xf32>
    %621 = vector.extract_strided_slice %608 {offsets = [0, 32], sizes = [8, 32], strides = [1, 1]} : vector<8x128xf32> to vector<8x32xf32>
    %622 = arith.negf %621 : vector<8x32xf32>
    %623 = math.exp %622 : vector<8x32xf32>
    %cst_126 = arith.constant 1.000000e+00 : f32
    %624 = vector.broadcast %cst_126 : f32 to vector<8x32xf32>
    %625 = arith.addf %624, %623 : vector<8x32xf32>
    %626 = arith.divf %624, %625 : vector<8x32xf32>
    %627 = vector.extract_strided_slice %608 {offsets = [0, 64], sizes = [8, 32], strides = [1, 1]} : vector<8x128xf32> to vector<8x32xf32>
    %628 = math.tanh %627 : vector<8x32xf32>
    %629 = vector.extract_strided_slice %608 {offsets = [0, 96], sizes = [8, 32], strides = [1, 1]} : vector<8x128xf32> to vector<8x32xf32>
    %630 = arith.negf %629 : vector<8x32xf32>
    %631 = math.exp %630 : vector<8x32xf32>
    %cst_127 = arith.constant 1.000000e+00 : f32
    %632 = vector.broadcast %cst_127 : f32 to vector<8x32xf32>
    %633 = arith.addf %632, %631 : vector<8x32xf32>
    %634 = arith.divf %632, %633 : vector<8x32xf32>
    %635 = arith.mulf %626, %592 : vector<8x32xf32>
    %636 = arith.mulf %620, %628 : vector<8x32xf32>
    %637 = arith.addf %635, %636 : vector<8x32xf32>
    %638 = math.tanh %637 : vector<8x32xf32>
    %639 = arith.mulf %634, %638 : vector<8x32xf32>
    %640 = vector.extract_strided_slice %614 {offsets = [0, 0], sizes = [8, 32], strides = [1, 1]} : vector<8x128xf32> to vector<8x32xf32>
    %641 = arith.negf %640 : vector<8x32xf32>
    %642 = math.exp %641 : vector<8x32xf32>
    %cst_128 = arith.constant 1.000000e+00 : f32
    %643 = vector.broadcast %cst_128 : f32 to vector<8x32xf32>
    %644 = arith.addf %643, %642 : vector<8x32xf32>
    %645 = arith.divf %643, %644 : vector<8x32xf32>
    %646 = vector.extract_strided_slice %614 {offsets = [0, 32], sizes = [8, 32], strides = [1, 1]} : vector<8x128xf32> to vector<8x32xf32>
    %647 = arith.negf %646 : vector<8x32xf32>
    %648 = math.exp %647 : vector<8x32xf32>
    %cst_129 = arith.constant 1.000000e+00 : f32
    %649 = vector.broadcast %cst_129 : f32 to vector<8x32xf32>
    %650 = arith.addf %649, %648 : vector<8x32xf32>
    %651 = arith.divf %649, %650 : vector<8x32xf32>
    %652 = vector.extract_strided_slice %614 {offsets = [0, 64], sizes = [8, 32], strides = [1, 1]} : vector<8x128xf32> to vector<8x32xf32>
    %653 = math.tanh %652 : vector<8x32xf32>
    %654 = vector.extract_strided_slice %614 {offsets = [0, 96], sizes = [8, 32], strides = [1, 1]} : vector<8x128xf32> to vector<8x32xf32>
    %655 = arith.negf %654 : vector<8x32xf32>
    %656 = math.exp %655 : vector<8x32xf32>
    %cst_130 = arith.constant 1.000000e+00 : f32
    %657 = vector.broadcast %cst_130 : f32 to vector<8x32xf32>
    %658 = arith.addf %657, %656 : vector<8x32xf32>
    %659 = arith.divf %657, %658 : vector<8x32xf32>
    %660 = arith.mulf %651, %598 : vector<8x32xf32>
    %661 = arith.mulf %645, %653 : vector<8x32xf32>
    %662 = arith.addf %660, %661 : vector<8x32xf32>
    %663 = math.tanh %662 : vector<8x32xf32>
    %664 = arith.mulf %659, %663 : vector<8x32xf32>
    %665 = vector.broadcast %c6_i32 : i32 to vector<8x1xi32>
    %666 = arith.cmpi sgt, %9, %665 : vector<8x1xi32>
    %667 = vector.broadcast %599 : i32 to vector<8x1xi32>
    %668 = arith.cmpi sgt, %9, %667 : vector<8x1xi32>
    %cst_131 = arith.constant 0.000000e+00 : f32
    %669 = vector.shape_cast %666 : vector<8x1xi1> to vector<8x1xi1>
    %670 = vector.broadcast %669 : vector<8x1xi1> to vector<8x32xi1>
    %671 = vector.broadcast %cst_131 : f32 to vector<8x32xf32>
    %672 = arith.select %670, %639, %671 : vector<8x32xi1>, vector<8x32xf32>
    %673 = arith.index_cast %c6_i32 : i32 to index
    %c0_132 = arith.constant 0 : index
    %c0_133 = arith.constant 0 : index
    %674 = vector.load %arg5[%673, %c0_132, %c0_133] : memref<8x8x64xf32, #tpu.memory_space<vmem>>, vector<1x8x32xf32>
    %675 = vector.shape_cast %674 : vector<1x8x32xf32> to vector<8x32xf32>
    %676 = vector.shape_cast %672 : vector<8x32xf32> to vector<1x8x32xf32>
    tpu.vector_store %arg5[%673, %c0_132, %c0_133], %676 {strides = array<i32>} : memref<8x8x64xf32, #tpu.memory_space<vmem>>, vector<1x8x32xf32>,
    %cst_134 = arith.constant 0.000000e+00 : f32
    %677 = vector.shape_cast %668 : vector<8x1xi1> to vector<8x1xi1>
    %678 = vector.broadcast %677 : vector<8x1xi1> to vector<8x32xi1>
    %679 = vector.broadcast %cst_134 : f32 to vector<8x32xf32>
    %680 = arith.select %678, %664, %679 : vector<8x32xi1>, vector<8x32xf32>
    %681 = arith.index_cast %599 : i32 to index
    %c0_135 = arith.constant 0 : index
    %c32_136 = arith.constant 32 : index
    %682 = vector.load %arg5[%681, %c0_135, %c32_136] : memref<8x8x64xf32, #tpu.memory_space<vmem>>, vector<1x8x32xf32>
    %683 = vector.shape_cast %682 : vector<1x8x32xf32> to vector<8x32xf32>
    %684 = vector.shape_cast %680 : vector<8x32xf32> to vector<1x8x32xf32>
    tpu.vector_store %arg5[%681, %c0_135, %c32_136], %684 {strides = array<i32>} : memref<8x8x64xf32, #tpu.memory_space<vmem>>, vector<1x8x32xf32>,
    %685 = vector.shape_cast %666 : vector<8x1xi1> to vector<8x1xi1>
    %686 = vector.broadcast %685 : vector<8x1xi1> to vector<8x32xi1>
    %687 = arith.select %686, %639, %589 : vector<8x32xi1>, vector<8x32xf32>
    %688 = vector.shape_cast %666 : vector<8x1xi1> to vector<8x1xi1>
    %689 = vector.broadcast %688 : vector<8x1xi1> to vector<8x32xi1>
    %690 = arith.select %689, %637, %592 : vector<8x32xi1>, vector<8x32xf32>
    %691 = vector.shape_cast %668 : vector<8x1xi1> to vector<8x1xi1>
    %692 = vector.broadcast %691 : vector<8x1xi1> to vector<8x32xi1>
    %693 = arith.select %692, %664, %595 : vector<8x32xi1>, vector<8x32xf32>
    %694 = vector.shape_cast %668 : vector<8x1xi1> to vector<8x1xi1>
    %695 = vector.broadcast %694 : vector<8x1xi1> to vector<8x32xi1>
    %696 = arith.select %695, %662, %598 : vector<8x32xi1>, vector<8x32xf32>
    %c7_i32_137 = arith.constant 7 : i32
    %c7_i32_138 = arith.constant 7 : i32
    %697 = arith.subi %c7_i32_138, %c7_i32_137 : i32
    %698 = tpu.concatenate %687, %693 in 1 : vector<8x32xf32>, vector<8x32xf32> -> vector<8x64xf32>
    %699 = arith.truncf %698 : vector<8x64xf32> to vector<8x64xbf16>
    %cst_139 = arith.constant dense<0.000000e+00> : vector<8x256xf32>
    %700 = tpu.matmul %699, %8, %cst_139 {dimension_numbers = #tpu.dot_dimension_numbers<[1], [0], [0], [1], [0, 0, 1, 1], [], []>} : vector<8x64xbf16>, vector<64x256xbf16>, vector<8x256xf32> -> vector<8x256xf32>
    %701 = arith.index_cast %c7_i32_137 : i32 to index
    %c0_140 = arith.constant 0 : index
    %c0_141 = arith.constant 0 : index
    %702 = vector.load %arg8[%701, %c0_140, %c0_141] : memref<8x8x256xf32, #tpu.memory_space<vmem>>, vector<1x8x256xf32>
    %703 = vector.shape_cast %702 : vector<1x8x256xf32> to vector<8x256xf32>
    %704 = vector.extract_strided_slice %703 {offsets = [0, 0], sizes = [8, 128], strides = [1, 1]} : vector<8x256xf32> to vector<8x128xf32>
    %705 = vector.extract_strided_slice %700 {offsets = [0, 0], sizes = [8, 128], strides = [1, 1]} : vector<8x256xf32> to vector<8x128xf32>
    %706 = arith.addf %704, %705 : vector<8x128xf32>
    %707 = arith.index_cast %697 : i32 to index
    %c0_142 = arith.constant 0 : index
    %c0_143 = arith.constant 0 : index
    %708 = vector.load %arg8[%707, %c0_142, %c0_143] : memref<8x8x256xf32, #tpu.memory_space<vmem>>, vector<1x8x256xf32>
    %709 = vector.shape_cast %708 : vector<1x8x256xf32> to vector<8x256xf32>
    %710 = vector.extract_strided_slice %709 {offsets = [0, 128], sizes = [8, 128], strides = [1, 1]} : vector<8x256xf32> to vector<8x128xf32>
    %711 = vector.extract_strided_slice %700 {offsets = [0, 128], sizes = [8, 128], strides = [1, 1]} : vector<8x256xf32> to vector<8x128xf32>
    %712 = arith.addf %710, %711 : vector<8x128xf32>
    %713 = vector.extract_strided_slice %706 {offsets = [0, 0], sizes = [8, 32], strides = [1, 1]} : vector<8x128xf32> to vector<8x32xf32>
    %714 = arith.negf %713 : vector<8x32xf32>
    %715 = math.exp %714 : vector<8x32xf32>
    %cst_144 = arith.constant 1.000000e+00 : f32
    %716 = vector.broadcast %cst_144 : f32 to vector<8x32xf32>
    %717 = arith.addf %716, %715 : vector<8x32xf32>
    %718 = arith.divf %716, %717 : vector<8x32xf32>
    %719 = vector.extract_strided_slice %706 {offsets = [0, 32], sizes = [8, 32], strides = [1, 1]} : vector<8x128xf32> to vector<8x32xf32>
    %720 = arith.negf %719 : vector<8x32xf32>
    %721 = math.exp %720 : vector<8x32xf32>
    %cst_145 = arith.constant 1.000000e+00 : f32
    %722 = vector.broadcast %cst_145 : f32 to vector<8x32xf32>
    %723 = arith.addf %722, %721 : vector<8x32xf32>
    %724 = arith.divf %722, %723 : vector<8x32xf32>
    %725 = vector.extract_strided_slice %706 {offsets = [0, 64], sizes = [8, 32], strides = [1, 1]} : vector<8x128xf32> to vector<8x32xf32>
    %726 = math.tanh %725 : vector<8x32xf32>
    %727 = vector.extract_strided_slice %706 {offsets = [0, 96], sizes = [8, 32], strides = [1, 1]} : vector<8x128xf32> to vector<8x32xf32>
    %728 = arith.negf %727 : vector<8x32xf32>
    %729 = math.exp %728 : vector<8x32xf32>
    %cst_146 = arith.constant 1.000000e+00 : f32
    %730 = vector.broadcast %cst_146 : f32 to vector<8x32xf32>
    %731 = arith.addf %730, %729 : vector<8x32xf32>
    %732 = arith.divf %730, %731 : vector<8x32xf32>
    %733 = arith.mulf %724, %690 : vector<8x32xf32>
    %734 = arith.mulf %718, %726 : vector<8x32xf32>
    %735 = arith.addf %733, %734 : vector<8x32xf32>
    %736 = math.tanh %735 : vector<8x32xf32>
    %737 = arith.mulf %732, %736 : vector<8x32xf32>
    %738 = vector.extract_strided_slice %712 {offsets = [0, 0], sizes = [8, 32], strides = [1, 1]} : vector<8x128xf32> to vector<8x32xf32>
    %739 = arith.negf %738 : vector<8x32xf32>
    %740 = math.exp %739 : vector<8x32xf32>
    %cst_147 = arith.constant 1.000000e+00 : f32
    %741 = vector.broadcast %cst_147 : f32 to vector<8x32xf32>
    %742 = arith.addf %741, %740 : vector<8x32xf32>
    %743 = arith.divf %741, %742 : vector<8x32xf32>
    %744 = vector.extract_strided_slice %712 {offsets = [0, 32], sizes = [8, 32], strides = [1, 1]} : vector<8x128xf32> to vector<8x32xf32>
    %745 = arith.negf %744 : vector<8x32xf32>
    %746 = math.exp %745 : vector<8x32xf32>
    %cst_148 = arith.constant 1.000000e+00 : f32
    %747 = vector.broadcast %cst_148 : f32 to vector<8x32xf32>
    %748 = arith.addf %747, %746 : vector<8x32xf32>
    %749 = arith.divf %747, %748 : vector<8x32xf32>
    %750 = vector.extract_strided_slice %712 {offsets = [0, 64], sizes = [8, 32], strides = [1, 1]} : vector<8x128xf32> to vector<8x32xf32>
    %751 = math.tanh %750 : vector<8x32xf32>
    %752 = vector.extract_strided_slice %712 {offsets = [0, 96], sizes = [8, 32], strides = [1, 1]} : vector<8x128xf32> to vector<8x32xf32>
    %753 = arith.negf %752 : vector<8x32xf32>
    %754 = math.exp %753 : vector<8x32xf32>
    %cst_149 = arith.constant 1.000000e+00 : f32
    %755 = vector.broadcast %cst_149 : f32 to vector<8x32xf32>
    %756 = arith.addf %755, %754 : vector<8x32xf32>
    %757 = arith.divf %755, %756 : vector<8x32xf32>
    %758 = arith.mulf %749, %696 : vector<8x32xf32>
    %759 = arith.mulf %743, %751 : vector<8x32xf32>
    %760 = arith.addf %758, %759 : vector<8x32xf32>
    %761 = math.tanh %760 : vector<8x32xf32>
    %762 = arith.mulf %757, %761 : vector<8x32xf32>
    %763 = vector.broadcast %c7_i32_137 : i32 to vector<8x1xi32>
    %764 = arith.cmpi sgt, %9, %763 : vector<8x1xi32>
    %765 = vector.broadcast %697 : i32 to vector<8x1xi32>
    %766 = arith.cmpi sgt, %9, %765 : vector<8x1xi32>
    %cst_150 = arith.constant 0.000000e+00 : f32
    %767 = vector.shape_cast %764 : vector<8x1xi1> to vector<8x1xi1>
    %768 = vector.broadcast %767 : vector<8x1xi1> to vector<8x32xi1>
    %769 = vector.broadcast %cst_150 : f32 to vector<8x32xf32>
    %770 = arith.select %768, %737, %769 : vector<8x32xi1>, vector<8x32xf32>
    %771 = arith.index_cast %c7_i32_137 : i32 to index
    %c0_151 = arith.constant 0 : index
    %c0_152 = arith.constant 0 : index
    %772 = vector.load %arg5[%771, %c0_151, %c0_152] : memref<8x8x64xf32, #tpu.memory_space<vmem>>, vector<1x8x32xf32>
    %773 = vector.shape_cast %772 : vector<1x8x32xf32> to vector<8x32xf32>
    %774 = vector.shape_cast %770 : vector<8x32xf32> to vector<1x8x32xf32>
    tpu.vector_store %arg5[%771, %c0_151, %c0_152], %774 {strides = array<i32>} : memref<8x8x64xf32, #tpu.memory_space<vmem>>, vector<1x8x32xf32>,
    %cst_153 = arith.constant 0.000000e+00 : f32
    %775 = vector.shape_cast %766 : vector<8x1xi1> to vector<8x1xi1>
    %776 = vector.broadcast %775 : vector<8x1xi1> to vector<8x32xi1>
    %777 = vector.broadcast %cst_153 : f32 to vector<8x32xf32>
    %778 = arith.select %776, %762, %777 : vector<8x32xi1>, vector<8x32xf32>
    %779 = arith.index_cast %697 : i32 to index
    %c0_154 = arith.constant 0 : index
    %c32_155 = arith.constant 32 : index
    %780 = vector.load %arg5[%779, %c0_154, %c32_155] : memref<8x8x64xf32, #tpu.memory_space<vmem>>, vector<1x8x32xf32>
    %781 = vector.shape_cast %780 : vector<1x8x32xf32> to vector<8x32xf32>
    %782 = vector.shape_cast %778 : vector<8x32xf32> to vector<1x8x32xf32>
    tpu.vector_store %arg5[%779, %c0_154, %c32_155], %782 {strides = array<i32>} : memref<8x8x64xf32, #tpu.memory_space<vmem>>, vector<1x8x32xf32>,
    %783 = vector.shape_cast %764 : vector<8x1xi1> to vector<8x1xi1>
    %784 = vector.broadcast %783 : vector<8x1xi1> to vector<8x32xi1>
    %785 = arith.select %784, %737, %687 : vector<8x32xi1>, vector<8x32xf32>
    %786 = vector.shape_cast %764 : vector<8x1xi1> to vector<8x1xi1>
    %787 = vector.broadcast %786 : vector<8x1xi1> to vector<8x32xi1>
    %788 = arith.select %787, %735, %690 : vector<8x32xi1>, vector<8x32xf32>
    %789 = vector.shape_cast %766 : vector<8x1xi1> to vector<8x1xi1>
    %790 = vector.broadcast %789 : vector<8x1xi1> to vector<8x32xi1>
    %791 = arith.select %790, %762, %693 : vector<8x32xi1>, vector<8x32xf32>
    %792 = vector.shape_cast %766 : vector<8x1xi1> to vector<8x1xi1>
    %793 = vector.broadcast %792 : vector<8x1xi1> to vector<8x32xi1>
    %794 = arith.select %793, %760, %696 : vector<8x32xi1>, vector<8x32xf32>
    %c8_i32 = arith.constant 8 : i32
    %795 = tpu.concatenate %785, %791 in 1 : vector<8x32xf32>, vector<8x32xf32> -> vector<8x64xf32>
    %c0_156 = arith.constant 0 : index
    %c0_157 = arith.constant 0 : index
    %796 = vector.load %arg6[%c0_156, %c0_157] : memref<8x64xf32, #tpu.memory_space<vmem>>, vector<8x64xf32>
    tpu.vector_store %arg6[%c0_156, %c0_157], %795 {strides = array<i32>} : memref<8x64xf32, #tpu.memory_space<vmem>>, vector<8x64xf32>,
    %797 = tpu.concatenate %788, %794 in 1 : vector<8x32xf32>, vector<8x32xf32> -> vector<8x64xf32>
    %c0_158 = arith.constant 0 : index
    %c0_159 = arith.constant 0 : index
    %798 = vector.load %arg7[%c0_158, %c0_159] : memref<8x64xf32, #tpu.memory_space<vmem>>, vector<8x64xf32>
    tpu.vector_store %arg7[%c0_158, %c0_159], %797 {strides = array<i32>} : memref<8x64xf32, #tpu.memory_space<vmem>>, vector<8x64xf32>,
    return
  }
}

</mosaic_0001>

<llo_original>
// kernel: blstm_forward.3
$region0: #{blstm_forward.3}
  #allocation0 [shape = 'u32[]', space=smem, size = 0x4, offset = 0x4, fixed_abs, tag = 'smem constant byte address 0x4 - core index']
  #allocation1 [shape = 'u32[144,128]{1,0:T(1,128)}', space=vmem, size = 0x12000, scoped, tag = 'internal scratch']
  #allocation2 [shape = 'f32[8,8,256]{2,1,0:T(8,128)}', space=vmem, size = 0x10000, scoped, tag = 'scratch operand']
  %s0 = inlined_call_operand.vmem [shape: s32[8,1], index: 0, kind: input, shape index: {}]
  %s1 = inlined_call_operand.vmem [shape: bf16[64,64], index: 1, kind: input, shape index: {}]
  %s2 = inlined_call_operand.vmem [shape: bf16[64,256], index: 2, kind: input, shape index: {}]
  %s3 = inlined_call_operand.vmem [shape: bf16[64,256], index: 3, kind: input, shape index: {}]
  %s4 = inlined_call_operand.vmem [shape: f32[1,256], index: 4, kind: input, shape index: {}]
  %s5 = inlined_call_operand.vmem [shape: f32[8,8,64], index: 5, kind: output, shape index: {0}]
  %s6 = inlined_call_operand.vmem [shape: f32[8,64], index: 6, kind: output, shape index: {1}]
  %s7 = inlined_call_operand.vmem [shape: f32[8,64], index: 7, kind: output, shape index: {2}]
  %8 = xla_tuple %s5, %s6, %s7
  %s9 = sld [smem:[#allocation0]]
  $region46: #{blstm_forward.3} parent=0
    _
  %s11 = ssub.s32 1, %s9
  %s12 = scalar_select 0, %s11, %s9
  // Predicated region
  $region2: #{blstm_forward.3} parent=0 // pred_check
    _
  $region3: #{blstm_forward.3} parent=0 // pred_check_branch
    %14 = sbr.rel (0) target = $region5
  $region4: #{blstm_forward.3} parent=0 // pred_region
    _
  $region5: #{blstm_forward.3} parent=0 // pred_fallthru
    _
  // Predicated region
  $region6: #{blstm_forward.3} parent=0 // pred_check
    _
  $region7: #{blstm_forward.3} parent=0 // pred_check_branch
    %16 = sbr.rel (0) target = $region9
  $region8: #{blstm_forward.3} parent=0 // pred_region
    _
  $region9: #{blstm_forward.3} parent=0 // pred_fallthru
    _
  // Predicated region
  $region10: #{blstm_forward.3} parent=0 // pred_check
    _
  $region11: #{blstm_forward.3} parent=0 // pred_check_branch
    %18 = sbr.rel (0) target = $region13
  $region12: #{blstm_forward.3} parent=0 // pred_region
    _
  $region13: #{blstm_forward.3} parent=0 // pred_fallthru
    _
  // Predicated region
  $region14: #{blstm_forward.3} parent=0 // pred_check
    _
  $region15: #{blstm_forward.3} parent=0 // pred_check_branch
    %20 = sbr.rel (0) target = $region17
  $region16: #{blstm_forward.3} parent=0 // pred_region
    _
  $region17: #{blstm_forward.3} parent=0 // pred_fallthru
    _
  // Predicated region
  $region18: #{blstm_forward.3} parent=0 // pred_check
    _
  $region19: #{blstm_forward.3} parent=0 // pred_check_branch
    %22 = sbr.rel (0) target = $region21
  $region20: #{blstm_forward.3} parent=0 // pred_region
    _
  $region21: #{blstm_forward.3} parent=0 // pred_fallthru
    _
  %v24 = vld [vmem:[%s1] sm:$0xf]
  %v25 = vld [vmem:[%s1 + $0x4] sm:$0xf]
  %v26 = vld [vmem:[%s1 + $0x8] sm:$0xf]
  %v27 = vld [vmem:[%s1 + $0xc] sm:$0xf]
  %v28 = vld [vmem:[%s1 + $0x10] sm:$0xf]
  %v29 = vld [vmem:[%s1 + $0x14] sm:$0xf]
  %v30 = vld [vmem:[%s1 + $0x18] sm:$0xf]
  %v31 = vld [vmem:[%s1 + $0x1c] sm:$0xf]
  %v32 = vld [vmem:[%s2] sm:$0xff]
  %v33 = vld [vmem:[%s2 + $0x8] sm:$0xff]
  %v34 = vld [vmem:[%s2 + $0x10] sm:$0xff]
  %v35 = vld [vmem:[%s2 + $0x18] sm:$0xff]
  %v36 = vld [vmem:[%s2 + $0x20] sm:$0xff]
  %v37 = vld [vmem:[%s2 + $0x28] sm:$0xff]
  %v38 = vld [vmem:[%s2 + $0x30] sm:$0xff]
  %v39 = vld [vmem:[%s2 + $0x38] sm:$0xff]
  %v40 = vld [vmem:[%s4] sm:$0x3]
  %v42 = vlaneseq
  %v43 = vshrl.u32 %v42, 7
  %v44 = vsub.s32 0, %v43
  %v45 = vrot.slane %v40, %v44
  %v46 = vlaneseq
  %v47 = vshrl.u32 %v46, 7
  %v48 = vsub.s32 1, %v47
  %v49 = vrot.slane %v40, %v48
  %v60 = vunpack.c.l.b16 %v24
  %v61 = vunpack.c.l.b16 %v25
  %v62 = vunpack.c.l.b16 %v26
  %v63 = vunpack.c.l.b16 %v27
  %v64 = vunpack.c.l.b16 %v28
  %v65 = vunpack.c.l.b16 %v29
  %v66 = vunpack.c.l.b16 %v30
  %v67 = vunpack.c.l.b16 %v31
  %v68 = vpack.c.b16 %v61, %v60
  %v69 = vpack.c.b16 %v63, %v62
  %v70 = vpack.c.b16 %v65, %v64
  %v71 = vpack.c.b16 %v67, %v66
  %v80 = vunpack.c.l.b16 %v32
  %v81 = vunpack.c.h.b16 %v32
  %v82 = vunpack.c.l.b16 %v33
  %v83 = vunpack.c.h.b16 %v33
  %v84 = vunpack.c.l.b16 %v34
  %v85 = vunpack.c.h.b16 %v34
  %v86 = vunpack.c.l.b16 %v35
  %v87 = vunpack.c.h.b16 %v35
  %v88 = vunpack.c.l.b16 %v36
  %v89 = vunpack.c.h.b16 %v36
  %v90 = vunpack.c.l.b16 %v37
  %v91 = vunpack.c.h.b16 %v37
  %v92 = vunpack.c.l.b16 %v38
  %v93 = vunpack.c.h.b16 %v38
  %v94 = vunpack.c.l.b16 %v39
  %v95 = vunpack.c.h.b16 %v39
  %v96 = vpack.c.b16 %v82, %v80
  %v97 = vpack.c.b16 %v83, %v81
  %v98 = vpack.c.b16 %v86, %v84
  %v99 = vpack.c.b16 %v87, %v85
  %v100 = vpack.c.b16 %v90, %v88
  %v101 = vpack.c.b16 %v91, %v89
  %v102 = vpack.c.b16 %v94, %v92
  %v103 = vpack.c.b16 %v95, %v93
  %vm112 = vcmask 523264
  %v114 = vsel %vm112, %v68, 0
  %v117 = vsel %vm112, %v69, 0
  %v120 = vsel %vm112, %v70, 0
  %v123 = vsel %vm112, %v71, 0
  %125 = vmatprep.subr.bf16.mxu0 %v97
  %126 = vmatpush1.bf16.msra.mxu0 %v96
  %127 = vmatprep.subr.bf16.mxu0 %v99
  %128 = vmatpush1.bf16.msra.mxu0 %v98
  %129 = vmatprep.subr.bf16.mxu0 %v101
  %130 = vmatpush1.bf16.msra.mxu0 %v100
  %131 = vmatprep.subr.bf16.mxu0 %v103
  %132 = vmatpush1.bf16.msra.mxu0 %v102
  %133 = vmatprep.subr.bf16.mxu0 0
  %134 = vmatpush1.bf16.msra.mxu0 0
  %135 = vmatprep.subr.bf16.mxu0 0
  %136 = vmatpush1.bf16.msra.mxu0 0
  %137 = vmatprep.subr.bf16.mxu0 0
  %138 = vmatpush1.bf16.msra.mxu0 0
  %139 = vmatprep.subr.bf16.mxu0 0
  %140 = vmatpush1.bf16.msra.mxu0 0
  %141 = vmatprep.subr.bf16.mxu0 0
  %142 = vmatpush1.bf16.msra.mxu0 0
  %143 = vmatprep.subr.bf16.mxu0 0
  %144 = vmatpush1.bf16.msra.mxu0 0
  %145 = vmatprep.subr.bf16.mxu0 0
  %146 = vmatpush1.bf16.msra.mxu0 0
  %147 = vmatprep.subr.bf16.mxu0 0
  %148 = vmatpush1.bf16.msra.mxu0 0
  %149 = vmatprep.subr.bf16.mxu0 0
  %150 = vmatpush1.bf16.msra.mxu0 0
  %151 = vmatprep.subr.bf16.mxu0 0
  %152 = vmatpush1.bf16.msra.mxu0 0
  %153 = vmatprep.subr.bf16.mxu0 0
  %154 = vmatpush1.bf16.msra.mxu0 0
  %155 = vmatprep.subr.bf16.mxu0 0
  %156 = vmatpush1.bf16.msra.mxu0 0
  %157 = vmatprep.mubr.bf16.mxu0 0
  %158 = vmatmul.mubr.bf16.gmra.mrb[0].mxu0 %v114
  %v159 = vpop.f32.mrb[0].mxu0
  %v160 = vadd.f32 %v45, %v159
  %v161 = vpop.f32.mrb[0].mxu0
  %v162 = vadd.f32 %v49, %v161
  %v163 = vpop.f32.mrb[0].mxu0
  %v164 = vadd.f32 %v45, %v163
  %v165 = vpop.f32.mrb[0].mxu0
  %v166 = vadd.f32 %v49, %v165
  %167 = vmatprep.mubr.bf16.mxu0 0
  %168 = vmatmul.mubr.bf16.gmra.mrb[0].mxu0 %v117
  %v169 = vpop.f32.mrb[0].mxu0
  %v170 = vadd.f32 %v45, %v169
  %v171 = vpop.f32.mrb[0].mxu0
  %v172 = vadd.f32 %v49, %v171
  %v173 = vpop.f32.mrb[0].mxu0
  %v174 = vadd.f32 %v45, %v173
  %v175 = vpop.f32.mrb[0].mxu0
  %v176 = vadd.f32 %v49, %v175
  %177 = vmatprep.mubr.bf16.mxu0 0
  %178 = vmatmul.mubr.bf16.gmra.mrb[0].mxu0 %v120
  %v179 = vpop.f32.mrb[0].mxu0
  %v180 = vadd.f32 %v45, %v179
  %v181 = vpop.f32.mrb[0].mxu0
  %v182 = vadd.f32 %v49, %v181
  %v183 = vpop.f32.mrb[0].mxu0
  %v184 = vadd.f32 %v45, %v183
  %v185 = vpop.f32.mrb[0].mxu0
  %v186 = vadd.f32 %v49, %v185
  %187 = vmatprep.mubr.bf16.mxu0 0
  %188 = vmatmul.mubr.bf16.gmra.mrb[0].mxu0 %v123
  %v189 = vpop.f32.mrb[0].mxu0
  %v190 = vadd.f32 %v45, %v189
  %v191 = vpop.f32.mrb[0].mxu0
  %v192 = vadd.f32 %v49, %v191
  %v193 = vpop.f32.mrb[0].mxu0
  %v194 = vadd.f32 %v45, %v193
  %v195 = vpop.f32.mrb[0].mxu0
  %v196 = vadd.f32 %v49, %v195
  %197 = vdwg.mxu0
  %198 = vst [vmem:[#allocation2] sm:$0xff] %v160
  %199 = vst [vmem:[#allocation2 + $0x8] sm:$0xff] %v162
  %200 = vst [vmem:[#allocation2 + $0x10] sm:$0xff] %v164
  %201 = vst [vmem:[#allocation2 + $0x18] sm:$0xff] %v166
  %202 = vst [vmem:[#allocation2 + $0x20] sm:$0xff] %v170
  %203 = vst [vmem:[#allocation2 + $0x28] sm:$0xff] %v172
  %204 = vst [vmem:[#allocation2 + $0x30] sm:$0xff] %v174
  %205 = vst [vmem:[#allocation2 + $0x38] sm:$0xff] %v176
  %206 = vst [vmem:[#allocation2 + $0x40] sm:$0xff] %v180
  %207 = vst [vmem:[#allocation2 + $0x48] sm:$0xff] %v182
  %208 = vst [vmem:[#allocation2 + $0x50] sm:$0xff] %v184
  %209 = vst [vmem:[#allocation2 + $0x58] sm:$0xff] %v186
  %210 = vst [vmem:[#allocation2 + $0x60] sm:$0xff] %v190
  %211 = vst [vmem:[#allocation2 + $0x68] sm:$0xff] %v192
  %212 = vst [vmem:[#allocation2 + $0x70] sm:$0xff] %v194
  %213 = vst [vmem:[#allocation2 + $0x78] sm:$0xff] %v196
  %v214 = vld [vmem:[%s3] sm:$0xff]
  %v215 = vld [vmem:[%s3 + $0x8] sm:$0xff]
  %v216 = vld [vmem:[%s3 + $0x10] sm:$0xff]
  %v217 = vld [vmem:[%s3 + $0x18] sm:$0xff]
  %v218 = vld [vmem:[%s3 + $0x20] sm:$0xff]
  %v219 = vld [vmem:[%s3 + $0x28] sm:$0xff]
  %v220 = vld [vmem:[%s3 + $0x30] sm:$0xff]
  %v221 = vld [vmem:[%s3 + $0x38] sm:$0xff]
  %v222 = vld [vmem:[%s0] sm:$0xff]
  %v223 = vpack.c.bf16 0.0, 0.0
  %v232 = vunpack.c.l.b16 %v214
  %v233 = vunpack.c.h.b16 %v214
  %v234 = vunpack.c.l.b16 %v215
  %v235 = vunpack.c.h.b16 %v215
  %v236 = vunpack.c.l.b16 %v216
  %v237 = vunpack.c.h.b16 %v216
  %v238 = vunpack.c.l.b16 %v217
  %v239 = vunpack.c.h.b16 %v217
  %v240 = vunpack.c.l.b16 %v218
  %v241 = vunpack.c.h.b16 %v218
  %v242 = vunpack.c.l.b16 %v219
  %v243 = vunpack.c.h.b16 %v219
  %v244 = vunpack.c.l.b16 %v220
  %v245 = vunpack.c.h.b16 %v220
  %v246 = vunpack.c.l.b16 %v221
  %v247 = vunpack.c.h.b16 %v221
  %v248 = vpack.c.b16 %v234, %v232
  %v249 = vpack.c.b16 %v235, %v233
  %v250 = vpack.c.b16 %v238, %v236
  %v251 = vpack.c.b16 %v239, %v237
  %v252 = vpack.c.b16 %v242, %v240
  %v253 = vpack.c.b16 %v243, %v241
  %v254 = vpack.c.b16 %v246, %v244
  %v255 = vpack.c.b16 %v247, %v245
  %v265 = vsel %vm112, %v223, 0
  %267 = vmatprep.subr.bf16.mxu0 %v249
  %268 = vmatpush1.bf16.msra.mxu0 %v248
  %269 = vmatprep.subr.bf16.mxu0 %v251
  %270 = vmatpush1.bf16.msra.mxu0 %v250
  %271 = vmatprep.subr.bf16.mxu0 %v253
  %272 = vmatpush1.bf16.msra.mxu0 %v252
  %273 = vmatprep.subr.bf16.mxu0 %v255
  %274 = vmatpush1.bf16.msra.mxu0 %v254
  %275 = vmatprep.subr.bf16.mxu0 0
  %276 = vmatpush1.bf16.msra.mxu0 0
  %277 = vmatprep.subr.bf16.mxu0 0
  %278 = vmatpush1.bf16.msra.mxu0 0
  %279 = vmatprep.subr.bf16.mxu0 0
  %280 = vmatpush1.bf16.msra.mxu0 0
  %281 = vmatprep.subr.bf16.mxu0 0
  %282 = vmatpush1.bf16.msra.mxu0 0
  %283 = vmatprep.subr.bf16.mxu0 0
  %284 = vmatpush1.bf16.msra.mxu0 0
  %285 = vmatprep.subr.bf16.mxu0 0
  %286 = vmatpush1.bf16.msra.mxu0 0
  %287 = vmatprep.subr.bf16.mxu0 0
  %288 = vmatpush1.bf16.msra.mxu0 0
  %289 = vmatprep.subr.bf16.mxu0 0
  %290 = vmatpush1.bf16.msra.mxu0 0
  %291 = vmatprep.subr.bf16.mxu0 0
  %292 = vmatpush1.bf16.msra.mxu0 0
  %293 = vmatprep.subr.bf16.mxu0 0
  %294 = vmatpush1.bf16.msra.mxu0 0
  %295 = vmatprep.subr.bf16.mxu0 0
  %296 = vmatpush1.bf16.msra.mxu0 0
  %297 = vmatprep.subr.bf16.mxu0 0
  %298 = vmatpush1.bf16.msra.mxu0 0
  %299 = vmatprep.mubr.bf16.mxu0 0
  %300 = vmatmul.mubr.bf16.gmra.mrb[0].mxu0 %v265
  %v301 = vpop.f32.mrb[0].mxu0
  %v302 = vadd.f32 0.0, %v301
  %v303 = vpop.f32.mrb[0].mxu0
  %v304 = vadd.f32 0.0, %v303
  %v305 = vpop.f32.mrb[0].mxu0
  %v306 = vpop.f32.mrb[0].mxu0
  %307 = vdwg.mxu0
  %v308 = vld [vmem:[#allocation2] sm:$0xff]
  %v309 = vadd.f32 %v308, %v302
  %s310 = scalar_lea.vmem [#allocation2], 112
  %v311 = vld [vmem:[%s310 + $0x8] sm:$0xff]
  %v312 = vadd.f32 %v311, %v304
  %v313 = vxor.u32 %v309, 2147483648
  %v314 = vmul.f32 %v313, 1.442695
  %v315 = vpow.pop %v314
  %v316 = vadd.f32 %v315, 1.0
  %v317 = vrcp.pop %v316
  %v318 = vmul.f32 1.0, %v317
  %v319 = vtanh.pop %v309
  %v320 = vmul.f32 %v318, 0.0
  %322 = vrot.lane.b32.xlu0 %v319, 64
  %v323 = vpop.permute.xlu0 %322
  %v325 = vmul.f32 %v318, %v323
  %327 = vrot.lane.b32.xlu0 %v325, 32
  %v328 = vpop.permute.xlu0 %327
  %v330 = vadd.f32 %v320, %v328
  %v331 = vtanh.pop %v330
  %333 = vrot.lane.b32.xlu0 %v331, 64
  %v334 = vpop.permute.xlu0 %333
  %v336 = vmul.f32 %v318, %v334
  %v337 = vxor.u32 %v312, 2147483648
  %v338 = vmul.f32 %v337, 1.442695
  %v339 = vpow.pop %v338
  %v340 = vadd.f32 %v339, 1.0
  %v341 = vrcp.pop %v340
  %v342 = vmul.f32 1.0, %v341
  %v343 = vtanh.pop %v312
  %v344 = vmul.f32 %v342, 0.0
  %346 = vrot.lane.b32.xlu0 %v343, 64
  %v347 = vpop.permute.xlu0 %346
  %v349 = vmul.f32 %v342, %v347
  %351 = vrot.lane.b32.xlu0 %v349, 32
  %v352 = vpop.permute.xlu0 %351
  %v354 = vadd.f32 %v344, %v352
  %v355 = vtanh.pop %v354
  %357 = vrot.lane.b32.xlu0 %v355, 64
  %v358 = vpop.permute.xlu0 %357
  %v360 = vmul.f32 %v342, %v358
  %vm361 = vcmp.gt.s32.totalorder %v222, 0
  %vm362 = vcmp.gt.s32.totalorder %v222, 7
  %v363 = vsel %vm361, 1, 0
  %364 = vset.pattern.permute.xlu0 0
  %365 = vperm.xlu0 %364, %v363
  %v366 = vpop.permute.xlu0 %365
  %vm367 = vcmp.eq.s32.totalorder %v366, 1
  %v368 = vsel %vm367, %v336, 0.0
  %370 = vrot.lane.b32.xlu0 %v368, 32
  %v371 = vpop.permute.xlu0 %370
  %vm373 = vcmask 261120
  %374 = vst.msk [vmem:[%s5] sm:$0xff] %vm373, %v371
  %v375 = vsel %vm362, 1, 0
  %376 = vset.pattern.permute.xlu0 0
  %377 = vperm.xlu0 %376, %v375
  %v378 = vpop.permute.xlu0 %377
  %vm379 = vcmp.eq.s32.totalorder %v378, 1
  %v380 = vsel %vm379, %v360, 0.0
  %382 = vrot.lane.b32.xlu0 %v380, 64
  %v383 = vpop.permute.xlu0 %382
  %s385 = scalar_lea.vmem %s5, 56
  %vm386 = vcmask 523520
  %387 = vst.msk [vmem:[%s385] sm:$0xff] %vm386, %v383
  %v388 = vsel %vm367, %v330, 0.0
  %v389 = vsel %vm379, %v354, 0.0
  %v390 = vsel %vm373, %v371, %v383
  %v391 = vpack.c.bf16 %v390, %v390
  %v393 = vsel %vm112, %v391, 0
  %395 = vmatprep.subr.bf16.mxu0 %v249
  %396 = vmatpush1.bf16.msra.mxu0 %v248
  %397 = vmatprep.subr.bf16.mxu0 %v251
  %398 = vmatpush1.bf16.msra.mxu0 %v250
  %399 = vmatprep.subr.bf16.mxu0 %v253
  %400 = vmatpush1.bf16.msra.mxu0 %v252
  %401 = vmatprep.subr.bf16.mxu0 %v255
  %402 = vmatpush1.bf16.msra.mxu0 %v254
  %403 = vmatprep.subr.bf16.mxu0 0
  %404 = vmatpush1.bf16.msra.mxu0 0
  %405 = vmatprep.subr.bf16.mxu0 0
  %406 = vmatpush1.bf16.msra.mxu0 0
  %407 = vmatprep.subr.bf16.mxu0 0
  %408 = vmatpush1.bf16.msra.mxu0 0
  %409 = vmatprep.subr.bf16.mxu0 0
  %410 = vmatpush1.bf16.msra.mxu0 0
  %411 = vmatprep.subr.bf16.mxu0 0
  %412 = vmatpush1.bf16.msra.mxu0 0
  %413 = vmatprep.subr.bf16.mxu0 0
  %414 = vmatpush1.bf16.msra.mxu0 0
  %415 = vmatprep.subr.bf16.mxu0 0
  %416 = vmatpush1.bf16.msra.mxu0 0
  %417 = vmatprep.subr.bf16.mxu0 0
  %418 = vmatpush1.bf16.msra.mxu0 0
  %419 = vmatprep.subr.bf16.mxu0 0
  %420 = vmatpush1.bf16.msra.mxu0 0
  %421 = vmatprep.subr.bf16.mxu0 0
  %422 = vmatpush1.bf16.msra.mxu0 0
  %423 = vmatprep.subr.bf16.mxu0 0
  %424 = vmatpush1.bf16.msra.mxu0 0
  %425 = vmatprep.subr.bf16.mxu0 0
  %426 = vmatpush1.bf16.msra.mxu0 0
  %427 = vmatprep.mubr.bf16.mxu0 0
  %428 = vmatmul.mubr.bf16.gmra.mrb[0].mxu0 %v393
  %v429 = vpop.f32.mrb[0].mxu0
  %v430 = vadd.f32 0.0, %v429
  %v431 = vpop.f32.mrb[0].mxu0
  %v432 = vadd.f32 0.0, %v431
  %v433 = vpop.f32.mrb[0].mxu0
  %v434 = vpop.f32.mrb[0].mxu0
  %435 = vdwg.mxu0
  %s436 = scalar_lea.vmem [#allocation2], 16
  %v437 = vld [vmem:[%s436] sm:$0xff]
  %v438 = vadd.f32 %v437, %v430
  %s439 = scalar_lea.vmem [#allocation2], 96
  %v440 = vld [vmem:[%s439 + $0x8] sm:$0xff]
  %v441 = vadd.f32 %v440, %v432
  %v442 = vxor.u32 %v438, 2147483648
  %v443 = vmul.f32 %v442, 1.442695
  %v444 = vpow.pop %v443
  %v445 = vadd.f32 %v444, 1.0
  %v446 = vrcp.pop %v445
  %v447 = vmul.f32 1.0, %v446
  %v448 = vtanh.pop %v438
  %v449 = vmul.f32 %v447, %v388
  %451 = vrot.lane.b32.xlu0 %v448, 64
  %v452 = vpop.permute.xlu0 %451
  %v454 = vmul.f32 %v447, %v452
  %456 = vrot.lane.b32.xlu0 %v454, 32
  %v457 = vpop.permute.xlu0 %456
  %v459 = vadd.f32 %v449, %v457
  %v460 = vtanh.pop %v459
  %462 = vrot.lane.b32.xlu0 %v460, 64
  %v463 = vpop.permute.xlu0 %462
  %v465 = vmul.f32 %v447, %v463
  %v466 = vxor.u32 %v441, 2147483648
  %v467 = vmul.f32 %v466, 1.442695
  %v468 = vpow.pop %v467
  %v469 = vadd.f32 %v468, 1.0
  %v470 = vrcp.pop %v469
  %v471 = vmul.f32 1.0, %v470
  %v472 = vtanh.pop %v441
  %v473 = vmul.f32 %v471, %v389
  %475 = vrot.lane.b32.xlu0 %v472, 64
  %v476 = vpop.permute.xlu0 %475
  %v478 = vmul.f32 %v471, %v476
  %480 = vrot.lane.b32.xlu0 %v478, 32
  %v481 = vpop.permute.xlu0 %480
  %v483 = vadd.f32 %v473, %v481
  %v484 = vtanh.pop %v483
  %486 = vrot.lane.b32.xlu0 %v484, 64
  %v487 = vpop.permute.xlu0 %486
  %v489 = vmul.f32 %v471, %v487
  %vm490 = vcmp.gt.s32.totalorder %v222, 1
  %vm491 = vcmp.gt.s32.totalorder %v222, 6
  %v492 = vsel %vm490, 1, 0
  %493 = vset.pattern.permute.xlu0 0
  %494 = vperm.xlu0 %493, %v492
  %v495 = vpop.permute.xlu0 %494
  %vm496 = vcmp.eq.s32.totalorder %v495, 1
  %v497 = vsel %vm496, %v465, 0.0
  %499 = vrot.lane.b32.xlu0 %v497, 32
  %v500 = vpop.permute.xlu0 %499
  %s502 = scalar_lea.vmem %s5, 8
  %503 = vst.msk [vmem:[%s502] sm:$0xff] %vm373, %v500
  %v504 = vsel %vm491, 1, 0
  %505 = vset.pattern.permute.xlu0 0
  %506 = vperm.xlu0 %505, %v504
  %v507 = vpop.permute.xlu0 %506
  %vm508 = vcmp.eq.s32.totalorder %v507, 1
  %v509 = vsel %vm508, %v489, 0.0
  %511 = vrot.lane.b32.xlu0 %v509, 64
  %v512 = vpop.permute.xlu0 %511
  %s514 = scalar_lea.vmem %s5, 48
  %515 = vst.msk [vmem:[%s514] sm:$0xff] %vm386, %v512
  %v516 = vsel %vm496, %v465, %v368
  %v517 = vsel %vm496, %v459, %v388
  %v518 = vsel %vm508, %v489, %v380
  %v519 = vsel %vm508, %v483, %v389
  %521 = vrot.lane.b32.xlu0 %v516, 32
  %v522 = vpop.permute.xlu0 %521
  %525 = vrot.lane.b32.xlu0 %v518, 64
  %v526 = vpop.permute.xlu0 %525
  %v528 = vsel %vm373, %v522, %v526
  %v529 = vpack.c.bf16 %v528, %v528
  %v531 = vsel %vm112, %v529, 0
  %533 = vmatprep.subr.bf16.mxu0 %v249
  %534 = vmatpush1.bf16.msra.mxu0 %v248
  %535 = vmatprep.subr.bf16.mxu0 %v251
  %536 = vmatpush1.bf16.msra.mxu0 %v250
  %537 = vmatprep.subr.bf16.mxu0 %v253
  %538 = vmatpush1.bf16.msra.mxu0 %v252
  %539 = vmatprep.subr.bf16.mxu0 %v255
  %540 = vmatpush1.bf16.msra.mxu0 %v254
  %541 = vmatprep.subr.bf16.mxu0 0
  %542 = vmatpush1.bf16.msra.mxu0 0
  %543 = vmatprep.subr.bf16.mxu0 0
  %544 = vmatpush1.bf16.msra.mxu0 0
  %545 = vmatprep.subr.bf16.mxu0 0
  %546 = vmatpush1.bf16.msra.mxu0 0
  %547 = vmatprep.subr.bf16.mxu0 0
  %548 = vmatpush1.bf16.msra.mxu0 0
  %549 = vmatprep.subr.bf16.mxu0 0
  %550 = vmatpush1.bf16.msra.mxu0 0
  %551 = vmatprep.subr.bf16.mxu0 0
  %552 = vmatpush1.bf16.msra.mxu0 0
  %553 = vmatprep.subr.bf16.mxu0 0
  %554 = vmatpush1.bf16.msra.mxu0 0
  %555 = vmatprep.subr.bf16.mxu0 0
  %556 = vmatpush1.bf16.msra.mxu0 0
  %557 = vmatprep.subr.bf16.mxu0 0
  %558 = vmatpush1.bf16.msra.mxu0 0
  %559 = vmatprep.subr.bf16.mxu0 0
  %560 = vmatpush1.bf16.msra.mxu0 0
  %561 = vmatprep.subr.bf16.mxu0 0
  %562 = vmatpush1.bf16.msra.mxu0 0
  %563 = vmatprep.subr.bf16.mxu0 0
  %564 = vmatpush1.bf16.msra.mxu0 0
  %565 = vmatprep.mubr.bf16.mxu0 0
  %566 = vmatmul.mubr.bf16.gmra.mrb[0].mxu0 %v531
  %v567 = vpop.f32.mrb[0].mxu0
  %v568 = vadd.f32 0.0, %v567
  %v569 = vpop.f32.mrb[0].mxu0
  %v570 = vadd.f32 0.0, %v569
  %v571 = vpop.f32.mrb[0].mxu0
  %v572 = vpop.f32.mrb[0].mxu0
  %573 = vdwg.mxu0
  %s574 = scalar_lea.vmem [#allocation2], 32
  %v575 = vld [vmem:[%s574] sm:$0xff]
  %v576 = vadd.f32 %v575, %v568
  %s577 = scalar_lea.vmem [#allocation2], 80
  %v578 = vld [vmem:[%s577 + $0x8] sm:$0xff]
  %v579 = vadd.f32 %v578, %v570
  %v580 = vxor.u32 %v576, 2147483648
  %v581 = vmul.f32 %v580, 1.442695
  %v582 = vpow.pop %v581
  %v583 = vadd.f32 %v582, 1.0
  %v584 = vrcp.pop %v583
  %v585 = vmul.f32 1.0, %v584
  %v586 = vtanh.pop %v576
  %v587 = vmul.f32 %v585, %v517
  %589 = vrot.lane.b32.xlu0 %v586, 64
  %v590 = vpop.permute.xlu0 %589
  %v592 = vmul.f32 %v585, %v590
  %594 = vrot.lane.b32.xlu0 %v592, 32
  %v595 = vpop.permute.xlu0 %594
  %v597 = vadd.f32 %v587, %v595
  %v598 = vtanh.pop %v597
  %600 = vrot.lane.b32.xlu0 %v598, 64
  %v601 = vpop.permute.xlu0 %600
  %v603 = vmul.f32 %v585, %v601
  %v604 = vxor.u32 %v579, 2147483648
  %v605 = vmul.f32 %v604, 1.442695
  %v606 = vpow.pop %v605
  %v607 = vadd.f32 %v606, 1.0
  %v608 = vrcp.pop %v607
  %v609 = vmul.f32 1.0, %v608
  %v610 = vtanh.pop %v579
  %v611 = vmul.f32 %v609, %v519
  %613 = vrot.lane.b32.xlu0 %v610, 64
  %v614 = vpop.permute.xlu0 %613
  %v616 = vmul.f32 %v609, %v614
  %618 = vrot.lane.b32.xlu0 %v616, 32
  %v619 = vpop.permute.xlu0 %618
  %v621 = vadd.f32 %v611, %v619
  %v622 = vtanh.pop %v621
  %624 = vrot.lane.b32.xlu0 %v622, 64
  %v625 = vpop.permute.xlu0 %624
  %v627 = vmul.f32 %v609, %v625
  %vm628 = vcmp.gt.s32.totalorder %v222, 2
  %vm629 = vcmp.gt.s32.totalorder %v222, 5
  %v630 = vsel %vm628, 1, 0
  %631 = vset.pattern.permute.xlu0 0
  %632 = vperm.xlu0 %631, %v630
  %v633 = vpop.permute.xlu0 %632
  %vm634 = vcmp.eq.s32.totalorder %v633, 1
  %v635 = vsel %vm634, %v603, 0.0
  %637 = vrot.lane.b32.xlu0 %v635, 32
  %v638 = vpop.permute.xlu0 %637
  %s640 = scalar_lea.vmem %s5, 16
  %641 = vst.msk [vmem:[%s640] sm:$0xff] %vm373, %v638
  %v642 = vsel %vm629, 1, 0
  %643 = vset.pattern.permute.xlu0 0
  %644 = vperm.xlu0 %643, %v642
  %v645 = vpop.permute.xlu0 %644
  %vm646 = vcmp.eq.s32.totalorder %v645, 1
  %v647 = vsel %vm646, %v627, 0.0
  %649 = vrot.lane.b32.xlu0 %v647, 64
  %v650 = vpop.permute.xlu0 %649
  %s652 = scalar_lea.vmem %s5, 40
  %653 = vst.msk [vmem:[%s652] sm:$0xff] %vm386, %v650
  %v654 = vsel %vm634, %v603, %v516
  %v655 = vsel %vm634, %v597, %v517
  %v656 = vsel %vm646, %v627, %v518
  %v657 = vsel %vm646, %v621, %v519
  %659 = vrot.lane.b32.xlu0 %v654, 32
  %v660 = vpop.permute.xlu0 %659
  %663 = vrot.lane.b32.xlu0 %v656, 64
  %v664 = vpop.permute.xlu0 %663
  %v666 = vsel %vm373, %v660, %v664
  %v667 = vpack.c.bf16 %v666, %v666
  %v669 = vsel %vm112, %v667, 0
  %671 = vmatprep.subr.bf16.mxu0 %v249
  %672 = vmatpush1.bf16.msra.mxu0 %v248
  %673 = vmatprep.subr.bf16.mxu0 %v251
  %674 = vmatpush1.bf16.msra.mxu0 %v250
  %675 = vmatprep.subr.bf16.mxu0 %v253
  %676 = vmatpush1.bf16.msra.mxu0 %v252
  %677 = vmatprep.subr.bf16.mxu0 %v255
  %678 = vmatpush1.bf16.msra.mxu0 %v254
  %679 = vmatprep.subr.bf16.mxu0 0
  %680 = vmatpush1.bf16.msra.mxu0 0
  %681 = vmatprep.subr.bf16.mxu0 0
  %682 = vmatpush1.bf16.msra.mxu0 0
  %683 = vmatprep.subr.bf16.mxu0 0
  %684 = vmatpush1.bf16.msra.mxu0 0
  %685 = vmatprep.subr.bf16.mxu0 0
  %686 = vmatpush1.bf16.msra.mxu0 0
  %687 = vmatprep.subr.bf16.mxu0 0
  %688 = vmatpush1.bf16.msra.mxu0 0
  %689 = vmatprep.subr.bf16.mxu0 0
  %690 = vmatpush1.bf16.msra.mxu0 0
  %691 = vmatprep.subr.bf16.mxu0 0
  %692 = vmatpush1.bf16.msra.mxu0 0
  %693 = vmatprep.subr.bf16.mxu0 0
  %694 = vmatpush1.bf16.msra.mxu0 0
  %695 = vmatprep.subr.bf16.mxu0 0
  %696 = vmatpush1.bf16.msra.mxu0 0
  %697 = vmatprep.subr.bf16.mxu0 0
  %698 = vmatpush1.bf16.msra.mxu0 0
  %699 = vmatprep.subr.bf16.mxu0 0
  %700 = vmatpush1.bf16.msra.mxu0 0
  %701 = vmatprep.subr.bf16.mxu0 0
  %702 = vmatpush1.bf16.msra.mxu0 0
  %703 = vmatprep.mubr.bf16.mxu0 0
  %704 = vmatmul.mubr.bf16.gmra.mrb[0].mxu0 %v669
  %v705 = vpop.f32.mrb[0].mxu0
  %v706 = vadd.f32 0.0, %v705
  %v707 = vpop.f32.mrb[0].mxu0
  %v708 = vadd.f32 0.0, %v707
  %v709 = vpop.f32.mrb[0].mxu0
  %v710 = vpop.f32.mrb[0].mxu0
  %711 = vdwg.mxu0
  %s712 = scalar_lea.vmem [#allocation2], 48
  %v713 = vld [vmem:[%s712] sm:$0xff]
  %v714 = vadd.f32 %v713, %v706
  %s715 = scalar_lea.vmem [#allocation2], 64
  %v716 = vld [vmem:[%s715 + $0x8] sm:$0xff]
  %v717 = vadd.f32 %v716, %v708
  %v718 = vxor.u32 %v714, 2147483648
  %v719 = vmul.f32 %v718, 1.442695
  %v720 = vpow.pop %v719
  %v721 = vadd.f32 %v720, 1.0
  %v722 = vrcp.pop %v721
  %v723 = vmul.f32 1.0, %v722
  %v724 = vtanh.pop %v714
  %v725 = vmul.f32 %v723, %v655
  %727 = vrot.lane.b32.xlu0 %v724, 64
  %v728 = vpop.permute.xlu0 %727
  %v730 = vmul.f32 %v723, %v728
  %732 = vrot.lane.b32.xlu0 %v730, 32
  %v733 = vpop.permute.xlu0 %732
  %v735 = vadd.f32 %v725, %v733
  %v736 = vtanh.pop %v735
  %738 = vrot.lane.b32.xlu0 %v736, 64
  %v739 = vpop.permute.xlu0 %738
  %v741 = vmul.f32 %v723, %v739
  %v742 = vxor.u32 %v717, 2147483648
  %v743 = vmul.f32 %v742, 1.442695
  %v744 = vpow.pop %v743
  %v745 = vadd.f32 %v744, 1.0
  %v746 = vrcp.pop %v745
  %v747 = vmul.f32 1.0, %v746
  %v748 = vtanh.pop %v717
  %v749 = vmul.f32 %v747, %v657
  %751 = vrot.lane.b32.xlu0 %v748, 64
  %v752 = vpop.permute.xlu0 %751
  %v754 = vmul.f32 %v747, %v752
  %756 = vrot.lane.b32.xlu0 %v754, 32
  %v757 = vpop.permute.xlu0 %756
  %v759 = vadd.f32 %v749, %v757
  %v760 = vtanh.pop %v759
  %762 = vrot.lane.b32.xlu0 %v760, 64
  %v763 = vpop.permute.xlu0 %762
  %v765 = vmul.f32 %v747, %v763
  %vm766 = vcmp.gt.s32.totalorder %v222, 3
  %vm767 = vcmp.gt.s32.totalorder %v222, 4
  %v768 = vsel %vm766, 1, 0
  %769 = vset.pattern.permute.xlu0 0
  %770 = vperm.xlu0 %769, %v768
  %v771 = vpop.permute.xlu0 %770
  %vm772 = vcmp.eq.s32.totalorder %v771, 1
  %v773 = vsel %vm772, %v741, 0.0
  %775 = vrot.lane.b32.xlu0 %v773, 32
  %v776 = vpop.permute.xlu0 %775
  %s778 = scalar_lea.vmem %s5, 24
  %779 = vst.msk [vmem:[%s778] sm:$0xff] %vm373, %v776
  %v780 = vsel %vm767, 1, 0
  %781 = vset.pattern.permute.xlu0 0
  %782 = vperm.xlu0 %781, %v780
  %v783 = vpop.permute.xlu0 %782
  %vm784 = vcmp.eq.s32.totalorder %v783, 1
  %v785 = vsel %vm784, %v765, 0.0
  %787 = vrot.lane.b32.xlu0 %v785, 64
  %v788 = vpop.permute.xlu0 %787
  %s790 = scalar_lea.vmem %s5, 32
  %791 = vst.msk [vmem:[%s790] sm:$0xff] %vm386, %v788
  %v792 = vsel %vm772, %v741, %v654
  %v793 = vsel %vm772, %v735, %v655
  %v794 = vsel %vm784, %v765, %v656
  %v795 = vsel %vm784, %v759, %v657
  %797 = vrot.lane.b32.xlu0 %v792, 32
  %v798 = vpop.permute.xlu0 %797
  %801 = vrot.lane.b32.xlu0 %v794, 64
  %v802 = vpop.permute.xlu0 %801
  %v804 = vsel %vm373, %v798, %v802
  %v805 = vpack.c.bf16 %v804, %v804
  %v807 = vsel %vm112, %v805, 0
  %809 = vmatprep.subr.bf16.mxu0 %v249
  %810 = vmatpush1.bf16.msra.mxu0 %v248
  %811 = vmatprep.subr.bf16.mxu0 %v251
  %812 = vmatpush1.bf16.msra.mxu0 %v250
  %813 = vmatprep.subr.bf16.mxu0 %v253
  %814 = vmatpush1.bf16.msra.mxu0 %v252
  %815 = vmatprep.subr.bf16.mxu0 %v255
  %816 = vmatpush1.bf16.msra.mxu0 %v254
  %817 = vmatprep.subr.bf16.mxu0 0
  %818 = vmatpush1.bf16.msra.mxu0 0
  %819 = vmatprep.subr.bf16.mxu0 0
  %820 = vmatpush1.bf16.msra.mxu0 0
  %821 = vmatprep.subr.bf16.mxu0 0
  %822 = vmatpush1.bf16.msra.mxu0 0
  %823 = vmatprep.subr.bf16.mxu0 0
  %824 = vmatpush1.bf16.msra.mxu0 0
  %825 = vmatprep.subr.bf16.mxu0 0
  %826 = vmatpush1.bf16.msra.mxu0 0
  %827 = vmatprep.subr.bf16.mxu0 0
  %828 = vmatpush1.bf16.msra.mxu0 0
  %829 = vmatprep.subr.bf16.mxu0 0
  %830 = vmatpush1.bf16.msra.mxu0 0
  %831 = vmatprep.subr.bf16.mxu0 0
  %832 = vmatpush1.bf16.msra.mxu0 0
  %833 = vmatprep.subr.bf16.mxu0 0
  %834 = vmatpush1.bf16.msra.mxu0 0
  %835 = vmatprep.subr.bf16.mxu0 0
  %836 = vmatpush1.bf16.msra.mxu0 0
  %837 = vmatprep.subr.bf16.mxu0 0
  %838 = vmatpush1.bf16.msra.mxu0 0
  %839 = vmatprep.subr.bf16.mxu0 0
  %840 = vmatpush1.bf16.msra.mxu0 0
  %841 = vmatprep.mubr.bf16.mxu0 0
  %842 = vmatmul.mubr.bf16.gmra.mrb[0].mxu0 %v807
  %v843 = vpop.f32.mrb[0].mxu0
  %v844 = vadd.f32 0.0, %v843
  %v845 = vpop.f32.mrb[0].mxu0
  %v846 = vadd.f32 0.0, %v845
  %v847 = vpop.f32.mrb[0].mxu0
  %v848 = vpop.f32.mrb[0].mxu0
  %849 = vdwg.mxu0
  %v850 = vld [vmem:[%s715] sm:$0xff]
  %v851 = vadd.f32 %v850, %v844
  %v852 = vld [vmem:[%s712 + $0x8] sm:$0xff]
  %v853 = vadd.f32 %v852, %v846
  %v854 = vxor.u32 %v851, 2147483648
  %v855 = vmul.f32 %v854, 1.442695
  %v856 = vpow.pop %v855
  %v857 = vadd.f32 %v856, 1.0
  %v858 = vrcp.pop %v857
  %v859 = vmul.f32 1.0, %v858
  %v860 = vtanh.pop %v851
  %v861 = vmul.f32 %v859, %v793
  %863 = vrot.lane.b32.xlu0 %v860, 64
  %v864 = vpop.permute.xlu0 %863
  %v866 = vmul.f32 %v859, %v864
  %868 = vrot.lane.b32.xlu0 %v866, 32
  %v869 = vpop.permute.xlu0 %868
  %v871 = vadd.f32 %v861, %v869
  %v872 = vtanh.pop %v871
  %874 = vrot.lane.b32.xlu0 %v872, 64
  %v875 = vpop.permute.xlu0 %874
  %v877 = vmul.f32 %v859, %v875
  %v878 = vxor.u32 %v853, 2147483648
  %v879 = vmul.f32 %v878, 1.442695
  %v880 = vpow.pop %v879
  %v881 = vadd.f32 %v880, 1.0
  %v882 = vrcp.pop %v881
  %v883 = vmul.f32 1.0, %v882
  %v884 = vtanh.pop %v853
  %v885 = vmul.f32 %v883, %v795
  %887 = vrot.lane.b32.xlu0 %v884, 64
  %v888 = vpop.permute.xlu0 %887
  %v890 = vmul.f32 %v883, %v888
  %892 = vrot.lane.b32.xlu0 %v890, 32
  %v893 = vpop.permute.xlu0 %892
  %v895 = vadd.f32 %v885, %v893
  %v896 = vtanh.pop %v895
  %898 = vrot.lane.b32.xlu0 %v896, 64
  %v899 = vpop.permute.xlu0 %898
  %v901 = vmul.f32 %v883, %v899
  %v902 = vsel %vm784, %v877, 0.0
  %904 = vrot.lane.b32.xlu0 %v902, 32
  %v905 = vpop.permute.xlu0 %904
  %907 = vst.msk [vmem:[%s790] sm:$0xff] %vm373, %v905
  %v908 = vsel %vm772, %v901, 0.0
  %910 = vrot.lane.b32.xlu0 %v908, 64
  %v911 = vpop.permute.xlu0 %910
  %913 = vst.msk [vmem:[%s778] sm:$0xff] %vm386, %v911
  %v914 = vsel %vm784, %v877, %v792
  %v915 = vsel %vm784, %v871, %v793
  %v916 = vsel %vm772, %v901, %v794
  %v917 = vsel %vm772, %v895, %v795
  %919 = vrot.lane.b32.xlu0 %v914, 32
  %v920 = vpop.permute.xlu0 %919
  %923 = vrot.lane.b32.xlu0 %v916, 64
  %v924 = vpop.permute.xlu0 %923
  %v926 = vsel %vm373, %v920, %v924
  %v927 = vpack.c.bf16 %v926, %v926
  %v929 = vsel %vm112, %v927, 0
  %931 = vmatprep.subr.bf16.mxu0 %v249
  %932 = vmatpush1.bf16.msra.mxu0 %v248
  %933 = vmatprep.subr.bf16.mxu0 %v251
  %934 = vmatpush1.bf16.msra.mxu0 %v250
  %935 = vmatprep.subr.bf16.mxu0 %v253
  %936 = vmatpush1.bf16.msra.mxu0 %v252
  %937 = vmatprep.subr.bf16.mxu0 %v255
  %938 = vmatpush1.bf16.msra.mxu0 %v254
  %939 = vmatprep.subr.bf16.mxu0 0
  %940 = vmatpush1.bf16.msra.mxu0 0
  %941 = vmatprep.subr.bf16.mxu0 0
  %942 = vmatpush1.bf16.msra.mxu0 0
  %943 = vmatprep.subr.bf16.mxu0 0
  %944 = vmatpush1.bf16.msra.mxu0 0
  %945 = vmatprep.subr.bf16.mxu0 0
  %946 = vmatpush1.bf16.msra.mxu0 0
  %947 = vmatprep.subr.bf16.mxu0 0
  %948 = vmatpush1.bf16.msra.mxu0 0
  %949 = vmatprep.subr.bf16.mxu0 0
  %950 = vmatpush1.bf16.msra.mxu0 0
  %951 = vmatprep.subr.bf16.mxu0 0
  %952 = vmatpush1.bf16.msra.mxu0 0
  %953 = vmatprep.subr.bf16.mxu0 0
  %954 = vmatpush1.bf16.msra.mxu0 0
  %955 = vmatprep.subr.bf16.mxu0 0
  %956 = vmatpush1.bf16.msra.mxu0 0
  %957 = vmatprep.subr.bf16.mxu0 0
  %958 = vmatpush1.bf16.msra.mxu0 0
  %959 = vmatprep.subr.bf16.mxu0 0
  %960 = vmatpush1.bf16.msra.mxu0 0
  %961 = vmatprep.subr.bf16.mxu0 0
  %962 = vmatpush1.bf16.msra.mxu0 0
  %963 = vmatprep.mubr.bf16.mxu0 0
  %964 = vmatmul.mubr.bf16.gmra.mrb[0].mxu0 %v929
  %v965 = vpop.f32.mrb[0].mxu0
  %v966 = vadd.f32 0.0, %v965
  %v967 = vpop.f32.mrb[0].mxu0
  %v968 = vadd.f32 0.0, %v967
  %v969 = vpop.f32.mrb[0].mxu0
  %v970 = vpop.f32.mrb[0].mxu0
  %971 = vdwg.mxu0
  %v972 = vld [vmem:[%s577] sm:$0xff]
  %v973 = vadd.f32 %v972, %v966
  %v974 = vld [vmem:[%s574 + $0x8] sm:$0xff]
  %v975 = vadd.f32 %v974, %v968
  %v976 = vxor.u32 %v973, 2147483648
  %v977 = vmul.f32 %v976, 1.442695
  %v978 = vpow.pop %v977
  %v979 = vadd.f32 %v978, 1.0
  %v980 = vrcp.pop %v979
  %v981 = vmul.f32 1.0, %v980
  %v982 = vtanh.pop %v973
  %v983 = vmul.f32 %v981, %v915
  %985 = vrot.lane.b32.xlu0 %v982, 64
  %v986 = vpop.permute.xlu0 %985
  %v988 = vmul.f32 %v981, %v986
  %990 = vrot.lane.b32.xlu0 %v988, 32
  %v991 = vpop.permute.xlu0 %990
  %v993 = vadd.f32 %v983, %v991
  %v994 = vtanh.pop %v993
  %996 = vrot.lane.b32.xlu0 %v994, 64
  %v997 = vpop.permute.xlu0 %996
  %v999 = vmul.f32 %v981, %v997
  %v1000 = vxor.u32 %v975, 2147483648
  %v1001 = vmul.f32 %v1000, 1.442695
  %v1002 = vpow.pop %v1001
  %v1003 = vadd.f32 %v1002, 1.0
  %v1004 = vrcp.pop %v1003
  %v1005 = vmul.f32 1.0, %v1004
  %v1006 = vtanh.pop %v975
  %v1007 = vmul.f32 %v1005, %v917
  %1009 = vrot.lane.b32.xlu0 %v1006, 64
  %v1010 = vpop.permute.xlu0 %1009
  %v1012 = vmul.f32 %v1005, %v1010
  %1014 = vrot.lane.b32.xlu0 %v1012, 32
  %v1015 = vpop.permute.xlu0 %1014
  %v1017 = vadd.f32 %v1007, %v1015
  %v1018 = vtanh.pop %v1017
  %1020 = vrot.lane.b32.xlu0 %v1018, 64
  %v1021 = vpop.permute.xlu0 %1020
  %v1023 = vmul.f32 %v1005, %v1021
  %v1024 = vsel %vm646, %v999, 0.0
  %1026 = vrot.lane.b32.xlu0 %v1024, 32
  %v1027 = vpop.permute.xlu0 %1026
  %1029 = vst.msk [vmem:[%s652] sm:$0xff] %vm373, %v1027
  %v1030 = vsel %vm634, %v1023, 0.0
  %1032 = vrot.lane.b32.xlu0 %v1030, 64
  %v1033 = vpop.permute.xlu0 %1032
  %1035 = vst.msk [vmem:[%s640] sm:$0xff] %vm386, %v1033
  %v1036 = vsel %vm646, %v999, %v914
  %v1037 = vsel %vm646, %v993, %v915
  %v1038 = vsel %vm634, %v1023, %v916
  %v1039 = vsel %vm634, %v1017, %v917
  %1041 = vrot.lane.b32.xlu0 %v1036, 32
  %v1042 = vpop.permute.xlu0 %1041
  %1045 = vrot.lane.b32.xlu0 %v1038, 64
  %v1046 = vpop.permute.xlu0 %1045
  %v1048 = vsel %vm373, %v1042, %v1046
  %v1049 = vpack.c.bf16 %v1048, %v1048
  %v1051 = vsel %vm112, %v1049, 0
  %1053 = vmatprep.subr.bf16.mxu0 %v249
  %1054 = vmatpush1.bf16.msra.mxu0 %v248
  %1055 = vmatprep.subr.bf16.mxu0 %v251
  %1056 = vmatpush1.bf16.msra.mxu0 %v250
  %1057 = vmatprep.subr.bf16.mxu0 %v253
  %1058 = vmatpush1.bf16.msra.mxu0 %v252
  %1059 = vmatprep.subr.bf16.mxu0 %v255
  %1060 = vmatpush1.bf16.msra.mxu0 %v254
  %1061 = vmatprep.subr.bf16.mxu0 0
  %1062 = vmatpush1.bf16.msra.mxu0 0
  %1063 = vmatprep.subr.bf16.mxu0 0
  %1064 = vmatpush1.bf16.msra.mxu0 0
  %1065 = vmatprep.subr.bf16.mxu0 0
  %1066 = vmatpush1.bf16.msra.mxu0 0
  %1067 = vmatprep.subr.bf16.mxu0 0
  %1068 = vmatpush1.bf16.msra.mxu0 0
  %1069 = vmatprep.subr.bf16.mxu0 0
  %1070 = vmatpush1.bf16.msra.mxu0 0
  %1071 = vmatprep.subr.bf16.mxu0 0
  %1072 = vmatpush1.bf16.msra.mxu0 0
  %1073 = vmatprep.subr.bf16.mxu0 0
  %1074 = vmatpush1.bf16.msra.mxu0 0
  %1075 = vmatprep.subr.bf16.mxu0 0
  %1076 = vmatpush1.bf16.msra.mxu0 0
  %1077 = vmatprep.subr.bf16.mxu0 0
  %1078 = vmatpush1.bf16.msra.mxu0 0
  %1079 = vmatprep.subr.bf16.mxu0 0
  %1080 = vmatpush1.bf16.msra.mxu0 0
  %1081 = vmatprep.subr.bf16.mxu0 0
  %1082 = vmatpush1.bf16.msra.mxu0 0
  %1083 = vmatprep.subr.bf16.mxu0 0
  %1084 = vmatpush1.bf16.msra.mxu0 0
  %1085 = vmatprep.mubr.bf16.mxu0 0
  %1086 = vmatmul.mubr.bf16.gmra.mrb[0].mxu0 %v1051
  %v1087 = vpop.f32.mrb[0].mxu0
  %v1088 = vadd.f32 0.0, %v1087
  %v1089 = vpop.f32.mrb[0].mxu0
  %v1090 = vadd.f32 0.0, %v1089
  %v1091 = vpop.f32.mrb[0].mxu0
  %v1092 = vpop.f32.mrb[0].mxu0
  %1093 = vdwg.mxu0
  %v1094 = vld [vmem:[%s439] sm:$0xff]
  %v1095 = vadd.f32 %v1094, %v1088
  %v1096 = vld [vmem:[%s436 + $0x8] sm:$0xff]
  %v1097 = vadd.f32 %v1096, %v1090
  %v1098 = vxor.u32 %v1095, 2147483648
  %v1099 = vmul.f32 %v1098, 1.442695
  %v1100 = vpow.pop %v1099
  %v1101 = vadd.f32 %v1100, 1.0
  %v1102 = vrcp.pop %v1101
  %v1103 = vmul.f32 1.0, %v1102
  %v1104 = vtanh.pop %v1095
  %v1105 = vmul.f32 %v1103, %v1037
  %1107 = vrot.lane.b32.xlu0 %v1104, 64
  %v1108 = vpop.permute.xlu0 %1107
  %v1110 = vmul.f32 %v1103, %v1108
  %1112 = vrot.lane.b32.xlu0 %v1110, 32
  %v1113 = vpop.permute.xlu0 %1112
  %v1115 = vadd.f32 %v1105, %v1113
  %v1116 = vtanh.pop %v1115
  %1118 = vrot.lane.b32.xlu0 %v1116, 64
  %v1119 = vpop.permute.xlu0 %1118
  %v1121 = vmul.f32 %v1103, %v1119
  %v1122 = vxor.u32 %v1097, 2147483648
  %v1123 = vmul.f32 %v1122, 1.442695
  %v1124 = vpow.pop %v1123
  %v1125 = vadd.f32 %v1124, 1.0
  %v1126 = vrcp.pop %v1125
  %v1127 = vmul.f32 1.0, %v1126
  %v1128 = vtanh.pop %v1097
  %v1129 = vmul.f32 %v1127, %v1039
  %1131 = vrot.lane.b32.xlu0 %v1128, 64
  %v1132 = vpop.permute.xlu0 %1131
  %v1134 = vmul.f32 %v1127, %v1132
  %1136 = vrot.lane.b32.xlu0 %v1134, 32
  %v1137 = vpop.permute.xlu0 %1136
  %v1139 = vadd.f32 %v1129, %v1137
  %v1140 = vtanh.pop %v1139
  %1142 = vrot.lane.b32.xlu0 %v1140, 64
  %v1143 = vpop.permute.xlu0 %1142
  %v1145 = vmul.f32 %v1127, %v1143
  %v1146 = vsel %vm508, %v1121, 0.0
  %1148 = vrot.lane.b32.xlu0 %v1146, 32
  %v1149 = vpop.permute.xlu0 %1148
  %1151 = vst.msk [vmem:[%s514] sm:$0xff] %vm373, %v1149
  %v1152 = vsel %vm496, %v1145, 0.0
  %1154 = vrot.lane.b32.xlu0 %v1152, 64
  %v1155 = vpop.permute.xlu0 %1154
  %1157 = vst.msk [vmem:[%s502] sm:$0xff] %vm386, %v1155
  %v1158 = vsel %vm508, %v1121, %v1036
  %v1159 = vsel %vm508, %v1115, %v1037
  %v1160 = vsel %vm496, %v1145, %v1038
  %v1161 = vsel %vm496, %v1139, %v1039
  %1163 = vrot.lane.b32.xlu0 %v1158, 32
  %v1164 = vpop.permute.xlu0 %1163
  %1167 = vrot.lane.b32.xlu0 %v1160, 64
  %v1168 = vpop.permute.xlu0 %1167
  %v1170 = vsel %vm373, %v1164, %v1168
  %v1171 = vpack.c.bf16 %v1170, %v1170
  %v1173 = vsel %vm112, %v1171, 0
  %1175 = vmatprep.subr.bf16.mxu0 %v249
  %1176 = vmatpush1.bf16.msra.mxu0 %v248
  %1177 = vmatprep.subr.bf16.mxu0 %v251
  %1178 = vmatpush1.bf16.msra.mxu0 %v250
  %1179 = vmatprep.subr.bf16.mxu0 %v253
  %1180 = vmatpush1.bf16.msra.mxu0 %v252
  %1181 = vmatprep.subr.bf16.mxu0 %v255
  %1182 = vmatpush1.bf16.msra.mxu0 %v254
  %1183 = vmatprep.subr.bf16.mxu0 0
  %1184 = vmatpush1.bf16.msra.mxu0 0
  %1185 = vmatprep.subr.bf16.mxu0 0
  %1186 = vmatpush1.bf16.msra.mxu0 0
  %1187 = vmatprep.subr.bf16.mxu0 0
  %1188 = vmatpush1.bf16.msra.mxu0 0
  %1189 = vmatprep.subr.bf16.mxu0 0
  %1190 = vmatpush1.bf16.msra.mxu0 0
  %1191 = vmatprep.subr.bf16.mxu0 0
  %1192 = vmatpush1.bf16.msra.mxu0 0
  %1193 = vmatprep.subr.bf16.mxu0 0
  %1194 = vmatpush1.bf16.msra.mxu0 0
  %1195 = vmatprep.subr.bf16.mxu0 0
  %1196 = vmatpush1.bf16.msra.mxu0 0
  %1197 = vmatprep.subr.bf16.mxu0 0
  %1198 = vmatpush1.bf16.msra.mxu0 0
  %1199 = vmatprep.subr.bf16.mxu0 0
  %1200 = vmatpush1.bf16.msra.mxu0 0
  %1201 = vmatprep.subr.bf16.mxu0 0
  %1202 = vmatpush1.bf16.msra.mxu0 0
  %1203 = vmatprep.subr.bf16.mxu0 0
  %1204 = vmatpush1.bf16.msra.mxu0 0
  %1205 = vmatprep.subr.bf16.mxu0 0
  %1206 = vmatpush1.bf16.msra.mxu0 0
  %1207 = vmatprep.mubr.bf16.mxu0 0
  %1208 = vmatmul.mubr.bf16.gmra.mrb[0].mxu0 %v1173
  %v1209 = vpop.f32.mrb[0].mxu0
  %v1210 = vadd.f32 0.0, %v1209
  %v1211 = vpop.f32.mrb[0].mxu0
  %v1212 = vadd.f32 0.0, %v1211
  %v1213 = vpop.f32.mrb[0].mxu0
  %v1214 = vpop.f32.mrb[0].mxu0
  %1215 = vdwg.mxu0
  %v1216 = vld [vmem:[%s310] sm:$0xff]
  %v1217 = vadd.f32 %v1216, %v1210
  %v1218 = vld [vmem:[#allocation2 + $0x8] sm:$0xff]
  %v1219 = vadd.f32 %v1218, %v1212
  %v1220 = vxor.u32 %v1217, 2147483648
  %v1221 = vmul.f32 %v1220, 1.442695
  %v1222 = vpow.pop %v1221
  %v1223 = vadd.f32 %v1222, 1.0
  %v1224 = vrcp.pop %v1223
  %v1225 = vmul.f32 1.0, %v1224
  %v1226 = vtanh.pop %v1217
  %v1227 = vmul.f32 %v1225, %v1159
  %1229 = vrot.lane.b32.xlu0 %v1226, 64
  %v1230 = vpop.permute.xlu0 %1229
  %v1232 = vmul.f32 %v1225, %v1230
  %1234 = vrot.lane.b32.xlu0 %v1232, 32
  %v1235 = vpop.permute.xlu0 %1234
  %v1237 = vadd.f32 %v1227, %v1235
  %v1238 = vtanh.pop %v1237
  %1240 = vrot.lane.b32.xlu0 %v1238, 64
  %v1241 = vpop.permute.xlu0 %1240
  %v1243 = vmul.f32 %v1225, %v1241
  %v1244 = vxor.u32 %v1219, 2147483648
  %v1245 = vmul.f32 %v1244, 1.442695
  %v1246 = vpow.pop %v1245
  %v1247 = vadd.f32 %v1246, 1.0
  %v1248 = vrcp.pop %v1247
  %v1249 = vmul.f32 1.0, %v1248
  %v1250 = vtanh.pop %v1219
  %v1251 = vmul.f32 %v1249, %v1161
  %1253 = vrot.lane.b32.xlu0 %v1250, 64
  %v1254 = vpop.permute.xlu0 %1253
  %v1256 = vmul.f32 %v1249, %v1254
  %1258 = vrot.lane.b32.xlu0 %v1256, 32
  %v1259 = vpop.permute.xlu0 %1258
  %v1261 = vadd.f32 %v1251, %v1259
  %v1262 = vtanh.pop %v1261
  %1264 = vrot.lane.b32.xlu0 %v1262, 64
  %v1265 = vpop.permute.xlu0 %1264
  %v1267 = vmul.f32 %v1249, %v1265
  %v1268 = vsel %vm379, %v1243, 0.0
  %1270 = vrot.lane.b32.xlu0 %v1268, 32
  %v1271 = vpop.permute.xlu0 %1270
  %1273 = vst.msk [vmem:[%s385] sm:$0xff] %vm373, %v1271
  %v1274 = vsel %vm367, %v1267, 0.0
  %1276 = vrot.lane.b32.xlu0 %v1274, 64
  %v1277 = vpop.permute.xlu0 %1276
  %1279 = vst.msk [vmem:[%s5] sm:$0xff] %vm386, %v1277
  %v1280 = vsel %vm379, %v1243, %v1158
  %v1281 = vsel %vm379, %v1237, %v1159
  %v1282 = vsel %vm367, %v1267, %v1160
  %v1283 = vsel %vm367, %v1261, %v1161
  %1285 = vrot.lane.b32.xlu0 %v1280, 32
  %v1286 = vpop.permute.xlu0 %1285
  %1289 = vrot.lane.b32.xlu0 %v1282, 64
  %v1290 = vpop.permute.xlu0 %1289
  %v1292 = vsel %vm373, %v1286, %v1290
  %1293 = vst.msk [vmem:[%s6] sm:$0xff] %vm112, %v1292
  %1295 = vrot.lane.b32.xlu0 %v1281, 96
  %v1296 = vpop.permute.xlu0 %1295
  %v1298 = vsel %vm373, %v1296, %v1283
  %1299 = vst.msk [vmem:[%s7] sm:$0xff] %vm112, %v1298
  // Predicated region
  $region22: #{blstm_forward.3} parent=0 // pred_check
    _
  $region23: #{blstm_forward.3} parent=0 // pred_check_branch
    %1301 = sbr.rel (0) target = $region25
  $region24: #{blstm_forward.3} parent=0 // pred_region
    _
  $region25: #{blstm_forward.3} parent=0 // pred_fallthru
    _
  // Predicated region
  $region26: #{blstm_forward.3} parent=0 // pred_check
    _
  $region27: #{blstm_forward.3} parent=0 // pred_check_branch
    %1303 = sbr.rel (0) target = $region29
  $region28: #{blstm_forward.3} parent=0 // pred_region
    _
  $region29: #{blstm_forward.3} parent=0 // pred_fallthru
    _
  // Predicated region
  $region30: #{blstm_forward.3} parent=0 // pred_check
    _
  $region31: #{blstm_forward.3} parent=0 // pred_check_branch
    %1305 = sbr.rel (0) target = $region33
  $region32: #{blstm_forward.3} parent=0 // pred_region
    _
  $region33: #{blstm_forward.3} parent=0 // pred_fallthru
    _
  // Predicated region
  $region34: #{blstm_forward.3} parent=0 // pred_check
    _
  $region35: #{blstm_forward.3} parent=0 // pred_check_branch
    %1307 = sbr.rel (0) target = $region37
  $region36: #{blstm_forward.3} parent=0 // pred_region
    _
  $region37: #{blstm_forward.3} parent=0 // pred_fallthru
    _
  // Predicated region
  $region38: #{blstm_forward.3} parent=0 // pred_check
    _
  $region39: #{blstm_forward.3} parent=0 // pred_check_branch
    %1309 = sbr.rel (0) target = $region41
  $region40: #{blstm_forward.3} parent=0 // pred_region
    _
  $region41: #{blstm_forward.3} parent=0 // pred_fallthru
    _
  // Predicated region
  $region42: #{blstm_forward.3} parent=0 // pred_check
    _
  $region43: #{blstm_forward.3} parent=0 // pred_check_branch
    %1311 = sbr.rel (0) target = $region45
  $region44: #{blstm_forward.3} parent=0 // pred_region
    _
  $region45: #{blstm_forward.3} parent=0 // pred_fallthru
    _

// kernel: blstm_forward.2
$region0: #{blstm_forward.2}
  #allocation0 [shape = 'u32[]', space=smem, size = 0x4, offset = 0x4, fixed_abs, tag = 'smem constant byte address 0x4 - core index']
  #allocation1 [shape = 'u32[144,128]{1,0:T(1,128)}', space=vmem, size = 0x12000, scoped, tag = 'internal scratch']
  #allocation2 [shape = 'f32[8,8,256]{2,1,0:T(8,128)}', space=vmem, size = 0x10000, scoped, tag = 'scratch operand']
  %s0 = inlined_call_operand.vmem [shape: s32[8,1], index: 0, kind: input, shape index: {}]
  %s1 = inlined_call_operand.vmem [shape: bf16[64,16], index: 1, kind: input, shape index: {}]
  %s2 = inlined_call_operand.vmem [shape: bf16[16,256], index: 2, kind: input, shape index: {}]
  %s3 = inlined_call_operand.vmem [shape: bf16[64,256], index: 3, kind: input, shape index: {}]
  %s4 = inlined_call_operand.vmem [shape: f32[1,256], index: 4, kind: input, shape index: {}]
  %s5 = inlined_call_operand.vmem [shape: f32[8,8,64], index: 5, kind: output, shape index: {0}]
  %s6 = inlined_call_operand.vmem [shape: f32[8,64], index: 6, kind: output, shape index: {1}]
  %s7 = inlined_call_operand.vmem [shape: f32[8,64], index: 7, kind: output, shape index: {2}]
  %8 = xla_tuple %s5, %s6, %s7
  %s9 = sld [smem:[#allocation0]]
  $region46: #{blstm_forward.2} parent=0
    _
  %s11 = ssub.s32 1, %s9
  %s12 = scalar_select 0, %s11, %s9
  // Predicated region
  $region2: #{blstm_forward.2} parent=0 // pred_check
    _
  $region3: #{blstm_forward.2} parent=0 // pred_check_branch
    %14 = sbr.rel (0) target = $region5
  $region4: #{blstm_forward.2} parent=0 // pred_region
    _
  $region5: #{blstm_forward.2} parent=0 // pred_fallthru
    _
  // Predicated region
  $region6: #{blstm_forward.2} parent=0 // pred_check
    _
  $region7: #{blstm_forward.2} parent=0 // pred_check_branch
    %16 = sbr.rel (0) target = $region9
  $region8: #{blstm_forward.2} parent=0 // pred_region
    _
  $region9: #{blstm_forward.2} parent=0 // pred_fallthru
    _
  // Predicated region
  $region10: #{blstm_forward.2} parent=0 // pred_check
    _
  $region11: #{blstm_forward.2} parent=0 // pred_check_branch
    %18 = sbr.rel (0) target = $region13
  $region12: #{blstm_forward.2} parent=0 // pred_region
    _
  $region13: #{blstm_forward.2} parent=0 // pred_fallthru
    _
  // Predicated region
  $region14: #{blstm_forward.2} parent=0 // pred_check
    _
  $region15: #{blstm_forward.2} parent=0 // pred_check_branch
    %20 = sbr.rel (0) target = $region17
  $region16: #{blstm_forward.2} parent=0 // pred_region
    _
  $region17: #{blstm_forward.2} parent=0 // pred_fallthru
    _
  // Predicated region
  $region18: #{blstm_forward.2} parent=0 // pred_check
    _
  $region19: #{blstm_forward.2} parent=0 // pred_check_branch
    %22 = sbr.rel (0) target = $region21
  $region20: #{blstm_forward.2} parent=0 // pred_region
    _
  $region21: #{blstm_forward.2} parent=0 // pred_fallthru
    _
  %v24 = vld [vmem:[%s1] sm:$0xf]
  %v25 = vld [vmem:[%s1 + $0x4] sm:$0xf]
  %v26 = vld [vmem:[%s1 + $0x8] sm:$0xf]
  %v27 = vld [vmem:[%s1 + $0xc] sm:$0xf]
  %v28 = vld [vmem:[%s1 + $0x10] sm:$0xf]
  %v29 = vld [vmem:[%s1 + $0x14] sm:$0xf]
  %v30 = vld [vmem:[%s1 + $0x18] sm:$0xf]
  %v31 = vld [vmem:[%s1 + $0x1c] sm:$0xf]
  %v32 = vld [vmem:[%s2] sm:$0xff]
  %v33 = vld [vmem:[%s2 + $0x8] sm:$0xff]
  %v34 = vld [vmem:[%s4] sm:$0x3]
  %v36 = vlaneseq
  %v37 = vshrl.u32 %v36, 7
  %v38 = vsub.s32 0, %v37
  %v39 = vrot.slane %v34, %v38
  %v40 = vlaneseq
  %v41 = vshrl.u32 %v40, 7
  %v42 = vsub.s32 1, %v41
  %v43 = vrot.slane %v34, %v42
  %v54 = vunpack.c.l.b16 %v24
  %v55 = vunpack.c.l.b16 %v25
  %v56 = vunpack.c.l.b16 %v26
  %v57 = vunpack.c.l.b16 %v27
  %v58 = vunpack.c.l.b16 %v28
  %v59 = vunpack.c.l.b16 %v29
  %v60 = vunpack.c.l.b16 %v30
  %v61 = vunpack.c.l.b16 %v31
  %v62 = vpack.c.b16 %v55, %v54
  %v63 = vpack.c.b16 %v57, %v56
  %v64 = vpack.c.b16 %v59, %v58
  %v65 = vpack.c.b16 %v61, %v60
  %v68 = vunpack.c.l.b16 %v32
  %v69 = vunpack.c.h.b16 %v32
  %v70 = vunpack.c.l.b16 %v33
  %v71 = vunpack.c.h.b16 %v33
  %v72 = vpack.c.b16 %v70, %v68
  %v73 = vpack.c.b16 %v71, %v69
  %vm76 = vcmask 130048
  %v78 = vsel %vm76, %v62, 0
  %v81 = vsel %vm76, %v63, 0
  %v84 = vsel %vm76, %v64, 0
  %v87 = vsel %vm76, %v65, 0
  %89 = vmatprep.subr.bf16.mxu0 %v73
  %90 = vmatpush1.bf16.msra.mxu0 %v72
  %91 = vmatprep.subr.bf16.mxu0 0
  %92 = vmatpush1.bf16.msra.mxu0 0
  %93 = vmatprep.subr.bf16.mxu0 0
  %94 = vmatpush1.bf16.msra.mxu0 0
  %95 = vmatprep.subr.bf16.mxu0 0
  %96 = vmatpush1.bf16.msra.mxu0 0
  %97 = vmatprep.subr.bf16.mxu0 0
  %98 = vmatpush1.bf16.msra.mxu0 0
  %99 = vmatprep.subr.bf16.mxu0 0
  %100 = vmatpush1.bf16.msra.mxu0 0
  %101 = vmatprep.subr.bf16.mxu0 0
  %102 = vmatpush1.bf16.msra.mxu0 0
  %103 = vmatprep.subr.bf16.mxu0 0
  %104 = vmatpush1.bf16.msra.mxu0 0
  %105 = vmatprep.subr.bf16.mxu0 0
  %106 = vmatpush1.bf16.msra.mxu0 0
  %107 = vmatprep.subr.bf16.mxu0 0
  %108 = vmatpush1.bf16.msra.mxu0 0
  %109 = vmatprep.subr.bf16.mxu0 0
  %110 = vmatpush1.bf16.msra.mxu0 0
  %111 = vmatprep.subr.bf16.mxu0 0
  %112 = vmatpush1.bf16.msra.mxu0 0
  %113 = vmatprep.subr.bf16.mxu0 0
  %114 = vmatpush1.bf16.msra.mxu0 0
  %115 = vmatprep.subr.bf16.mxu0 0
  %116 = vmatpush1.bf16.msra.mxu0 0
  %117 = vmatprep.subr.bf16.mxu0 0
  %118 = vmatpush1.bf16.msra.mxu0 0
  %119 = vmatprep.subr.bf16.mxu0 0
  %120 = vmatpush1.bf16.msra.mxu0 0
  %121 = vmatprep.mubr.bf16.mxu0 0
  %122 = vmatmul.mubr.bf16.gmra.mrb[0].mxu0 %v78
  %v123 = vpop.f32.mrb[0].mxu0
  %v124 = vadd.f32 %v39, %v123
  %v125 = vpop.f32.mrb[0].mxu0
  %v126 = vadd.f32 %v43, %v125
  %v127 = vpop.f32.mrb[0].mxu0
  %v128 = vadd.f32 %v39, %v127
  %v129 = vpop.f32.mrb[0].mxu0
  %v130 = vadd.f32 %v43, %v129
  %131 = vmatprep.mubr.bf16.mxu0 0
  %132 = vmatmul.mubr.bf16.gmra.mrb[0].mxu0 %v81
  %v133 = vpop.f32.mrb[0].mxu0
  %v134 = vadd.f32 %v39, %v133
  %v135 = vpop.f32.mrb[0].mxu0
  %v136 = vadd.f32 %v43, %v135
  %v137 = vpop.f32.mrb[0].mxu0
  %v138 = vadd.f32 %v39, %v137
  %v139 = vpop.f32.mrb[0].mxu0
  %v140 = vadd.f32 %v43, %v139
  %141 = vmatprep.mubr.bf16.mxu0 0
  %142 = vmatmul.mubr.bf16.gmra.mrb[0].mxu0 %v84
  %v143 = vpop.f32.mrb[0].mxu0
  %v144 = vadd.f32 %v39, %v143
  %v145 = vpop.f32.mrb[0].mxu0
  %v146 = vadd.f32 %v43, %v145
  %v147 = vpop.f32.mrb[0].mxu0
  %v148 = vadd.f32 %v39, %v147
  %v149 = vpop.f32.mrb[0].mxu0
  %v150 = vadd.f32 %v43, %v149
  %151 = vmatprep.mubr.bf16.mxu0 0
  %152 = vmatmul.mubr.bf16.gmra.mrb[0].mxu0 %v87
  %v153 = vpop.f32.mrb[0].mxu0
  %v154 = vadd.f32 %v39, %v153
  %v155 = vpop.f32.mrb[0].mxu0
  %v156 = vadd.f32 %v43, %v155
  %v157 = vpop.f32.mrb[0].mxu0
  %v158 = vadd.f32 %v39, %v157
  %v159 = vpop.f32.mrb[0].mxu0
  %v160 = vadd.f32 %v43, %v159
  %161 = vdwg.mxu0
  %162 = vst [vmem:[#allocation2] sm:$0xff] %v124
  %163 = vst [vmem:[#allocation2 + $0x8] sm:$0xff] %v126
  %164 = vst [vmem:[#allocation2 + $0x10] sm:$0xff] %v128
  %165 = vst [vmem:[#allocation2 + $0x18] sm:$0xff] %v130
  %166 = vst [vmem:[#allocation2 + $0x20] sm:$0xff] %v134
  %167 = vst [vmem:[#allocation2 + $0x28] sm:$0xff] %v136
  %168 = vst [vmem:[#allocation2 + $0x30] sm:$0xff] %v138
  %169 = vst [vmem:[#allocation2 + $0x38] sm:$0xff] %v140
  %170 = vst [vmem:[#allocation2 + $0x40] sm:$0xff] %v144
  %171 = vst [vmem:[#allocation2 + $0x48] sm:$0xff] %v146
  %172 = vst [vmem:[#allocation2 + $0x50] sm:$0xff] %v148
  %173 = vst [vmem:[#allocation2 + $0x58] sm:$0xff] %v150
  %174 = vst [vmem:[#allocation2 + $0x60] sm:$0xff] %v154
  %175 = vst [vmem:[#allocation2 + $0x68] sm:$0xff] %v156
  %176 = vst [vmem:[#allocation2 + $0x70] sm:$0xff] %v158
  %177 = vst [vmem:[#allocation2 + $0x78] sm:$0xff] %v160
  %v178 = vld [vmem:[%s3] sm:$0xff]
  %v179 = vld [vmem:[%s3 + $0x8] sm:$0xff]
  %v180 = vld [vmem:[%s3 + $0x10] sm:$0xff]
  %v181 = vld [vmem:[%s3 + $0x18] sm:$0xff]
  %v182 = vld [vmem:[%s3 + $0x20] sm:$0xff]
  %v183 = vld [vmem:[%s3 + $0x28] sm:$0xff]
  %v184 = vld [vmem:[%s3 + $0x30] sm:$0xff]
  %v185 = vld [vmem:[%s3 + $0x38] sm:$0xff]
  %v186 = vld [vmem:[%s0] sm:$0xff]
  %v187 = vpack.c.bf16 0.0, 0.0
  %v196 = vunpack.c.l.b16 %v178
  %v197 = vunpack.c.h.b16 %v178
  %v198 = vunpack.c.l.b16 %v179
  %v199 = vunpack.c.h.b16 %v179
  %v200 = vunpack.c.l.b16 %v180
  %v201 = vunpack.c.h.b16 %v180
  %v202 = vunpack.c.l.b16 %v181
  %v203 = vunpack.c.h.b16 %v181
  %v204 = vunpack.c.l.b16 %v182
  %v205 = vunpack.c.h.b16 %v182
  %v206 = vunpack.c.l.b16 %v183
  %v207 = vunpack.c.h.b16 %v183
  %v208 = vunpack.c.l.b16 %v184
  %v209 = vunpack.c.h.b16 %v184
  %v210 = vunpack.c.l.b16 %v185
  %v211 = vunpack.c.h.b16 %v185
  %v212 = vpack.c.b16 %v198, %v196
  %v213 = vpack.c.b16 %v199, %v197
  %v214 = vpack.c.b16 %v202, %v200
  %v215 = vpack.c.b16 %v203, %v201
  %v216 = vpack.c.b16 %v206, %v204
  %v217 = vpack.c.b16 %v207, %v205
  %v218 = vpack.c.b16 %v210, %v208
  %v219 = vpack.c.b16 %v211, %v209
  %vm228 = vcmask 523264
  %v230 = vsel %vm228, %v187, 0
  %232 = vmatprep.subr.bf16.mxu0 %v213
  %233 = vmatpush1.bf16.msra.mxu0 %v212
  %234 = vmatprep.subr.bf16.mxu0 %v215
  %235 = vmatpush1.bf16.msra.mxu0 %v214
  %236 = vmatprep.subr.bf16.mxu0 %v217
  %237 = vmatpush1.bf16.msra.mxu0 %v216
  %238 = vmatprep.subr.bf16.mxu0 %v219
  %239 = vmatpush1.bf16.msra.mxu0 %v218
  %240 = vmatprep.subr.bf16.mxu0 0
  %241 = vmatpush1.bf16.msra.mxu0 0
  %242 = vmatprep.subr.bf16.mxu0 0
  %243 = vmatpush1.bf16.msra.mxu0 0
  %244 = vmatprep.subr.bf16.mxu0 0
  %245 = vmatpush1.bf16.msra.mxu0 0
  %246 = vmatprep.subr.bf16.mxu0 0
  %247 = vmatpush1.bf16.msra.mxu0 0
  %248 = vmatprep.subr.bf16.mxu0 0
  %249 = vmatpush1.bf16.msra.mxu0 0
  %250 = vmatprep.subr.bf16.mxu0 0
  %251 = vmatpush1.bf16.msra.mxu0 0
  %252 = vmatprep.subr.bf16.mxu0 0
  %253 = vmatpush1.bf16.msra.mxu0 0
  %254 = vmatprep.subr.bf16.mxu0 0
  %255 = vmatpush1.bf16.msra.mxu0 0
  %256 = vmatprep.subr.bf16.mxu0 0
  %257 = vmatpush1.bf16.msra.mxu0 0
  %258 = vmatprep.subr.bf16.mxu0 0
  %259 = vmatpush1.bf16.msra.mxu0 0
  %260 = vmatprep.subr.bf16.mxu0 0
  %261 = vmatpush1.bf16.msra.mxu0 0
  %262 = vmatprep.subr.bf16.mxu0 0
  %263 = vmatpush1.bf16.msra.mxu0 0
  %264 = vmatprep.mubr.bf16.mxu0 0
  %265 = vmatmul.mubr.bf16.gmra.mrb[0].mxu0 %v230
  %v266 = vpop.f32.mrb[0].mxu0
  %v267 = vadd.f32 0.0, %v266
  %v268 = vpop.f32.mrb[0].mxu0
  %v269 = vadd.f32 0.0, %v268
  %v270 = vpop.f32.mrb[0].mxu0
  %v271 = vpop.f32.mrb[0].mxu0
  %272 = vdwg.mxu0
  %v273 = vld [vmem:[#allocation2] sm:$0xff]
  %v274 = vadd.f32 %v273, %v267
  %s275 = scalar_lea.vmem [#allocation2], 112
  %v276 = vld [vmem:[%s275 + $0x8] sm:$0xff]
  %v277 = vadd.f32 %v276, %v269
  %v278 = vxor.u32 %v274, 2147483648
  %v279 = vmul.f32 %v278, 1.442695
  %v280 = vpow.pop %v279
  %v281 = vadd.f32 %v280, 1.0
  %v282 = vrcp.pop %v281
  %v283 = vmul.f32 1.0, %v282
  %v284 = vtanh.pop %v274
  %v285 = vmul.f32 %v283, 0.0
  %287 = vrot.lane.b32.xlu0 %v284, 64
  %v288 = vpop.permute.xlu0 %287
  %v290 = vmul.f32 %v283, %v288
  %292 = vrot.lane.b32.xlu0 %v290, 32
  %v293 = vpop.permute.xlu0 %292
  %v295 = vadd.f32 %v285, %v293
  %v296 = vtanh.pop %v295
  %298 = vrot.lane.b32.xlu0 %v296, 64
  %v299 = vpop.permute.xlu0 %298
  %v301 = vmul.f32 %v283, %v299
  %v302 = vxor.u32 %v277, 2147483648
  %v303 = vmul.f32 %v302, 1.442695
  %v304 = vpow.pop %v303
  %v305 = vadd.f32 %v304, 1.0
  %v306 = vrcp.pop %v305
  %v307 = vmul.f32 1.0, %v306
  %v308 = vtanh.pop %v277
  %v309 = vmul.f32 %v307, 0.0
  %311 = vrot.lane.b32.xlu0 %v308, 64
  %v312 = vpop.permute.xlu0 %311
  %v314 = vmul.f32 %v307, %v312
  %316 = vrot.lane.b32.xlu0 %v314, 32
  %v317 = vpop.permute.xlu0 %316
  %v319 = vadd.f32 %v309, %v317
  %v320 = vtanh.pop %v319
  %322 = vrot.lane.b32.xlu0 %v320, 64
  %v323 = vpop.permute.xlu0 %322
  %v325 = vmul.f32 %v307, %v323
  %vm326 = vcmp.gt.s32.totalorder %v186, 0
  %vm327 = vcmp.gt.s32.totalorder %v186, 7
  %v328 = vsel %vm326, 1, 0
  %329 = vset.pattern.permute.xlu0 0
  %330 = vperm.xlu0 %329, %v328
  %v331 = vpop.permute.xlu0 %330
  %vm332 = vcmp.eq.s32.totalorder %v331, 1
  %v333 = vsel %vm332, %v301, 0.0
  %335 = vrot.lane.b32.xlu0 %v333, 32
  %v336 = vpop.permute.xlu0 %335
  %vm338 = vcmask 261120
  %339 = vst.msk [vmem:[%s5] sm:$0xff] %vm338, %v336
  %v340 = vsel %vm327, 1, 0
  %341 = vset.pattern.permute.xlu0 0
  %342 = vperm.xlu0 %341, %v340
  %v343 = vpop.permute.xlu0 %342
  %vm344 = vcmp.eq.s32.totalorder %v343, 1
  %v345 = vsel %vm344, %v325, 0.0
  %347 = vrot.lane.b32.xlu0 %v345, 64
  %v348 = vpop.permute.xlu0 %347
  %s350 = scalar_lea.vmem %s5, 56
  %vm351 = vcmask 523520
  %352 = vst.msk [vmem:[%s350] sm:$0xff] %vm351, %v348
  %v353 = vsel %vm332, %v295, 0.0
  %v354 = vsel %vm344, %v319, 0.0
  %v355 = vsel %vm338, %v336, %v348
  %v356 = vpack.c.bf16 %v355, %v355
  %v358 = vsel %vm228, %v356, 0
  %360 = vmatprep.subr.bf16.mxu0 %v213
  %361 = vmatpush1.bf16.msra.mxu0 %v212
  %362 = vmatprep.subr.bf16.mxu0 %v215
  %363 = vmatpush1.bf16.msra.mxu0 %v214
  %364 = vmatprep.subr.bf16.mxu0 %v217
  %365 = vmatpush1.bf16.msra.mxu0 %v216
  %366 = vmatprep.subr.bf16.mxu0 %v219
  %367 = vmatpush1.bf16.msra.mxu0 %v218
  %368 = vmatprep.subr.bf16.mxu0 0
  %369 = vmatpush1.bf16.msra.mxu0 0
  %370 = vmatprep.subr.bf16.mxu0 0
  %371 = vmatpush1.bf16.msra.mxu0 0
  %372 = vmatprep.subr.bf16.mxu0 0
  %373 = vmatpush1.bf16.msra.mxu0 0
  %374 = vmatprep.subr.bf16.mxu0 0
  %375 = vmatpush1.bf16.msra.mxu0 0
  %376 = vmatprep.subr.bf16.mxu0 0
  %377 = vmatpush1.bf16.msra.mxu0 0
  %378 = vmatprep.subr.bf16.mxu0 0
  %379 = vmatpush1.bf16.msra.mxu0 0
  %380 = vmatprep.subr.bf16.mxu0 0
  %381 = vmatpush1.bf16.msra.mxu0 0
  %382 = vmatprep.subr.bf16.mxu0 0
  %383 = vmatpush1.bf16.msra.mxu0 0
  %384 = vmatprep.subr.bf16.mxu0 0
  %385 = vmatpush1.bf16.msra.mxu0 0
  %386 = vmatprep.subr.bf16.mxu0 0
  %387 = vmatpush1.bf16.msra.mxu0 0
  %388 = vmatprep.subr.bf16.mxu0 0
  %389 = vmatpush1.bf16.msra.mxu0 0
  %390 = vmatprep.subr.bf16.mxu0 0
  %391 = vmatpush1.bf16.msra.mxu0 0
  %392 = vmatprep.mubr.bf16.mxu0 0
  %393 = vmatmul.mubr.bf16.gmra.mrb[0].mxu0 %v358
  %v394 = vpop.f32.mrb[0].mxu0
  %v395 = vadd.f32 0.0, %v394
  %v396 = vpop.f32.mrb[0].mxu0
  %v397 = vadd.f32 0.0, %v396
  %v398 = vpop.f32.mrb[0].mxu0
  %v399 = vpop.f32.mrb[0].mxu0
  %400 = vdwg.mxu0
  %s401 = scalar_lea.vmem [#allocation2], 16
  %v402 = vld [vmem:[%s401] sm:$0xff]
  %v403 = vadd.f32 %v402, %v395
  %s404 = scalar_lea.vmem [#allocation2], 96
  %v405 = vld [vmem:[%s404 + $0x8] sm:$0xff]
  %v406 = vadd.f32 %v405, %v397
  %v407 = vxor.u32 %v403, 2147483648
  %v408 = vmul.f32 %v407, 1.442695
  %v409 = vpow.pop %v408
  %v410 = vadd.f32 %v409, 1.0
  %v411 = vrcp.pop %v410
  %v412 = vmul.f32 1.0, %v411
  %v413 = vtanh.pop %v403
  %v414 = vmul.f32 %v412, %v353
  %416 = vrot.lane.b32.xlu0 %v413, 64
  %v417 = vpop.permute.xlu0 %416
  %v419 = vmul.f32 %v412, %v417
  %421 = vrot.lane.b32.xlu0 %v419, 32
  %v422 = vpop.permute.xlu0 %421
  %v424 = vadd.f32 %v414, %v422
  %v425 = vtanh.pop %v424
  %427 = vrot.lane.b32.xlu0 %v425, 64
  %v428 = vpop.permute.xlu0 %427
  %v430 = vmul.f32 %v412, %v428
  %v431 = vxor.u32 %v406, 2147483648
  %v432 = vmul.f32 %v431, 1.442695
  %v433 = vpow.pop %v432
  %v434 = vadd.f32 %v433, 1.0
  %v435 = vrcp.pop %v434
  %v436 = vmul.f32 1.0, %v435
  %v437 = vtanh.pop %v406
  %v438 = vmul.f32 %v436, %v354
  %440 = vrot.lane.b32.xlu0 %v437, 64
  %v441 = vpop.permute.xlu0 %440
  %v443 = vmul.f32 %v436, %v441
  %445 = vrot.lane.b32.xlu0 %v443, 32
  %v446 = vpop.permute.xlu0 %445
  %v448 = vadd.f32 %v438, %v446
  %v449 = vtanh.pop %v448
  %451 = vrot.lane.b32.xlu0 %v449, 64
  %v452 = vpop.permute.xlu0 %451
  %v454 = vmul.f32 %v436, %v452
  %vm455 = vcmp.gt.s32.totalorder %v186, 1
  %vm456 = vcmp.gt.s32.totalorder %v186, 6
  %v457 = vsel %vm455, 1, 0
  %458 = vset.pattern.permute.xlu0 0
  %459 = vperm.xlu0 %458, %v457
  %v460 = vpop.permute.xlu0 %459
  %vm461 = vcmp.eq.s32.totalorder %v460, 1
  %v462 = vsel %vm461, %v430, 0.0
  %464 = vrot.lane.b32.xlu0 %v462, 32
  %v465 = vpop.permute.xlu0 %464
  %s467 = scalar_lea.vmem %s5, 8
  %468 = vst.msk [vmem:[%s467] sm:$0xff] %vm338, %v465
  %v469 = vsel %vm456, 1, 0
  %470 = vset.pattern.permute.xlu0 0
  %471 = vperm.xlu0 %470, %v469
  %v472 = vpop.permute.xlu0 %471
  %vm473 = vcmp.eq.s32.totalorder %v472, 1
  %v474 = vsel %vm473, %v454, 0.0
  %476 = vrot.lane.b32.xlu0 %v474, 64
  %v477 = vpop.permute.xlu0 %476
  %s479 = scalar_lea.vmem %s5, 48
  %480 = vst.msk [vmem:[%s479] sm:$0xff] %vm351, %v477
  %v481 = vsel %vm461, %v430, %v333
  %v482 = vsel %vm461, %v424, %v353
  %v483 = vsel %vm473, %v454, %v345
  %v484 = vsel %vm473, %v448, %v354
  %486 = vrot.lane.b32.xlu0 %v481, 32
  %v487 = vpop.permute.xlu0 %486
  %490 = vrot.lane.b32.xlu0 %v483, 64
  %v491 = vpop.permute.xlu0 %490
  %v493 = vsel %vm338, %v487, %v491
  %v494 = vpack.c.bf16 %v493, %v493
  %v496 = vsel %vm228, %v494, 0
  %498 = vmatprep.subr.bf16.mxu0 %v213
  %499 = vmatpush1.bf16.msra.mxu0 %v212
  %500 = vmatprep.subr.bf16.mxu0 %v215
  %501 = vmatpush1.bf16.msra.mxu0 %v214
  %502 = vmatprep.subr.bf16.mxu0 %v217
  %503 = vmatpush1.bf16.msra.mxu0 %v216
  %504 = vmatprep.subr.bf16.mxu0 %v219
  %505 = vmatpush1.bf16.msra.mxu0 %v218
  %506 = vmatprep.subr.bf16.mxu0 0
  %507 = vmatpush1.bf16.msra.mxu0 0
  %508 = vmatprep.subr.bf16.mxu0 0
  %509 = vmatpush1.bf16.msra.mxu0 0
  %510 = vmatprep.subr.bf16.mxu0 0
  %511 = vmatpush1.bf16.msra.mxu0 0
  %512 = vmatprep.subr.bf16.mxu0 0
  %513 = vmatpush1.bf16.msra.mxu0 0
  %514 = vmatprep.subr.bf16.mxu0 0
  %515 = vmatpush1.bf16.msra.mxu0 0
  %516 = vmatprep.subr.bf16.mxu0 0
  %517 = vmatpush1.bf16.msra.mxu0 0
  %518 = vmatprep.subr.bf16.mxu0 0
  %519 = vmatpush1.bf16.msra.mxu0 0
  %520 = vmatprep.subr.bf16.mxu0 0
  %521 = vmatpush1.bf16.msra.mxu0 0
  %522 = vmatprep.subr.bf16.mxu0 0
  %523 = vmatpush1.bf16.msra.mxu0 0
  %524 = vmatprep.subr.bf16.mxu0 0
  %525 = vmatpush1.bf16.msra.mxu0 0
  %526 = vmatprep.subr.bf16.mxu0 0
  %527 = vmatpush1.bf16.msra.mxu0 0
  %528 = vmatprep.subr.bf16.mxu0 0
  %529 = vmatpush1.bf16.msra.mxu0 0
  %530 = vmatprep.mubr.bf16.mxu0 0
  %531 = vmatmul.mubr.bf16.gmra.mrb[0].mxu0 %v496
  %v532 = vpop.f32.mrb[0].mxu0
  %v533 = vadd.f32 0.0, %v532
  %v534 = vpop.f32.mrb[0].mxu0
  %v535 = vadd.f32 0.0, %v534
  %v536 = vpop.f32.mrb[0].mxu0
  %v537 = vpop.f32.mrb[0].mxu0
  %538 = vdwg.mxu0
  %s539 = scalar_lea.vmem [#allocation2], 32
  %v540 = vld [vmem:[%s539] sm:$0xff]
  %v541 = vadd.f32 %v540, %v533
  %s542 = scalar_lea.vmem [#allocation2], 80
  %v543 = vld [vmem:[%s542 + $0x8] sm:$0xff]
  %v544 = vadd.f32 %v543, %v535
  %v545 = vxor.u32 %v541, 2147483648
  %v546 = vmul.f32 %v545, 1.442695
  %v547 = vpow.pop %v546
  %v548 = vadd.f32 %v547, 1.0
  %v549 = vrcp.pop %v548
  %v550 = vmul.f32 1.0, %v549
  %v551 = vtanh.pop %v541
  %v552 = vmul.f32 %v550, %v482
  %554 = vrot.lane.b32.xlu0 %v551, 64
  %v555 = vpop.permute.xlu0 %554
  %v557 = vmul.f32 %v550, %v555
  %559 = vrot.lane.b32.xlu0 %v557, 32
  %v560 = vpop.permute.xlu0 %559
  %v562 = vadd.f32 %v552, %v560
  %v563 = vtanh.pop %v562
  %565 = vrot.lane.b32.xlu0 %v563, 64
  %v566 = vpop.permute.xlu0 %565
  %v568 = vmul.f32 %v550, %v566
  %v569 = vxor.u32 %v544, 2147483648
  %v570 = vmul.f32 %v569, 1.442695
  %v571 = vpow.pop %v570
  %v572 = vadd.f32 %v571, 1.0
  %v573 = vrcp.pop %v572
  %v574 = vmul.f32 1.0, %v573
  %v575 = vtanh.pop %v544
  %v576 = vmul.f32 %v574, %v484
  %578 = vrot.lane.b32.xlu0 %v575, 64
  %v579 = vpop.permute.xlu0 %578
  %v581 = vmul.f32 %v574, %v579
  %583 = vrot.lane.b32.xlu0 %v581, 32
  %v584 = vpop.permute.xlu0 %583
  %v586 = vadd.f32 %v576, %v584
  %v587 = vtanh.pop %v586
  %589 = vrot.lane.b32.xlu0 %v587, 64
  %v590 = vpop.permute.xlu0 %589
  %v592 = vmul.f32 %v574, %v590
  %vm593 = vcmp.gt.s32.totalorder %v186, 2
  %vm594 = vcmp.gt.s32.totalorder %v186, 5
  %v595 = vsel %vm593, 1, 0
  %596 = vset.pattern.permute.xlu0 0
  %597 = vperm.xlu0 %596, %v595
  %v598 = vpop.permute.xlu0 %597
  %vm599 = vcmp.eq.s32.totalorder %v598, 1
  %v600 = vsel %vm599, %v568, 0.0
  %602 = vrot.lane.b32.xlu0 %v600, 32
  %v603 = vpop.permute.xlu0 %602
  %s605 = scalar_lea.vmem %s5, 16
  %606 = vst.msk [vmem:[%s605] sm:$0xff] %vm338, %v603
  %v607 = vsel %vm594, 1, 0
  %608 = vset.pattern.permute.xlu0 0
  %609 = vperm.xlu0 %608, %v607
  %v610 = vpop.permute.xlu0 %609
  %vm611 = vcmp.eq.s32.totalorder %v610, 1
  %v612 = vsel %vm611, %v592, 0.0
  %614 = vrot.lane.b32.xlu0 %v612, 64
  %v615 = vpop.permute.xlu0 %614
  %s617 = scalar_lea.vmem %s5, 40
  %618 = vst.msk [vmem:[%s617] sm:$0xff] %vm351, %v615
  %v619 = vsel %vm599, %v568, %v481
  %v620 = vsel %vm599, %v562, %v482
  %v621 = vsel %vm611, %v592, %v483
  %v622 = vsel %vm611, %v586, %v484
  %624 = vrot.lane.b32.xlu0 %v619, 32
  %v625 = vpop.permute.xlu0 %624
  %628 = vrot.lane.b32.xlu0 %v621, 64
  %v629 = vpop.permute.xlu0 %628
  %v631 = vsel %vm338, %v625, %v629
  %v632 = vpack.c.bf16 %v631, %v631
  %v634 = vsel %vm228, %v632, 0
  %636 = vmatprep.subr.bf16.mxu0 %v213
  %637 = vmatpush1.bf16.msra.mxu0 %v212
  %638 = vmatprep.subr.bf16.mxu0 %v215
  %639 = vmatpush1.bf16.msra.mxu0 %v214
  %640 = vmatprep.subr.bf16.mxu0 %v217
  %641 = vmatpush1.bf16.msra.mxu0 %v216
  %642 = vmatprep.subr.bf16.mxu0 %v219
  %643 = vmatpush1.bf16.msra.mxu0 %v218
  %644 = vmatprep.subr.bf16.mxu0 0
  %645 = vmatpush1.bf16.msra.mxu0 0
  %646 = vmatprep.subr.bf16.mxu0 0
  %647 = vmatpush1.bf16.msra.mxu0 0
  %648 = vmatprep.subr.bf16.mxu0 0
  %649 = vmatpush1.bf16.msra.mxu0 0
  %650 = vmatprep.subr.bf16.mxu0 0
  %651 = vmatpush1.bf16.msra.mxu0 0
  %652 = vmatprep.subr.bf16.mxu0 0
  %653 = vmatpush1.bf16.msra.mxu0 0
  %654 = vmatprep.subr.bf16.mxu0 0
  %655 = vmatpush1.bf16.msra.mxu0 0
  %656 = vmatprep.subr.bf16.mxu0 0
  %657 = vmatpush1.bf16.msra.mxu0 0
  %658 = vmatprep.subr.bf16.mxu0 0
  %659 = vmatpush1.bf16.msra.mxu0 0
  %660 = vmatprep.subr.bf16.mxu0 0
  %661 = vmatpush1.bf16.msra.mxu0 0
  %662 = vmatprep.subr.bf16.mxu0 0
  %663 = vmatpush1.bf16.msra.mxu0 0
  %664 = vmatprep.subr.bf16.mxu0 0
  %665 = vmatpush1.bf16.msra.mxu0 0
  %666 = vmatprep.subr.bf16.mxu0 0
  %667 = vmatpush1.bf16.msra.mxu0 0
  %668 = vmatprep.mubr.bf16.mxu0 0
  %669 = vmatmul.mubr.bf16.gmra.mrb[0].mxu0 %v634
  %v670 = vpop.f32.mrb[0].mxu0
  %v671 = vadd.f32 0.0, %v670
  %v672 = vpop.f32.mrb[0].mxu0
  %v673 = vadd.f32 0.0, %v672
  %v674 = vpop.f32.mrb[0].mxu0
  %v675 = vpop.f32.mrb[0].mxu0
  %676 = vdwg.mxu0
  %s677 = scalar_lea.vmem [#allocation2], 48
  %v678 = vld [vmem:[%s677] sm:$0xff]
  %v679 = vadd.f32 %v678, %v671
  %s680 = scalar_lea.vmem [#allocation2], 64
  %v681 = vld [vmem:[%s680 + $0x8] sm:$0xff]
  %v682 = vadd.f32 %v681, %v673
  %v683 = vxor.u32 %v679, 2147483648
  %v684 = vmul.f32 %v683, 1.442695
  %v685 = vpow.pop %v684
  %v686 = vadd.f32 %v685, 1.0
  %v687 = vrcp.pop %v686
  %v688 = vmul.f32 1.0, %v687
  %v689 = vtanh.pop %v679
  %v690 = vmul.f32 %v688, %v620
  %692 = vrot.lane.b32.xlu0 %v689, 64
  %v693 = vpop.permute.xlu0 %692
  %v695 = vmul.f32 %v688, %v693
  %697 = vrot.lane.b32.xlu0 %v695, 32
  %v698 = vpop.permute.xlu0 %697
  %v700 = vadd.f32 %v690, %v698
  %v701 = vtanh.pop %v700
  %703 = vrot.lane.b32.xlu0 %v701, 64
  %v704 = vpop.permute.xlu0 %703
  %v706 = vmul.f32 %v688, %v704
  %v707 = vxor.u32 %v682, 2147483648
  %v708 = vmul.f32 %v707, 1.442695
  %v709 = vpow.pop %v708
  %v710 = vadd.f32 %v709, 1.0
  %v711 = vrcp.pop %v710
  %v712 = vmul.f32 1.0, %v711
  %v713 = vtanh.pop %v682
  %v714 = vmul.f32 %v712, %v622
  %716 = vrot.lane.b32.xlu0 %v713, 64
  %v717 = vpop.permute.xlu0 %716
  %v719 = vmul.f32 %v712, %v717
  %721 = vrot.lane.b32.xlu0 %v719, 32
  %v722 = vpop.permute.xlu0 %721
  %v724 = vadd.f32 %v714, %v722
  %v725 = vtanh.pop %v724
  %727 = vrot.lane.b32.xlu0 %v725, 64
  %v728 = vpop.permute.xlu0 %727
  %v730 = vmul.f32 %v712, %v728
  %vm731 = vcmp.gt.s32.totalorder %v186, 3
  %vm732 = vcmp.gt.s32.totalorder %v186, 4
  %v733 = vsel %vm731, 1, 0
  %734 = vset.pattern.permute.xlu0 0
  %735 = vperm.xlu0 %734, %v733
  %v736 = vpop.permute.xlu0 %735
  %vm737 = vcmp.eq.s32.totalorder %v736, 1
  %v738 = vsel %vm737, %v706, 0.0
  %740 = vrot.lane.b32.xlu0 %v738, 32
  %v741 = vpop.permute.xlu0 %740
  %s743 = scalar_lea.vmem %s5, 24
  %744 = vst.msk [vmem:[%s743] sm:$0xff] %vm338, %v741
  %v745 = vsel %vm732, 1, 0
  %746 = vset.pattern.permute.xlu0 0
  %747 = vperm.xlu0 %746, %v745
  %v748 = vpop.permute.xlu0 %747
  %vm749 = vcmp.eq.s32.totalorder %v748, 1
  %v750 = vsel %vm749, %v730, 0.0
  %752 = vrot.lane.b32.xlu0 %v750, 64
  %v753 = vpop.permute.xlu0 %752
  %s755 = scalar_lea.vmem %s5, 32
  %756 = vst.msk [vmem:[%s755] sm:$0xff] %vm351, %v753
  %v757 = vsel %vm737, %v706, %v619
  %v758 = vsel %vm737, %v700, %v620
  %v759 = vsel %vm749, %v730, %v621
  %v760 = vsel %vm749, %v724, %v622
  %762 = vrot.lane.b32.xlu0 %v757, 32
  %v763 = vpop.permute.xlu0 %762
  %766 = vrot.lane.b32.xlu0 %v759, 64
  %v767 = vpop.permute.xlu0 %766
  %v769 = vsel %vm338, %v763, %v767
  %v770 = vpack.c.bf16 %v769, %v769
  %v772 = vsel %vm228, %v770, 0
  %774 = vmatprep.subr.bf16.mxu0 %v213
  %775 = vmatpush1.bf16.msra.mxu0 %v212
  %776 = vmatprep.subr.bf16.mxu0 %v215
  %777 = vmatpush1.bf16.msra.mxu0 %v214
  %778 = vmatprep.subr.bf16.mxu0 %v217
  %779 = vmatpush1.bf16.msra.mxu0 %v216
  %780 = vmatprep.subr.bf16.mxu0 %v219
  %781 = vmatpush1.bf16.msra.mxu0 %v218
  %782 = vmatprep.subr.bf16.mxu0 0
  %783 = vmatpush1.bf16.msra.mxu0 0
  %784 = vmatprep.subr.bf16.mxu0 0
  %785 = vmatpush1.bf16.msra.mxu0 0
  %786 = vmatprep.subr.bf16.mxu0 0
  %787 = vmatpush1.bf16.msra.mxu0 0
  %788 = vmatprep.subr.bf16.mxu0 0
  %789 = vmatpush1.bf16.msra.mxu0 0
  %790 = vmatprep.subr.bf16.mxu0 0
  %791 = vmatpush1.bf16.msra.mxu0 0
  %792 = vmatprep.subr.bf16.mxu0 0
  %793 = vmatpush1.bf16.msra.mxu0 0
  %794 = vmatprep.subr.bf16.mxu0 0
  %795 = vmatpush1.bf16.msra.mxu0 0
  %796 = vmatprep.subr.bf16.mxu0 0
  %797 = vmatpush1.bf16.msra.mxu0 0
  %798 = vmatprep.subr.bf16.mxu0 0
  %799 = vmatpush1.bf16.msra.mxu0 0
  %800 = vmatprep.subr.bf16.mxu0 0
  %801 = vmatpush1.bf16.msra.mxu0 0
  %802 = vmatprep.subr.bf16.mxu0 0
  %803 = vmatpush1.bf16.msra.mxu0 0
  %804 = vmatprep.subr.bf16.mxu0 0
  %805 = vmatpush1.bf16.msra.mxu0 0
  %806 = vmatprep.mubr.bf16.mxu0 0
  %807 = vmatmul.mubr.bf16.gmra.mrb[0].mxu0 %v772
  %v808 = vpop.f32.mrb[0].mxu0
  %v809 = vadd.f32 0.0, %v808
  %v810 = vpop.f32.mrb[0].mxu0
  %v811 = vadd.f32 0.0, %v810
  %v812 = vpop.f32.mrb[0].mxu0
  %v813 = vpop.f32.mrb[0].mxu0
  %814 = vdwg.mxu0
  %v815 = vld [vmem:[%s680] sm:$0xff]
  %v816 = vadd.f32 %v815, %v809
  %v817 = vld [vmem:[%s677 + $0x8] sm:$0xff]
  %v818 = vadd.f32 %v817, %v811
  %v819 = vxor.u32 %v816, 2147483648
  %v820 = vmul.f32 %v819, 1.442695
  %v821 = vpow.pop %v820
  %v822 = vadd.f32 %v821, 1.0
  %v823 = vrcp.pop %v822
  %v824 = vmul.f32 1.0, %v823
  %v825 = vtanh.pop %v816
  %v826 = vmul.f32 %v824, %v758
  %828 = vrot.lane.b32.xlu0 %v825, 64
  %v829 = vpop.permute.xlu0 %828
  %v831 = vmul.f32 %v824, %v829
  %833 = vrot.lane.b32.xlu0 %v831, 32
  %v834 = vpop.permute.xlu0 %833
  %v836 = vadd.f32 %v826, %v834
  %v837 = vtanh.pop %v836
  %839 = vrot.lane.b32.xlu0 %v837, 64
  %v840 = vpop.permute.xlu0 %839
  %v842 = vmul.f32 %v824, %v840
  %v843 = vxor.u32 %v818, 2147483648
  %v844 = vmul.f32 %v843, 1.442695
  %v845 = vpow.pop %v844
  %v846 = vadd.f32 %v845, 1.0
  %v847 = vrcp.pop %v846
  %v848 = vmul.f32 1.0, %v847
  %v849 = vtanh.pop %v818
  %v850 = vmul.f32 %v848, %v760
  %852 = vrot.lane.b32.xlu0 %v849, 64
  %v853 = vpop.permute.xlu0 %852
  %v855 = vmul.f32 %v848, %v853
  %857 = vrot.lane.b32.xlu0 %v855, 32
  %v858 = vpop.permute.xlu0 %857
  %v860 = vadd.f32 %v850, %v858
  %v861 = vtanh.pop %v860
  %863 = vrot.lane.b32.xlu0 %v861, 64
  %v864 = vpop.permute.xlu0 %863
  %v866 = vmul.f32 %v848, %v864
  %v867 = vsel %vm749, %v842, 0.0
  %869 = vrot.lane.b32.xlu0 %v867, 32
  %v870 = vpop.permute.xlu0 %869
  %872 = vst.msk [vmem:[%s755] sm:$0xff] %vm338, %v870
  %v873 = vsel %vm737, %v866, 0.0
  %875 = vrot.lane.b32.xlu0 %v873, 64
  %v876 = vpop.permute.xlu0 %875
  %878 = vst.msk [vmem:[%s743] sm:$0xff] %vm351, %v876
  %v879 = vsel %vm749, %v842, %v757
  %v880 = vsel %vm749, %v836, %v758
  %v881 = vsel %vm737, %v866, %v759
  %v882 = vsel %vm737, %v860, %v760
  %884 = vrot.lane.b32.xlu0 %v879, 32
  %v885 = vpop.permute.xlu0 %884
  %888 = vrot.lane.b32.xlu0 %v881, 64
  %v889 = vpop.permute.xlu0 %888
  %v891 = vsel %vm338, %v885, %v889
  %v892 = vpack.c.bf16 %v891, %v891
  %v894 = vsel %vm228, %v892, 0
  %896 = vmatprep.subr.bf16.mxu0 %v213
  %897 = vmatpush1.bf16.msra.mxu0 %v212
  %898 = vmatprep.subr.bf16.mxu0 %v215
  %899 = vmatpush1.bf16.msra.mxu0 %v214
  %900 = vmatprep.subr.bf16.mxu0 %v217
  %901 = vmatpush1.bf16.msra.mxu0 %v216
  %902 = vmatprep.subr.bf16.mxu0 %v219
  %903 = vmatpush1.bf16.msra.mxu0 %v218
  %904 = vmatprep.subr.bf16.mxu0 0
  %905 = vmatpush1.bf16.msra.mxu0 0
  %906 = vmatprep.subr.bf16.mxu0 0
  %907 = vmatpush1.bf16.msra.mxu0 0
  %908 = vmatprep.subr.bf16.mxu0 0
  %909 = vmatpush1.bf16.msra.mxu0 0
  %910 = vmatprep.subr.bf16.mxu0 0
  %911 = vmatpush1.bf16.msra.mxu0 0
  %912 = vmatprep.subr.bf16.mxu0 0
  %913 = vmatpush1.bf16.msra.mxu0 0
  %914 = vmatprep.subr.bf16.mxu0 0
  %915 = vmatpush1.bf16.msra.mxu0 0
  %916 = vmatprep.subr.bf16.mxu0 0
  %917 = vmatpush1.bf16.msra.mxu0 0
  %918 = vmatprep.subr.bf16.mxu0 0
  %919 = vmatpush1.bf16.msra.mxu0 0
  %920 = vmatprep.subr.bf16.mxu0 0
  %921 = vmatpush1.bf16.msra.mxu0 0
  %922 = vmatprep.subr.bf16.mxu0 0
  %923 = vmatpush1.bf16.msra.mxu0 0
  %924 = vmatprep.subr.bf16.mxu0 0
  %925 = vmatpush1.bf16.msra.mxu0 0
  %926 = vmatprep.subr.bf16.mxu0 0
  %927 = vmatpush1.bf16.msra.mxu0 0
  %928 = vmatprep.mubr.bf16.mxu0 0
  %929 = vmatmul.mubr.bf16.gmra.mrb[0].mxu0 %v894
  %v930 = vpop.f32.mrb[0].mxu0
  %v931 = vadd.f32 0.0, %v930
  %v932 = vpop.f32.mrb[0].mxu0
  %v933 = vadd.f32 0.0, %v932
  %v934 = vpop.f32.mrb[0].mxu0
  %v935 = vpop.f32.mrb[0].mxu0
  %936 = vdwg.mxu0
  %v937 = vld [vmem:[%s542] sm:$0xff]
  %v938 = vadd.f32 %v937, %v931
  %v939 = vld [vmem:[%s539 + $0x8] sm:$0xff]
  %v940 = vadd.f32 %v939, %v933
  %v941 = vxor.u32 %v938, 2147483648
  %v942 = vmul.f32 %v941, 1.442695
  %v943 = vpow.pop %v942
  %v944 = vadd.f32 %v943, 1.0
  %v945 = vrcp.pop %v944
  %v946 = vmul.f32 1.0, %v945
  %v947 = vtanh.pop %v938
  %v948 = vmul.f32 %v946, %v880
  %950 = vrot.lane.b32.xlu0 %v947, 64
  %v951 = vpop.permute.xlu0 %950
  %v953 = vmul.f32 %v946, %v951
  %955 = vrot.lane.b32.xlu0 %v953, 32
  %v956 = vpop.permute.xlu0 %955
  %v958 = vadd.f32 %v948, %v956
  %v959 = vtanh.pop %v958
  %961 = vrot.lane.b32.xlu0 %v959, 64
  %v962 = vpop.permute.xlu0 %961
  %v964 = vmul.f32 %v946, %v962
  %v965 = vxor.u32 %v940, 2147483648
  %v966 = vmul.f32 %v965, 1.442695
  %v967 = vpow.pop %v966
  %v968 = vadd.f32 %v967, 1.0
  %v969 = vrcp.pop %v968
  %v970 = vmul.f32 1.0, %v969
  %v971 = vtanh.pop %v940
  %v972 = vmul.f32 %v970, %v882
  %974 = vrot.lane.b32.xlu0 %v971, 64
  %v975 = vpop.permute.xlu0 %974
  %v977 = vmul.f32 %v970, %v975
  %979 = vrot.lane.b32.xlu0 %v977, 32
  %v980 = vpop.permute.xlu0 %979
  %v982 = vadd.f32 %v972, %v980
  %v983 = vtanh.pop %v982
  %985 = vrot.lane.b32.xlu0 %v983, 64
  %v986 = vpop.permute.xlu0 %985
  %v988 = vmul.f32 %v970, %v986
  %v989 = vsel %vm611, %v964, 0.0
  %991 = vrot.lane.b32.xlu0 %v989, 32
  %v992 = vpop.permute.xlu0 %991
  %994 = vst.msk [vmem:[%s617] sm:$0xff] %vm338, %v992
  %v995 = vsel %vm599, %v988, 0.0
  %997 = vrot.lane.b32.xlu0 %v995, 64
  %v998 = vpop.permute.xlu0 %997
  %1000 = vst.msk [vmem:[%s605] sm:$0xff] %vm351, %v998
  %v1001 = vsel %vm611, %v964, %v879
  %v1002 = vsel %vm611, %v958, %v880
  %v1003 = vsel %vm599, %v988, %v881
  %v1004 = vsel %vm599, %v982, %v882
  %1006 = vrot.lane.b32.xlu0 %v1001, 32
  %v1007 = vpop.permute.xlu0 %1006
  %1010 = vrot.lane.b32.xlu0 %v1003, 64
  %v1011 = vpop.permute.xlu0 %1010
  %v1013 = vsel %vm338, %v1007, %v1011
  %v1014 = vpack.c.bf16 %v1013, %v1013
  %v1016 = vsel %vm228, %v1014, 0
  %1018 = vmatprep.subr.bf16.mxu0 %v213
  %1019 = vmatpush1.bf16.msra.mxu0 %v212
  %1020 = vmatprep.subr.bf16.mxu0 %v215
  %1021 = vmatpush1.bf16.msra.mxu0 %v214
  %1022 = vmatprep.subr.bf16.mxu0 %v217
  %1023 = vmatpush1.bf16.msra.mxu0 %v216
  %1024 = vmatprep.subr.bf16.mxu0 %v219
  %1025 = vmatpush1.bf16.msra.mxu0 %v218
  %1026 = vmatprep.subr.bf16.mxu0 0
  %1027 = vmatpush1.bf16.msra.mxu0 0
  %1028 = vmatprep.subr.bf16.mxu0 0
  %1029 = vmatpush1.bf16.msra.mxu0 0
  %1030 = vmatprep.subr.bf16.mxu0 0
  %1031 = vmatpush1.bf16.msra.mxu0 0
  %1032 = vmatprep.subr.bf16.mxu0 0
  %1033 = vmatpush1.bf16.msra.mxu0 0
  %1034 = vmatprep.subr.bf16.mxu0 0
  %1035 = vmatpush1.bf16.msra.mxu0 0
  %1036 = vmatprep.subr.bf16.mxu0 0
  %1037 = vmatpush1.bf16.msra.mxu0 0
  %1038 = vmatprep.subr.bf16.mxu0 0
  %1039 = vmatpush1.bf16.msra.mxu0 0
  %1040 = vmatprep.subr.bf16.mxu0 0
  %1041 = vmatpush1.bf16.msra.mxu0 0
  %1042 = vmatprep.subr.bf16.mxu0 0
  %1043 = vmatpush1.bf16.msra.mxu0 0
  %1044 = vmatprep.subr.bf16.mxu0 0
  %1045 = vmatpush1.bf16.msra.mxu0 0
  %1046 = vmatprep.subr.bf16.mxu0 0
  %1047 = vmatpush1.bf16.msra.mxu0 0
  %1048 = vmatprep.subr.bf16.mxu0 0
  %1049 = vmatpush1.bf16.msra.mxu0 0
  %1050 = vmatprep.mubr.bf16.mxu0 0
  %1051 = vmatmul.mubr.bf16.gmra.mrb[0].mxu0 %v1016
  %v1052 = vpop.f32.mrb[0].mxu0
  %v1053 = vadd.f32 0.0, %v1052
  %v1054 = vpop.f32.mrb[0].mxu0
  %v1055 = vadd.f32 0.0, %v1054
  %v1056 = vpop.f32.mrb[0].mxu0
  %v1057 = vpop.f32.mrb[0].mxu0
  %1058 = vdwg.mxu0
  %v1059 = vld [vmem:[%s404] sm:$0xff]
  %v1060 = vadd.f32 %v1059, %v1053
  %v1061 = vld [vmem:[%s401 + $0x8] sm:$0xff]
  %v1062 = vadd.f32 %v1061, %v1055
  %v1063 = vxor.u32 %v1060, 2147483648
  %v1064 = vmul.f32 %v1063, 1.442695
  %v1065 = vpow.pop %v1064
  %v1066 = vadd.f32 %v1065, 1.0
  %v1067 = vrcp.pop %v1066
  %v1068 = vmul.f32 1.0, %v1067
  %v1069 = vtanh.pop %v1060
  %v1070 = vmul.f32 %v1068, %v1002
  %1072 = vrot.lane.b32.xlu0 %v1069, 64
  %v1073 = vpop.permute.xlu0 %1072
  %v1075 = vmul.f32 %v1068, %v1073
  %1077 = vrot.lane.b32.xlu0 %v1075, 32
  %v1078 = vpop.permute.xlu0 %1077
  %v1080 = vadd.f32 %v1070, %v1078
  %v1081 = vtanh.pop %v1080
  %1083 = vrot.lane.b32.xlu0 %v1081, 64
  %v1084 = vpop.permute.xlu0 %1083
  %v1086 = vmul.f32 %v1068, %v1084
  %v1087 = vxor.u32 %v1062, 2147483648
  %v1088 = vmul.f32 %v1087, 1.442695
  %v1089 = vpow.pop %v1088
  %v1090 = vadd.f32 %v1089, 1.0
  %v1091 = vrcp.pop %v1090
  %v1092 = vmul.f32 1.0, %v1091
  %v1093 = vtanh.pop %v1062
  %v1094 = vmul.f32 %v1092, %v1004
  %1096 = vrot.lane.b32.xlu0 %v1093, 64
  %v1097 = vpop.permute.xlu0 %1096
  %v1099 = vmul.f32 %v1092, %v1097
  %1101 = vrot.lane.b32.xlu0 %v1099, 32
  %v1102 = vpop.permute.xlu0 %1101
  %v1104 = vadd.f32 %v1094, %v1102
  %v1105 = vtanh.pop %v1104
  %1107 = vrot.lane.b32.xlu0 %v1105, 64
  %v1108 = vpop.permute.xlu0 %1107
  %v1110 = vmul.f32 %v1092, %v1108
  %v1111 = vsel %vm473, %v1086, 0.0
  %1113 = vrot.lane.b32.xlu0 %v1111, 32
  %v1114 = vpop.permute.xlu0 %1113
  %1116 = vst.msk [vmem:[%s479] sm:$0xff] %vm338, %v1114
  %v1117 = vsel %vm461, %v1110, 0.0
  %1119 = vrot.lane.b32.xlu0 %v1117, 64
  %v1120 = vpop.permute.xlu0 %1119
  %1122 = vst.msk [vmem:[%s467] sm:$0xff] %vm351, %v1120
  %v1123 = vsel %vm473, %v1086, %v1001
  %v1124 = vsel %vm473, %v1080, %v1002
  %v1125 = vsel %vm461, %v1110, %v1003
  %v1126 = vsel %vm461, %v1104, %v1004
  %1128 = vrot.lane.b32.xlu0 %v1123, 32
  %v1129 = vpop.permute.xlu0 %1128
  %1132 = vrot.lane.b32.xlu0 %v1125, 64
  %v1133 = vpop.permute.xlu0 %1132
  %v1135 = vsel %vm338, %v1129, %v1133
  %v1136 = vpack.c.bf16 %v1135, %v1135
  %v1138 = vsel %vm228, %v1136, 0
  %1140 = vmatprep.subr.bf16.mxu0 %v213
  %1141 = vmatpush1.bf16.msra.mxu0 %v212
  %1142 = vmatprep.subr.bf16.mxu0 %v215
  %1143 = vmatpush1.bf16.msra.mxu0 %v214
  %1144 = vmatprep.subr.bf16.mxu0 %v217
  %1145 = vmatpush1.bf16.msra.mxu0 %v216
  %1146 = vmatprep.subr.bf16.mxu0 %v219
  %1147 = vmatpush1.bf16.msra.mxu0 %v218
  %1148 = vmatprep.subr.bf16.mxu0 0
  %1149 = vmatpush1.bf16.msra.mxu0 0
  %1150 = vmatprep.subr.bf16.mxu0 0
  %1151 = vmatpush1.bf16.msra.mxu0 0
  %1152 = vmatprep.subr.bf16.mxu0 0
  %1153 = vmatpush1.bf16.msra.mxu0 0
  %1154 = vmatprep.subr.bf16.mxu0 0
  %1155 = vmatpush1.bf16.msra.mxu0 0
  %1156 = vmatprep.subr.bf16.mxu0 0
  %1157 = vmatpush1.bf16.msra.mxu0 0
  %1158 = vmatprep.subr.bf16.mxu0 0
  %1159 = vmatpush1.bf16.msra.mxu0 0
  %1160 = vmatprep.subr.bf16.mxu0 0
  %1161 = vmatpush1.bf16.msra.mxu0 0
  %1162 = vmatprep.subr.bf16.mxu0 0
  %1163 = vmatpush1.bf16.msra.mxu0 0
  %1164 = vmatprep.subr.bf16.mxu0 0
  %1165 = vmatpush1.bf16.msra.mxu0 0
  %1166 = vmatprep.subr.bf16.mxu0 0
  %1167 = vmatpush1.bf16.msra.mxu0 0
  %1168 = vmatprep.subr.bf16.mxu0 0
  %1169 = vmatpush1.bf16.msra.mxu0 0
  %1170 = vmatprep.subr.bf16.mxu0 0
  %1171 = vmatpush1.bf16.msra.mxu0 0
  %1172 = vmatprep.mubr.bf16.mxu0 0
  %1173 = vmatmul.mubr.bf16.gmra.mrb[0].mxu0 %v1138
  %v1174 = vpop.f32.mrb[0].mxu0
  %v1175 = vadd.f32 0.0, %v1174
  %v1176 = vpop.f32.mrb[0].mxu0
  %v1177 = vadd.f32 0.0, %v1176
  %v1178 = vpop.f32.mrb[0].mxu0
  %v1179 = vpop.f32.mrb[0].mxu0
  %1180 = vdwg.mxu0
  %v1181 = vld [vmem:[%s275] sm:$0xff]
  %v1182 = vadd.f32 %v1181, %v1175
  %v1183 = vld [vmem:[#allocation2 + $0x8] sm:$0xff]
  %v1184 = vadd.f32 %v1183, %v1177
  %v1185 = vxor.u32 %v1182, 2147483648
  %v1186 = vmul.f32 %v1185, 1.442695
  %v1187 = vpow.pop %v1186
  %v1188 = vadd.f32 %v1187, 1.0
  %v1189 = vrcp.pop %v1188
  %v1190 = vmul.f32 1.0, %v1189
  %v1191 = vtanh.pop %v1182
  %v1192 = vmul.f32 %v1190, %v1124
  %1194 = vrot.lane.b32.xlu0 %v1191, 64
  %v1195 = vpop.permute.xlu0 %1194
  %v1197 = vmul.f32 %v1190, %v1195
  %1199 = vrot.lane.b32.xlu0 %v1197, 32
  %v1200 = vpop.permute.xlu0 %1199
  %v1202 = vadd.f32 %v1192, %v1200
  %v1203 = vtanh.pop %v1202
  %1205 = vrot.lane.b32.xlu0 %v1203, 64
  %v1206 = vpop.permute.xlu0 %1205
  %v1208 = vmul.f32 %v1190, %v1206
  %v1209 = vxor.u32 %v1184, 2147483648
  %v1210 = vmul.f32 %v1209, 1.442695
  %v1211 = vpow.pop %v1210
  %v1212 = vadd.f32 %v1211, 1.0
  %v1213 = vrcp.pop %v1212
  %v1214 = vmul.f32 1.0, %v1213
  %v1215 = vtanh.pop %v1184
  %v1216 = vmul.f32 %v1214, %v1126
  %1218 = vrot.lane.b32.xlu0 %v1215, 64
  %v1219 = vpop.permute.xlu0 %1218
  %v1221 = vmul.f32 %v1214, %v1219
  %1223 = vrot.lane.b32.xlu0 %v1221, 32
  %v1224 = vpop.permute.xlu0 %1223
  %v1226 = vadd.f32 %v1216, %v1224
  %v1227 = vtanh.pop %v1226
  %1229 = vrot.lane.b32.xlu0 %v1227, 64
  %v1230 = vpop.permute.xlu0 %1229
  %v1232 = vmul.f32 %v1214, %v1230
  %v1233 = vsel %vm344, %v1208, 0.0
  %1235 = vrot.lane.b32.xlu0 %v1233, 32
  %v1236 = vpop.permute.xlu0 %1235
  %1238 = vst.msk [vmem:[%s350] sm:$0xff] %vm338, %v1236
  %v1239 = vsel %vm332, %v1232, 0.0
  %1241 = vrot.lane.b32.xlu0 %v1239, 64
  %v1242 = vpop.permute.xlu0 %1241
  %1244 = vst.msk [vmem:[%s5] sm:$0xff] %vm351, %v1242
  %v1245 = vsel %vm344, %v1208, %v1123
  %v1246 = vsel %vm344, %v1202, %v1124
  %v1247 = vsel %vm332, %v1232, %v1125
  %v1248 = vsel %vm332, %v1226, %v1126
  %1250 = vrot.lane.b32.xlu0 %v1245, 32
  %v1251 = vpop.permute.xlu0 %1250
  %1254 = vrot.lane.b32.xlu0 %v1247, 64
  %v1255 = vpop.permute.xlu0 %1254
  %v1257 = vsel %vm338, %v1251, %v1255
  %1258 = vst.msk [vmem:[%s6] sm:$0xff] %vm228, %v1257
  %1260 = vrot.lane.b32.xlu0 %v1246, 96
  %v1261 = vpop.permute.xlu0 %1260
  %v1263 = vsel %vm338, %v1261, %v1248
  %1264 = vst.msk [vmem:[%s7] sm:$0xff] %vm228, %v1263
  // Predicated region
  $region22: #{blstm_forward.2} parent=0 // pred_check
    _
  $region23: #{blstm_forward.2} parent=0 // pred_check_branch
    %1266 = sbr.rel (0) target = $region25
  $region24: #{blstm_forward.2} parent=0 // pred_region
    _
  $region25: #{blstm_forward.2} parent=0 // pred_fallthru
    _
  // Predicated region
  $region26: #{blstm_forward.2} parent=0 // pred_check
    _
  $region27: #{blstm_forward.2} parent=0 // pred_check_branch
    %1268 = sbr.rel (0) target = $region29
  $region28: #{blstm_forward.2} parent=0 // pred_region
    _
  $region29: #{blstm_forward.2} parent=0 // pred_fallthru
    _
  // Predicated region
  $region30: #{blstm_forward.2} parent=0 // pred_check
    _
  $region31: #{blstm_forward.2} parent=0 // pred_check_branch
    %1270 = sbr.rel (0) target = $region33
  $region32: #{blstm_forward.2} parent=0 // pred_region
    _
  $region33: #{blstm_forward.2} parent=0 // pred_fallthru
    _
  // Predicated region
  $region34: #{blstm_forward.2} parent=0 // pred_check
    _
  $region35: #{blstm_forward.2} parent=0 // pred_check_branch
    %1272 = sbr.rel (0) target = $region37
  $region36: #{blstm_forward.2} parent=0 // pred_region
    _
  $region37: #{blstm_forward.2} parent=0 // pred_fallthru
    _
  // Predicated region
  $region38: #{blstm_forward.2} parent=0 // pred_check
    _
  $region39: #{blstm_forward.2} parent=0 // pred_check_branch
    %1274 = sbr.rel (0) target = $region41
  $region40: #{blstm_forward.2} parent=0 // pred_region
    _
  $region41: #{blstm_forward.2} parent=0 // pred_fallthru
    _
  // Predicated region
  $region42: #{blstm_forward.2} parent=0 // pred_check
    _
  $region43: #{blstm_forward.2} parent=0 // pred_check_branch
    %1276 = sbr.rel (0) target = $region45
  $region44: #{blstm_forward.2} parent=0 // pred_region
    _
  $region45: #{blstm_forward.2} parent=0 // pred_fallthru
    _

</llo_original>
